<compile_context>
chip_gen: v7x
topology: tpu7x:2x2x1
jax: 0.10.0
libtpu: 0.0.40
codegen_flags: <defaults>
</compile_context>

<pallas_src>
import functools
import math

import jax
import jax.numpy as jnp
import numpy as np
from jax import lax
from jax.experimental import pallas as pl
from jax.experimental.pallas import tpu as pltpu


def _round_up(x, m):
    return (x + m - 1) // m * m


# ----------------------------------------------------------------------------
# Fused encoder kernel: one grid step == one image, everything channel-major.
# ----------------------------------------------------------------------------
def _encoder_kernel(*refs, K, P, dims, has_skips):
    (Hp0, Wp0, A0), (Hp1, Wp1, A1), (Hp2, Wp2, A2) = dims

    (x_ref,
     w0, b0, w1, b1, w2, b2, w3, b3, w4, b4, w5, b5,
     m0_ref, m1_ref, dec1_ref, dec2_ref) = refs[:17]
    n_in = 17
    if has_skips:
        sk4_ref, sk3_ref, sk2_ref = refs[17:20]
        n_in = 20
    else:
        sk4_ref = sk3_ref = sk2_ref = None
    o0_ref, o1_ref, o2_ref = refs[n_in:n_in + 3]
    slab_ref, canv0, canv1, canv2 = refs[n_in + 3:]

    # --- slab margin init ----------------------------------------------------
    # Taps never write the first / last `off0` columns of their slab rows
    # (those columns only feed non-interior outputs, which are masked or
    # dropped downstream); clear them once per image so no dot ever reads
    # uninitialized VMEM.  Everything else is overwritten every conv.
    off0 = P * Wp0 + P
    nrows = slab_ref.shape[0]
    zeros_m = jnp.zeros((nrows, off0), jnp.bfloat16)
    slab_ref[:, pl.ds(0, off0)] = zeros_m
    slab_ref[:, pl.ds(A0 - off0, off0)] = zeros_m

    def conv(src_ref, w_ref, b_ref, Wp, A, cast=False):
        """Stride-1 'same' conv on a flat canvas.

        The K*K taps are contiguous shifted copies of the canvas (static lane
        offsets), written lane-dense into the shared slab scratch, then ONE
        MXU matmul (Cout, K*K*Cin) @ (K*K*Cin, A) with the (>=128-multiple)
        spatial axis on the result lanes.  Non-interior output columns hold
        garbage and are masked / ignored downstream.
        """
        cin = src_ref.shape[0]
        for i in range(K):
            for j in range(K):
                d = (i - P) * Wp + (j - P)            # static per-tap shift
                src0, dst0, L = max(d, 0), max(-d, 0), A - abs(d)
                v = src_ref[:, pl.ds(src0, L)]
                if cast:
                    v = v.astype(jnp.bfloat16)
                slab_ref[pl.ds((i * K + j) * cin, cin), pl.ds(dst0, L)] = v
        slab = slab_ref[pl.ds(0, K * K * cin), pl.ds(0, A)]
        acc = jnp.dot(w_ref[...], slab, preferred_element_type=jnp.float32)
        return acc + b_ref[...]                       # (Cout, A) f32

    def to_canvas(val, mask):
        # ReLU + zero the halo/tail.  jnp.where (not a multiply) so halo
        # garbage can never leak into the interior of the next conv.
        return jnp.where(mask > 0.0, jnp.maximum(val, 0.0), 0.0).astype(jnp.bfloat16)

    def decimate(val, dec_ref):
        # Exact 0/1 selection matmul: picks the stride-2 sample points of the
        # full-resolution conv and places them (already zero-haloed) into the
        # smaller canvas, keeping the lane axis dense.
        v = jnp.maximum(val, 0.0).astype(jnp.bfloat16)
        out = jnp.dot(v, dec_ref[...], preferred_element_type=jnp.float32)
        return out.astype(jnp.bfloat16)

    m0 = m0_ref[...]
    m1 = m1_ref[...]

    # ---- init: Conv -> ReLU -> Conv (+ skip from pre_x4) ---------------------
    h0 = conv(x_ref, w0, b0, Wp0, A0, cast=True)
    canv0[...] = to_canvas(h0, m0)
    x0 = conv(canv0, w1, b1, Wp0, A0)
    if has_skips:
        x0 = x0 + sk4_ref[...]
    o0_ref[...] = x0

    # ---- enc1: ReLU -> Conv(s2) -> ReLU -> Conv (+ skip from pre_x3) ---------
    canv0[...] = to_canvas(x0, m0)
    h1 = conv(canv0, w2, b2, Wp0, A0)        # full-res, then decimate
    canv1[...] = decimate(h1, dec1_ref)
    x1 = conv(canv1, w3, b3, Wp1, A1)
    if has_skips:
        x1 = x1 + sk3_ref[...]
    o1_ref[...] = x1

    # ---- enc2: ReLU -> Conv(s2) -> ReLU -> Conv (+ skip from pre_x2) ---------
    canv1[...] = to_canvas(x1, m1)
    h2 = conv(canv1, w4, b4, Wp1, A1)
    canv2[...] = decimate(h2, dec2_ref)
    x2 = conv(canv2, w5, b5, Wp2, A2)
    if has_skips:
        x2 = x2 + sk2_ref[...]
    o2_ref[...] = x2


# ----------------------------------------------------------------------------
# Host-side helpers (pure JAX / numpy glue, not hot paths).
# ----------------------------------------------------------------------------
def bilinear_align_corners(x_nchw, scale):
    n, c, h, w = x_nchw.shape
    oh, ow = int(h * scale), int(w * scale)

    def coords(inp, out):
        if out == 1:
            return jnp.zeros((out,), jnp.float32)
        return jnp.arange(out, dtype=jnp.float32) * (inp - 1) / (out - 1)

    ys, xs = coords(h, oh), coords(w, ow)
    y0 = jnp.floor(ys).astype(jnp.int32)
    y1 = jnp.minimum(y0 + 1, h - 1)
    wy = (ys - y0.astype(jnp.float32))[None, None, :, None]
    x0 = jnp.floor(xs).astype(jnp.int32)
    x1 = jnp.minimum(x0 + 1, w - 1)
    wx = (xs - x0.astype(jnp.float32))[None, None, None, :]

    top = jnp.take(x_nchw, y0, axis=2)
    bot = jnp.take(x_nchw, y1, axis=2)
    tl, tr = jnp.take(top, x0, axis=3), jnp.take(top, x1, axis=3)
    bl, br = jnp.take(bot, x0, axis=3), jnp.take(bot, x1, axis=3)
    t = tl * (1.0 - wx) + tr * wx
    b = bl * (1.0 - wx) + br * wx
    return t * (1.0 - wy) + b * wy


def _interior_mask(h, w, hp, wp, a, p):
    m = np.zeros((1, a), np.float32)
    for r in range(h):
        s = (r + p) * wp + p
        m[0, s:s + w] = 1.0
    return jnp.asarray(m)


def _decimation_matrix(h_out, w_out, wp_in, a_in, wp_out, a_out, p):
    s = np.zeros((a_in, a_out), np.float32)
    for ho in range(h_out):
        for wo in range(w_out):
            pin = (2 * ho + p) * wp_in + (2 * wo + p)
            pout = (ho + p) * wp_out + (wo + p)
            s[pin, pout] = 1.0
    return jnp.asarray(s, dtype=jnp.bfloat16)


def _to_canvas(x_nchw, hp, wp, a, p):
    n, c = x_nchw.shape[:2]
    pad = jnp.pad(x_nchw, ((0, 0), (0, 0), (p, p), (p, p)))
    flat = pad.reshape(n, c, hp * wp)
    if a > hp * wp:
        flat = jnp.pad(flat, ((0, 0), (0, 0), (0, a - hp * wp)))
    return flat


def _from_canvas(o, hp, wp, h, w, p):
    n, c = o.shape[:2]
    return o[:, :, :hp * wp].reshape(n, c, hp, wp)[:, :, p:p + h, p:p + w]


def _xavier_normal_conv(key, cout, cin, k):
    fan_in = cin * k * k
    fan_out = cout * k * k
    std = math.sqrt(2.0 / (fan_in + fan_out))
    w_oihw = jax.random.normal(key, (cout, cin, k, k), jnp.float32) * std
    return jnp.transpose(w_oihw, (2, 3, 1, 0))  # -> (KH, KW, Cin, Cout)


# ----------------------------------------------------------------------------
# Module wrapper.
# ----------------------------------------------------------------------------
class DepthEncoderPallas:
    def __init__(self, in_layers, layers, filter_size, key):
        assert filter_size % 2 == 1
        self.in_layers = in_layers
        self.layers = layers
        self.k = filter_size
        self.p = (filter_size - 1) // 2
        keys = jax.random.split(key, 6)
        in_chs = [in_layers] + [layers] * 5
        # f32 HWIO copies kept for the pure-JAX reference check.
        self.w_hwio = [
            _xavier_normal_conv(keys[i], layers, in_chs[i], filter_size)
            for i in range(6)
        ]
        # MXU LHS operands: (Cout, K*K*Cin) bf16, row order (i, j, ci) matching
        # the in-kernel tap slab.
        self.w_mat = [
            jnp.transpose(w, (3, 0, 1, 2))
               .reshape(layers, filter_size * filter_size * cin)
               .astype(jnp.bfloat16)
            for w, cin in zip(self.w_hwio, in_chs)
        ]
        self.b = [jnp.full((layers, 1), 0.01, jnp.float32) for _ in range(6)]

    def _geom(self, H, W):
        K, P = self.k, self.p

        def out2(h):
            return (h + 2 * P - K) // 2 + 1

        H2, W2 = out2(H), out2(W)
        H4, W4 = out2(H2), out2(W2)

        def canv(h, w):
            hp, wp = h + 2 * P, w + 2 * P
            return hp, wp, _round_up(hp * wp, 128)

        return (H2, W2, H4, W4), (canv(H, W), canv(H2, W2), canv(H4, W4))

    def __call__(self, x_nchw, scale=2, pre_x2=None, pre_x3=None, pre_x4=None):
        N, Cin, H, W = x_nchw.shape
        C, K, P = self.layers, self.k, self.p
        (H2, W2, H4, W4), dims = self._geom(H, W)
        (Hp0, Wp0, A0), (Hp1, Wp1, A1), (Hp2, Wp2, A2) = dims

        has_skips = any(t is not None for t in (pre_x2, pre_x3, pre_x4))

        x_canvas = _to_canvas(x_nchw, Hp0, Wp0, A0, P)
        m0 = _interior_mask(H, W, Hp0, Wp0, A0, P)
        m1 = _interior_mask(H2, W2, Hp1, Wp1, A1, P)
        dec1 = _decimation_matrix(H2, W2, Wp0, A0, Wp1, A1, P)
        dec2 = _decimation_matrix(H4, W4, Wp1, A1, Wp2, A2, P)

        in_specs = [pl.BlockSpec((None, Cin, A0), lambda i: (i, 0, 0))]
        args = [x_canvas]
        for wm, bm in zip(self.w_mat, self.b):
            in_specs += [pl.BlockSpec(wm.shape, lambda i: (0, 0)),
                         pl.BlockSpec(bm.shape, lambda i: (0, 0))]
            args += [wm, bm]
        for cm in (m0, m1, dec1, dec2):
            in_specs.append(pl.BlockSpec(cm.shape, lambda i: (0, 0)))
            args.append(cm)

        if has_skips:
            def prep_skip(pre, hp, wp, a):
                if pre is None:
                    return jnp.zeros((N, C, a), jnp.float32)
                up = bilinear_align_corners(pre, scale)       # NCHW
                return _to_canvas(up, hp, wp, a, P)

            for pre, (hp, wp, a) in ((pre_x4, (Hp0, Wp0, A0)),
                                     (pre_x3, (Hp1, Wp1, A1)),
                                     (pre_x2, (Hp2, Wp2, A2))):
                in_specs.append(pl.BlockSpec((None, C, a), lambda i: (i, 0, 0)))
                args.append(prep_skip(pre, hp, wp, a))

        out_specs = [pl.BlockSpec((None, C, A0), lambda i: (i, 0, 0)),
                     pl.BlockSpec((None, C, A1), lambda i: (i, 0, 0)),
                     pl.BlockSpec((None, C, A2), lambda i: (i, 0, 0))]
        out_shape = [jax.ShapeDtypeStruct((N, C, A0), jnp.float32),
                     jax.ShapeDtypeStruct((N, C, A1), jnp.float32),
                     jax.ShapeDtypeStruct((N, C, A2), jnp.float32)]

        kkc_max = K * K * max(Cin, C)
        scratch_shapes = [
            pltpu.VMEM((kkc_max, A0), jnp.bfloat16),   # shared tap slab
            pltpu.VMEM((C, A0), jnp.bfloat16),         # stage-0 canvas
            pltpu.VMEM((C, A1), jnp.bfloat16),         # stage-1 canvas
            pltpu.VMEM((C, A2), jnp.bfloat16),         # stage-2 canvas
        ]

        flops = (2 * N * K * K * C
                 * (A0 * Cin + 2 * A0 * C + 2 * A1 * C + A2 * C)
                 + 2 * N * C * (A0 * A1 + A1 * A2))
        bytes_accessed = int(
            x_canvas.size * 4
            + sum(wm.size * 2 + C * 4 for wm in self.w_mat)
            + (m0.size + m1.size) * 4 + (dec1.size + dec2.size) * 2
            + N * C * (A0 + A1 + A2) * 4 * (2 if has_skips else 1))

        kernel = functools.partial(_encoder_kernel, K=K, P=P, dims=dims,
                                   has_skips=has_skips)

        o0, o1, o2 = pl.pallas_call(
            kernel,
            out_shape=out_shape,
            grid=(N,),
            in_specs=in_specs,
            out_specs=out_specs,
            scratch_shapes=scratch_shapes,
            compiler_params=pltpu.CompilerParams(
                dimension_semantics=("parallel",)),
            cost_estimate=pl.CostEstimate(
                flops=int(flops), transcendentals=0,
                bytes_accessed=bytes_accessed),
        )(*args)

        # Lane-dense (N, C, A) slabs -> NCHW views (interior slice, no transpose).
        x0 = _from_canvas(o0, Hp0, Wp0, H, W, P)
        x1 = _from_canvas(o1, Hp1, Wp1, H2, W2, P)
        x2 = _from_canvas(o2, Hp2, Wp2, H4, W4, P)
        return x0, x1, x2


# ----------------------------------------------------------------------------
# Pure-JAX reference (same per-conv bf16-operand / f32-accumulation recipe).
# ----------------------------------------------------------------------------
def _ref_forward(enc, x_nchw, scale=2, pre_x2=None, pre_x3=None, pre_x4=None):
    p = enc.p

    def conv(x_nhwc, w_hwio, b, stride):
        y = lax.conv_general_dilated(
            x_nhwc.astype(jnp.bfloat16), w_hwio.astype(jnp.bfloat16),
            window_strides=(stride, stride), padding=[(p, p), (p, p)],
            dimension_numbers=("NHWC", "HWIO", "NHWC"),
            preferred_element_type=jnp.float32)
        return y + b.reshape(1, 1, 1, -1)

    relu = lambda t: jnp.maximum(t, 0.0)
    Ws, Bs = enc.w_hwio, enc.b
    x = jnp.transpose(x_nchw, (0, 2, 3, 1))
    x0 = conv(relu(conv(x, Ws[0], Bs[0], 1)), Ws[1], Bs[1], 1)
    if pre_x4 is not None:
        x0 = x0 + jnp.transpose(bilinear_align_corners(pre_x4, scale), (0, 2, 3, 1))
    x1 = conv(relu(conv(relu(x0), Ws[2], Bs[2], 2)), Ws[3], Bs[3], 1)
    if pre_x3 is not None:
        x1 = x1 + jnp.transpose(bilinear_align_corners(pre_x3, scale), (0, 2, 3, 1))
    x2 = conv(relu(conv(relu(x1), Ws[4], Bs[4], 2)), Ws[5], Bs[5], 1)
    if pre_x2 is not None:
        x2 = x2 + jnp.transpose(bilinear_align_corners(pre_x2, scale), (0, 2, 3, 1))
    return tuple(jnp.transpose(t, (0, 3, 1, 2)) for t in (x0, x1, x2))


if __name__ == "__main__":
    key = jax.random.PRNGKey(0)
    k_param, k_in, k_p2, k_p3, k_p4 = jax.random.split(key, 5)

    N, in_layers, layers, fs, H, W = 2, 2, 8, 3, 16, 16
    enc = DepthEncoderPallas(in_layers, layers, fs, k_param)

    x = jax.random.normal(k_in, (N, in_layers, H, W), jnp.float32)

    # Path 1: no skip inputs (first call of the MSG-CHN cascade).
    x0, x1, x2 = enc(x)
    jax.block_until_ready((x0, x1, x2))
    assert x0.shape == (N, layers, H, W)
    assert x1.shape == (N, layers, H // 2, W // 2)
    assert x2.shape == (N, layers, H // 4, W // 4)

    # Path 2: with pre_x* skips (bilinear upsample + add, align_corners=True).
    pre_x4 = jax.random.normal(k_p4, (N, layers, H // 2, W // 2), jnp.float32)
    pre_x3 = jax.random.normal(k_p3, (N, layers, H // 4, W // 4), jnp.float32)
    pre_x2 = jax.random.normal(k_p2, (N, layers, H // 8, W // 8), jnp.float32)
    y0, y1, y2 = enc(x, scale=2, pre_x2=pre_x2, pre_x3=pre_x3, pre_x4=pre_x4)
    jax.block_until_ready((y0, y1, y2))
    assert y0.shape == (N, layers, H, W)
    assert y1.shape == (N, layers, H // 2, W // 2)
    assert y2.shape == (N, layers, H // 4, W // 4)

    # Correctness vs. a pure-JAX (XLA conv) reference using the same
    # bf16-operand / f32-accumulation recipe.
    r0, r1, r2 = _ref_forward(enc, x)
    s0, s1, s2 = _ref_forward(enc, x, 2, pre_x2, pre_x3, pre_x4)
    for got, want in ((x0, r0), (x1, r1), (x2, r2), (y0, s0), (y1, s1), (y2, s2)):
        np.testing.assert_allclose(np.asarray(got), np.asarray(want),
                                   rtol=2e-2, atol=2e-2)

    print("KERNEL_OK")
</pallas_src>

<mosaic_0001>
module attributes {stable_mosaic.version = 11 : i64} {
  func.func @_encoder_kernel(%arg0: i32, %arg1: memref<1x2x384xf32, #tpu.memory_space<vmem>>, %arg2: memref<8x18xbf16, #tpu.memory_space<vmem>>, %arg3: memref<8x1xf32, #tpu.memory_space<vmem>>, %arg4: memref<8x72xbf16, #tpu.memory_space<vmem>>, %arg5: memref<8x1xf32, #tpu.memory_space<vmem>>, %arg6: memref<8x72xbf16, #tpu.memory_space<vmem>>, %arg7: memref<8x1xf32, #tpu.memory_space<vmem>>, %arg8: memref<8x72xbf16, #tpu.memory_space<vmem>>, %arg9: memref<8x1xf32, #tpu.memory_space<vmem>>, %arg10: memref<8x72xbf16, #tpu.memory_space<vmem>>, %arg11: memref<8x1xf32, #tpu.memory_space<vmem>>, %arg12: memref<8x72xbf16, #tpu.memory_space<vmem>>, %arg13: memref<8x1xf32, #tpu.memory_space<vmem>>, %arg14: memref<1x384xf32, #tpu.memory_space<vmem>>, %arg15: memref<1x128xf32, #tpu.memory_space<vmem>>, %arg16: memref<384x128xbf16, #tpu.memory_space<vmem>>, %arg17: memref<128x128xbf16, #tpu.memory_space<vmem>>, %arg18: memref<1x8x384xf32, #tpu.memory_space<vmem>>, %arg19: memref<1x8x128xf32, #tpu.memory_space<vmem>>, %arg20: memref<1x8x128xf32, #tpu.memory_space<vmem>>, %arg21: memref<72x384xbf16, #tpu.memory_space<vmem>>, %arg22: memref<8x384xbf16, #tpu.memory_space<vmem>>, %arg23: memref<8x128xbf16, #tpu.memory_space<vmem>>, %arg24: memref<8x128xbf16, #tpu.memory_space<vmem>>) attributes {dimension_semantics = [#tpu.dimension_semantics<parallel>], iteration_bounds = array<i64: 2>, scalar_prefetch = 0 : i64, scratch_operands = 4 : i64, tpu.core_type = #tpu.core_type<tc>, window_params = [{transform_indices = @transform_0, window_bounds = array<i64: 1, 2, 384>}, {pipeline_mode = #tpu.pipeline_mode<synchronous>, transform_indices = @transform_1, window_bounds = array<i64: 8, 18>}, {pipeline_mode = #tpu.pipeline_mode<synchronous>, transform_indices = @transform_2, window_bounds = array<i64: 8, 1>}, {pipeline_mode = #tpu.pipeline_mode<synchronous>, transform_indices = @transform_3, window_bounds = array<i64: 8, 72>}, {pipeline_mode = #tpu.pipeline_mode<synchronous>, transform_indices = @transform_4, window_bounds = array<i64: 8, 1>}, {pipeline_mode = #tpu.pipeline_mode<synchronous>, transform_indices = @transform_5, window_bounds = array<i64: 8, 72>}, {pipeline_mode = #tpu.pipeline_mode<synchronous>, transform_indices = @transform_6, window_bounds = array<i64: 8, 1>}, {pipeline_mode = #tpu.pipeline_mode<synchronous>, transform_indices = @transform_7, window_bounds = array<i64: 8, 72>}, {pipeline_mode = #tpu.pipeline_mode<synchronous>, transform_indices = @transform_8, window_bounds = array<i64: 8, 1>}, {pipeline_mode = #tpu.pipeline_mode<synchronous>, transform_indices = @transform_9, window_bounds = array<i64: 8, 72>}, {pipeline_mode = #tpu.pipeline_mode<synchronous>, transform_indices = @transform_10, window_bounds = array<i64: 8, 1>}, {pipeline_mode = #tpu.pipeline_mode<synchronous>, transform_indices = @transform_11, window_bounds = array<i64: 8, 72>}, {pipeline_mode = #tpu.pipeline_mode<synchronous>, transform_indices = @transform_12, window_bounds = array<i64: 8, 1>}, {pipeline_mode = #tpu.pipeline_mode<synchronous>, transform_indices = @transform_13, window_bounds = array<i64: 1, 384>}, {pipeline_mode = #tpu.pipeline_mode<synchronous>, transform_indices = @transform_14, window_bounds = array<i64: 1, 128>}, {pipeline_mode = #tpu.pipeline_mode<synchronous>, transform_indices = @transform_15, window_bounds = array<i64: 384, 128>}, {pipeline_mode = #tpu.pipeline_mode<synchronous>, transform_indices = @transform_16, window_bounds = array<i64: 128, 128>}, {transform_indices = @transform_17, window_bounds = array<i64: 1, 8, 384>}, {transform_indices = @transform_18, window_bounds = array<i64: 1, 8, 128>}, {transform_indices = @transform_19, window_bounds = array<i64: 1, 8, 128>}]} {
    %cst = arith.constant 0.000000e+00 : bf16
    %0 = vector.broadcast %cst : bf16 to vector<72x19xbf16>
    %c0 = arith.constant 0 : index
    %c0_0 = arith.constant 0 : index
    %1 = vector.load %arg21[%c0, %c0_0] : memref<72x384xbf16, #tpu.memory_space<vmem>>, vector<72x19xbf16>
    tpu.vector_store %arg21[%c0, %c0_0], %0 {strides = array<i32>} : memref<72x384xbf16, #tpu.memory_space<vmem>>, vector<72x19xbf16>,
    %c0_1 = arith.constant 0 : index
    %c365 = arith.constant 365 : index
    %2 = vector.load %arg21[%c0_1, %c365] : memref<72x384xbf16, #tpu.memory_space<vmem>>, vector<72x19xbf16>
    tpu.vector_store %arg21[%c0_1, %c365], %0 {strides = array<i32>} : memref<72x384xbf16, #tpu.memory_space<vmem>>, vector<72x19xbf16>,
    %c0_2 = arith.constant 0 : index
    %c0_3 = arith.constant 0 : index
    %3 = vector.load %arg14[%c0_2, %c0_3] : memref<1x384xf32, #tpu.memory_space<vmem>>, vector<1x384xf32>
    %c0_4 = arith.constant 0 : index
    %c0_5 = arith.constant 0 : index
    %4 = vector.load %arg15[%c0_4, %c0_5] : memref<1x128xf32, #tpu.memory_space<vmem>>, vector<1x128xf32>
    %c0_6 = arith.constant 0 : index
    %c0_7 = arith.constant 0 : index
    %c0_8 = arith.constant 0 : index
    %5 = vector.load %arg1[%c0_6, %c0_7, %c0_8] : memref<1x2x384xf32, #tpu.memory_space<vmem>>, vector<1x2x365xf32>
    %6 = vector.shape_cast %5 : vector<1x2x365xf32> to vector<2x365xf32>
    %7 = arith.truncf %6 : vector<2x365xf32> to vector<2x365xbf16>
    %c0_9 = arith.constant 0 : index
    %c19 = arith.constant 19 : index
    %8 = vector.load %arg21[%c0_9, %c19] : memref<72x384xbf16, #tpu.memory_space<vmem>>, vector<2x365xbf16>
    tpu.vector_store %arg21[%c0_9, %c19], %7 {strides = array<i32>} : memref<72x384xbf16, #tpu.memory_space<vmem>>, vector<2x365xbf16>,
    %c0_10 = arith.constant 0 : index
    %c0_11 = arith.constant 0 : index
    %c0_12 = arith.constant 0 : index
    %9 = vector.load %arg1[%c0_10, %c0_11, %c0_12] : memref<1x2x384xf32, #tpu.memory_space<vmem>>, vector<1x2x366xf32>
    %10 = vector.shape_cast %9 : vector<1x2x366xf32> to vector<2x366xf32>
    %11 = arith.truncf %10 : vector<2x366xf32> to vector<2x366xbf16>
    %c2 = arith.constant 2 : index
    %c18 = arith.constant 18 : index
    %12 = vector.load %arg21[%c2, %c18] : memref<72x384xbf16, #tpu.memory_space<vmem>>, vector<2x366xbf16>
    tpu.vector_store %arg21[%c2, %c18], %11 {strides = array<i32>} : memref<72x384xbf16, #tpu.memory_space<vmem>>, vector<2x366xbf16>,
    %c0_13 = arith.constant 0 : index
    %c0_14 = arith.constant 0 : index
    %c0_15 = arith.constant 0 : index
    %13 = vector.load %arg1[%c0_13, %c0_14, %c0_15] : memref<1x2x384xf32, #tpu.memory_space<vmem>>, vector<1x2x367xf32>
    %14 = vector.shape_cast %13 : vector<1x2x367xf32> to vector<2x367xf32>
    %15 = arith.truncf %14 : vector<2x367xf32> to vector<2x367xbf16>
    %c4 = arith.constant 4 : index
    %c17 = arith.constant 17 : index
    %16 = vector.load %arg21[%c4, %c17] : memref<72x384xbf16, #tpu.memory_space<vmem>>, vector<2x367xbf16>
    tpu.vector_store %arg21[%c4, %c17], %15 {strides = array<i32>} : memref<72x384xbf16, #tpu.memory_space<vmem>>, vector<2x367xbf16>,
    %c0_16 = arith.constant 0 : index
    %c0_17 = arith.constant 0 : index
    %c0_18 = arith.constant 0 : index
    %17 = vector.load %arg1[%c0_16, %c0_17, %c0_18] : memref<1x2x384xf32, #tpu.memory_space<vmem>>, vector<1x2x383xf32>
    %18 = vector.shape_cast %17 : vector<1x2x383xf32> to vector<2x383xf32>
    %19 = arith.truncf %18 : vector<2x383xf32> to vector<2x383xbf16>
    %c6 = arith.constant 6 : index
    %c1 = arith.constant 1 : index
    %20 = vector.load %arg21[%c6, %c1] : memref<72x384xbf16, #tpu.memory_space<vmem>>, vector<2x383xbf16>
    tpu.vector_store %arg21[%c6, %c1], %19 {strides = array<i32>} : memref<72x384xbf16, #tpu.memory_space<vmem>>, vector<2x383xbf16>,
    %c0_19 = arith.constant 0 : index
    %c0_20 = arith.constant 0 : index
    %c0_21 = arith.constant 0 : index
    %21 = vector.load %arg1[%c0_19, %c0_20, %c0_21] : memref<1x2x384xf32, #tpu.memory_space<vmem>>, vector<1x2x384xf32>
    %22 = vector.shape_cast %21 : vector<1x2x384xf32> to vector<2x384xf32>
    %23 = arith.truncf %22 : vector<2x384xf32> to vector<2x384xbf16>
    %c8 = arith.constant 8 : index
    %c0_22 = arith.constant 0 : index
    %24 = vector.load %arg21[%c8, %c0_22] : memref<72x384xbf16, #tpu.memory_space<vmem>>, vector<2x384xbf16>
    tpu.vector_store %arg21[%c8, %c0_22], %23 {strides = array<i32>} : memref<72x384xbf16, #tpu.memory_space<vmem>>, vector<2x384xbf16>,
    %c0_23 = arith.constant 0 : index
    %c0_24 = arith.constant 0 : index
    %c1_25 = arith.constant 1 : index
    %25 = vector.load %arg1[%c0_23, %c0_24, %c1_25] : memref<1x2x384xf32, #tpu.memory_space<vmem>>, vector<1x2x383xf32>
    %26 = vector.shape_cast %25 : vector<1x2x383xf32> to vector<2x383xf32>
    %27 = arith.truncf %26 : vector<2x383xf32> to vector<2x383xbf16>
    %c10 = arith.constant 10 : index
    %c0_26 = arith.constant 0 : index
    %28 = vector.load %arg21[%c10, %c0_26] : memref<72x384xbf16, #tpu.memory_space<vmem>>, vector<2x383xbf16>
    tpu.vector_store %arg21[%c10, %c0_26], %27 {strides = array<i32>} : memref<72x384xbf16, #tpu.memory_space<vmem>>, vector<2x383xbf16>,
    %c0_27 = arith.constant 0 : index
    %c0_28 = arith.constant 0 : index
    %c17_29 = arith.constant 17 : index
    %29 = vector.load %arg1[%c0_27, %c0_28, %c17_29] : memref<1x2x384xf32, #tpu.memory_space<vmem>>, vector<1x2x367xf32>
    %30 = vector.shape_cast %29 : vector<1x2x367xf32> to vector<2x367xf32>
    %31 = arith.truncf %30 : vector<2x367xf32> to vector<2x367xbf16>
    %c12 = arith.constant 12 : index
    %c0_30 = arith.constant 0 : index
    %32 = vector.load %arg21[%c12, %c0_30] : memref<72x384xbf16, #tpu.memory_space<vmem>>, vector<2x367xbf16>
    tpu.vector_store %arg21[%c12, %c0_30], %31 {strides = array<i32>} : memref<72x384xbf16, #tpu.memory_space<vmem>>, vector<2x367xbf16>,
    %c0_31 = arith.constant 0 : index
    %c0_32 = arith.constant 0 : index
    %c18_33 = arith.constant 18 : index
    %33 = vector.load %arg1[%c0_31, %c0_32, %c18_33] : memref<1x2x384xf32, #tpu.memory_space<vmem>>, vector<1x2x366xf32>
    %34 = vector.shape_cast %33 : vector<1x2x366xf32> to vector<2x366xf32>
    %35 = arith.truncf %34 : vector<2x366xf32> to vector<2x366xbf16>
    %c14 = arith.constant 14 : index
    %c0_34 = arith.constant 0 : index
    %36 = vector.load %arg21[%c14, %c0_34] : memref<72x384xbf16, #tpu.memory_space<vmem>>, vector<2x366xbf16>
    tpu.vector_store %arg21[%c14, %c0_34], %35 {strides = array<i32>} : memref<72x384xbf16, #tpu.memory_space<vmem>>, vector<2x366xbf16>,
    %c0_35 = arith.constant 0 : index
    %c0_36 = arith.constant 0 : index
    %c19_37 = arith.constant 19 : index
    %37 = vector.load %arg1[%c0_35, %c0_36, %c19_37] : memref<1x2x384xf32, #tpu.memory_space<vmem>>, vector<1x2x365xf32>
    %38 = vector.shape_cast %37 : vector<1x2x365xf32> to vector<2x365xf32>
    %39 = arith.truncf %38 : vector<2x365xf32> to vector<2x365xbf16>
    %c16 = arith.constant 16 : index
    %c0_38 = arith.constant 0 : index
    %40 = vector.load %arg21[%c16, %c0_38] : memref<72x384xbf16, #tpu.memory_space<vmem>>, vector<2x365xbf16>
    tpu.vector_store %arg21[%c16, %c0_38], %39 {strides = array<i32>} : memref<72x384xbf16, #tpu.memory_space<vmem>>, vector<2x365xbf16>,
    %c0_39 = arith.constant 0 : index
    %c0_40 = arith.constant 0 : index
    %41 = vector.load %arg21[%c0_39, %c0_40] : memref<72x384xbf16, #tpu.memory_space<vmem>>, vector<18x384xbf16>
    %c0_41 = arith.constant 0 : index
    %c0_42 = arith.constant 0 : index
    %42 = vector.load %arg2[%c0_41, %c0_42] : memref<8x18xbf16, #tpu.memory_space<vmem>>, vector<8x18xbf16>
    %cst_43 = arith.constant dense<0.000000e+00> : vector<8x384xf32>
    %43 = tpu.matmul %42, %41, %cst_43 {dimension_numbers = #tpu.dot_dimension_numbers<[1], [0], [0], [1], [0, 0, 1, 1], [], []>} : vector<8x18xbf16>, vector<18x384xbf16>, vector<8x384xf32> -> vector<8x384xf32>
    %c0_44 = arith.constant 0 : index
    %c0_45 = arith.constant 0 : index
    %44 = vector.load %arg3[%c0_44, %c0_45] : memref<8x1xf32, #tpu.memory_space<vmem>>, vector<8x1xf32>
    %45 = vector.broadcast %44 : vector<8x1xf32> to vector<8x384xf32>
    %46 = arith.addf %43, %45 : vector<8x384xf32>
    %cst_46 = arith.constant 0.000000e+00 : f32
    %47 = vector.broadcast %cst_46 : f32 to vector<1x384xf32>
    %48 = arith.cmpf ogt, %3, %47 : vector<1x384xf32>
    %cst_47 = arith.constant 0.000000e+00 : f32
    %49 = vector.broadcast %cst_47 : f32 to vector<8x384xf32>
    %50 = arith.maximumf %46, %49 : vector<8x384xf32>
    %cst_48 = arith.constant 0.000000e+00 : f32
    %51 = vector.shape_cast %48 : vector<1x384xi1> to vector<1x384xi1>
    %52 = vector.broadcast %51 : vector<1x384xi1> to vector<8x384xi1>
    %53 = vector.broadcast %cst_48 : f32 to vector<8x384xf32>
    %54 = arith.select %52, %50, %53 : vector<8x384xi1>, vector<8x384xf32>
    %55 = arith.truncf %54 : vector<8x384xf32> to vector<8x384xbf16>
    %c0_49 = arith.constant 0 : index
    %c0_50 = arith.constant 0 : index
    %56 = vector.load %arg22[%c0_49, %c0_50] : memref<8x384xbf16, #tpu.memory_space<vmem>>, vector<8x384xbf16>
    tpu.vector_store %arg22[%c0_49, %c0_50], %55 {strides = array<i32>} : memref<8x384xbf16, #tpu.memory_space<vmem>>, vector<8x384xbf16>,
    %c0_51 = arith.constant 0 : index
    %c0_52 = arith.constant 0 : index
    %57 = vector.load %arg22[%c0_51, %c0_52] : memref<8x384xbf16, #tpu.memory_space<vmem>>, vector<8x365xbf16>
    %c0_53 = arith.constant 0 : index
    %c19_54 = arith.constant 19 : index
    %58 = vector.load %arg21[%c0_53, %c19_54] : memref<72x384xbf16, #tpu.memory_space<vmem>>, vector<8x365xbf16>
    tpu.vector_store %arg21[%c0_53, %c19_54], %57 {strides = array<i32>} : memref<72x384xbf16, #tpu.memory_space<vmem>>, vector<8x365xbf16>,
    %c0_55 = arith.constant 0 : index
    %c0_56 = arith.constant 0 : index
    %59 = vector.load %arg22[%c0_55, %c0_56] : memref<8x384xbf16, #tpu.memory_space<vmem>>, vector<8x366xbf16>
    %c8_57 = arith.constant 8 : index
    %c18_58 = arith.constant 18 : index
    %60 = vector.load %arg21[%c8_57, %c18_58] : memref<72x384xbf16, #tpu.memory_space<vmem>>, vector<8x366xbf16>
    tpu.vector_store %arg21[%c8_57, %c18_58], %59 {strides = array<i32>} : memref<72x384xbf16, #tpu.memory_space<vmem>>, vector<8x366xbf16>,
    %c0_59 = arith.constant 0 : index
    %c0_60 = arith.constant 0 : index
    %61 = vector.load %arg22[%c0_59, %c0_60] : memref<8x384xbf16, #tpu.memory_space<vmem>>, vector<8x367xbf16>
    %c16_61 = arith.constant 16 : index
    %c17_62 = arith.constant 17 : index
    %62 = vector.load %arg21[%c16_61, %c17_62] : memref<72x384xbf16, #tpu.memory_space<vmem>>, vector<8x367xbf16>
    tpu.vector_store %arg21[%c16_61, %c17_62], %61 {strides = array<i32>} : memref<72x384xbf16, #tpu.memory_space<vmem>>, vector<8x367xbf16>,
    %c0_63 = arith.constant 0 : index
    %c0_64 = arith.constant 0 : index
    %63 = vector.load %arg22[%c0_63, %c0_64] : memref<8x384xbf16, #tpu.memory_space<vmem>>, vector<8x383xbf16>
    %c24 = arith.constant 24 : index
    %c1_65 = arith.constant 1 : index
    %64 = vector.load %arg21[%c24, %c1_65] : memref<72x384xbf16, #tpu.memory_space<vmem>>, vector<8x383xbf16>
    tpu.vector_store %arg21[%c24, %c1_65], %63 {strides = array<i32>} : memref<72x384xbf16, #tpu.memory_space<vmem>>, vector<8x383xbf16>,
    %c0_66 = arith.constant 0 : index
    %c0_67 = arith.constant 0 : index
    %65 = vector.load %arg22[%c0_66, %c0_67] : memref<8x384xbf16, #tpu.memory_space<vmem>>, vector<8x384xbf16>
    %c32 = arith.constant 32 : index
    %c0_68 = arith.constant 0 : index
    %66 = vector.load %arg21[%c32, %c0_68] : memref<72x384xbf16, #tpu.memory_space<vmem>>, vector<8x384xbf16>
    tpu.vector_store %arg21[%c32, %c0_68], %65 {strides = array<i32>} : memref<72x384xbf16, #tpu.memory_space<vmem>>, vector<8x384xbf16>,
    %c0_69 = arith.constant 0 : index
    %c1_70 = arith.constant 1 : index
    %67 = vector.load %arg22[%c0_69, %c1_70] : memref<8x384xbf16, #tpu.memory_space<vmem>>, vector<8x383xbf16>
    %c40 = arith.constant 40 : index
    %c0_71 = arith.constant 0 : index
    %68 = vector.load %arg21[%c40, %c0_71] : memref<72x384xbf16, #tpu.memory_space<vmem>>, vector<8x383xbf16>
    tpu.vector_store %arg21[%c40, %c0_71], %67 {strides = array<i32>} : memref<72x384xbf16, #tpu.memory_space<vmem>>, vector<8x383xbf16>,
    %c0_72 = arith.constant 0 : index
    %c17_73 = arith.constant 17 : index
    %69 = vector.load %arg22[%c0_72, %c17_73] : memref<8x384xbf16, #tpu.memory_space<vmem>>, vector<8x367xbf16>
    %c48 = arith.constant 48 : index
    %c0_74 = arith.constant 0 : index
    %70 = vector.load %arg21[%c48, %c0_74] : memref<72x384xbf16, #tpu.memory_space<vmem>>, vector<8x367xbf16>
    tpu.vector_store %arg21[%c48, %c0_74], %69 {strides = array<i32>} : memref<72x384xbf16, #tpu.memory_space<vmem>>, vector<8x367xbf16>,
    %c0_75 = arith.constant 0 : index
    %c18_76 = arith.constant 18 : index
    %71 = vector.load %arg22[%c0_75, %c18_76] : memref<8x384xbf16, #tpu.memory_space<vmem>>, vector<8x366xbf16>
    %c56 = arith.constant 56 : index
    %c0_77 = arith.constant 0 : index
    %72 = vector.load %arg21[%c56, %c0_77] : memref<72x384xbf16, #tpu.memory_space<vmem>>, vector<8x366xbf16>
    tpu.vector_store %arg21[%c56, %c0_77], %71 {strides = array<i32>} : memref<72x384xbf16, #tpu.memory_space<vmem>>, vector<8x366xbf16>,
    %c0_78 = arith.constant 0 : index
    %c19_79 = arith.constant 19 : index
    %73 = vector.load %arg22[%c0_78, %c19_79] : memref<8x384xbf16, #tpu.memory_space<vmem>>, vector<8x365xbf16>
    %c64 = arith.constant 64 : index
    %c0_80 = arith.constant 0 : index
    %74 = vector.load %arg21[%c64, %c0_80] : memref<72x384xbf16, #tpu.memory_space<vmem>>, vector<8x365xbf16>
    tpu.vector_store %arg21[%c64, %c0_80], %73 {strides = array<i32>} : memref<72x384xbf16, #tpu.memory_space<vmem>>, vector<8x365xbf16>,
    %c0_81 = arith.constant 0 : index
    %c0_82 = arith.constant 0 : index
    %75 = vector.load %arg21[%c0_81, %c0_82] : memref<72x384xbf16, #tpu.memory_space<vmem>>, vector<72x384xbf16>
    %c0_83 = arith.constant 0 : index
    %c0_84 = arith.constant 0 : index
    %76 = vector.load %arg4[%c0_83, %c0_84] : memref<8x72xbf16, #tpu.memory_space<vmem>>, vector<8x72xbf16>
    %cst_85 = arith.constant dense<0.000000e+00> : vector<8x384xf32>
    %77 = tpu.matmul %76, %75, %cst_85 {dimension_numbers = #tpu.dot_dimension_numbers<[1], [0], [0], [1], [0, 0, 1, 1], [], []>} : vector<8x72xbf16>, vector<72x384xbf16>, vector<8x384xf32> -> vector<8x384xf32>
    %c0_86 = arith.constant 0 : index
    %c0_87 = arith.constant 0 : index
    %78 = vector.load %arg5[%c0_86, %c0_87] : memref<8x1xf32, #tpu.memory_space<vmem>>, vector<8x1xf32>
    %79 = vector.broadcast %78 : vector<8x1xf32> to vector<8x384xf32>
    %80 = arith.addf %77, %79 : vector<8x384xf32>
    %c0_88 = arith.constant 0 : index
    %c0_89 = arith.constant 0 : index
    %c0_90 = arith.constant 0 : index
    %81 = vector.load %arg18[%c0_88, %c0_89, %c0_90] : memref<1x8x384xf32, #tpu.memory_space<vmem>>, vector<1x8x384xf32>
    %82 = vector.shape_cast %81 : vector<1x8x384xf32> to vector<8x384xf32>
    %83 = vector.shape_cast %80 : vector<8x384xf32> to vector<1x8x384xf32>
    tpu.vector_store %arg18[%c0_88, %c0_89, %c0_90], %83 {strides = array<i32>} : memref<1x8x384xf32, #tpu.memory_space<vmem>>, vector<1x8x384xf32>,
    %cst_91 = arith.constant 0.000000e+00 : f32
    %84 = vector.broadcast %cst_91 : f32 to vector<1x384xf32>
    %85 = arith.cmpf ogt, %3, %84 : vector<1x384xf32>
    %cst_92 = arith.constant 0.000000e+00 : f32
    %86 = vector.broadcast %cst_92 : f32 to vector<8x384xf32>
    %87 = arith.maximumf %80, %86 : vector<8x384xf32>
    %cst_93 = arith.constant 0.000000e+00 : f32
    %88 = vector.shape_cast %85 : vector<1x384xi1> to vector<1x384xi1>
    %89 = vector.broadcast %88 : vector<1x384xi1> to vector<8x384xi1>
    %90 = vector.broadcast %cst_93 : f32 to vector<8x384xf32>
    %91 = arith.select %89, %87, %90 : vector<8x384xi1>, vector<8x384xf32>
    %92 = arith.truncf %91 : vector<8x384xf32> to vector<8x384xbf16>
    %c0_94 = arith.constant 0 : index
    %c0_95 = arith.constant 0 : index
    %93 = vector.load %arg22[%c0_94, %c0_95] : memref<8x384xbf16, #tpu.memory_space<vmem>>, vector<8x384xbf16>
    tpu.vector_store %arg22[%c0_94, %c0_95], %92 {strides = array<i32>} : memref<8x384xbf16, #tpu.memory_space<vmem>>, vector<8x384xbf16>,
    %c0_96 = arith.constant 0 : index
    %c0_97 = arith.constant 0 : index
    %94 = vector.load %arg22[%c0_96, %c0_97] : memref<8x384xbf16, #tpu.memory_space<vmem>>, vector<8x365xbf16>
    %c0_98 = arith.constant 0 : index
    %c19_99 = arith.constant 19 : index
    %95 = vector.load %arg21[%c0_98, %c19_99] : memref<72x384xbf16, #tpu.memory_space<vmem>>, vector<8x365xbf16>
    tpu.vector_store %arg21[%c0_98, %c19_99], %94 {strides = array<i32>} : memref<72x384xbf16, #tpu.memory_space<vmem>>, vector<8x365xbf16>,
    %c0_100 = arith.constant 0 : index
    %c0_101 = arith.constant 0 : index
    %96 = vector.load %arg22[%c0_100, %c0_101] : memref<8x384xbf16, #tpu.memory_space<vmem>>, vector<8x366xbf16>
    %c8_102 = arith.constant 8 : index
    %c18_103 = arith.constant 18 : index
    %97 = vector.load %arg21[%c8_102, %c18_103] : memref<72x384xbf16, #tpu.memory_space<vmem>>, vector<8x366xbf16>
    tpu.vector_store %arg21[%c8_102, %c18_103], %96 {strides = array<i32>} : memref<72x384xbf16, #tpu.memory_space<vmem>>, vector<8x366xbf16>,
    %c0_104 = arith.constant 0 : index
    %c0_105 = arith.constant 0 : index
    %98 = vector.load %arg22[%c0_104, %c0_105] : memref<8x384xbf16, #tpu.memory_space<vmem>>, vector<8x367xbf16>
    %c16_106 = arith.constant 16 : index
    %c17_107 = arith.constant 17 : index
    %99 = vector.load %arg21[%c16_106, %c17_107] : memref<72x384xbf16, #tpu.memory_space<vmem>>, vector<8x367xbf16>
    tpu.vector_store %arg21[%c16_106, %c17_107], %98 {strides = array<i32>} : memref<72x384xbf16, #tpu.memory_space<vmem>>, vector<8x367xbf16>,
    %c0_108 = arith.constant 0 : index
    %c0_109 = arith.constant 0 : index
    %100 = vector.load %arg22[%c0_108, %c0_109] : memref<8x384xbf16, #tpu.memory_space<vmem>>, vector<8x383xbf16>
    %c24_110 = arith.constant 24 : index
    %c1_111 = arith.constant 1 : index
    %101 = vector.load %arg21[%c24_110, %c1_111] : memref<72x384xbf16, #tpu.memory_space<vmem>>, vector<8x383xbf16>
    tpu.vector_store %arg21[%c24_110, %c1_111], %100 {strides = array<i32>} : memref<72x384xbf16, #tpu.memory_space<vmem>>, vector<8x383xbf16>,
    %c0_112 = arith.constant 0 : index
    %c0_113 = arith.constant 0 : index
    %102 = vector.load %arg22[%c0_112, %c0_113] : memref<8x384xbf16, #tpu.memory_space<vmem>>, vector<8x384xbf16>
    %c32_114 = arith.constant 32 : index
    %c0_115 = arith.constant 0 : index
    %103 = vector.load %arg21[%c32_114, %c0_115] : memref<72x384xbf16, #tpu.memory_space<vmem>>, vector<8x384xbf16>
    tpu.vector_store %arg21[%c32_114, %c0_115], %102 {strides = array<i32>} : memref<72x384xbf16, #tpu.memory_space<vmem>>, vector<8x384xbf16>,
    %c0_116 = arith.constant 0 : index
    %c1_117 = arith.constant 1 : index
    %104 = vector.load %arg22[%c0_116, %c1_117] : memref<8x384xbf16, #tpu.memory_space<vmem>>, vector<8x383xbf16>
    %c40_118 = arith.constant 40 : index
    %c0_119 = arith.constant 0 : index
    %105 = vector.load %arg21[%c40_118, %c0_119] : memref<72x384xbf16, #tpu.memory_space<vmem>>, vector<8x383xbf16>
    tpu.vector_store %arg21[%c40_118, %c0_119], %104 {strides = array<i32>} : memref<72x384xbf16, #tpu.memory_space<vmem>>, vector<8x383xbf16>,
    %c0_120 = arith.constant 0 : index
    %c17_121 = arith.constant 17 : index
    %106 = vector.load %arg22[%c0_120, %c17_121] : memref<8x384xbf16, #tpu.memory_space<vmem>>, vector<8x367xbf16>
    %c48_122 = arith.constant 48 : index
    %c0_123 = arith.constant 0 : index
    %107 = vector.load %arg21[%c48_122, %c0_123] : memref<72x384xbf16, #tpu.memory_space<vmem>>, vector<8x367xbf16>
    tpu.vector_store %arg21[%c48_122, %c0_123], %106 {strides = array<i32>} : memref<72x384xbf16, #tpu.memory_space<vmem>>, vector<8x367xbf16>,
    %c0_124 = arith.constant 0 : index
    %c18_125 = arith.constant 18 : index
    %108 = vector.load %arg22[%c0_124, %c18_125] : memref<8x384xbf16, #tpu.memory_space<vmem>>, vector<8x366xbf16>
    %c56_126 = arith.constant 56 : index
    %c0_127 = arith.constant 0 : index
    %109 = vector.load %arg21[%c56_126, %c0_127] : memref<72x384xbf16, #tpu.memory_space<vmem>>, vector<8x366xbf16>
    tpu.vector_store %arg21[%c56_126, %c0_127], %108 {strides = array<i32>} : memref<72x384xbf16, #tpu.memory_space<vmem>>, vector<8x366xbf16>,
    %c0_128 = arith.constant 0 : index
    %c19_129 = arith.constant 19 : index
    %110 = vector.load %arg22[%c0_128, %c19_129] : memref<8x384xbf16, #tpu.memory_space<vmem>>, vector<8x365xbf16>
    %c64_130 = arith.constant 64 : index
    %c0_131 = arith.constant 0 : index
    %111 = vector.load %arg21[%c64_130, %c0_131] : memref<72x384xbf16, #tpu.memory_space<vmem>>, vector<8x365xbf16>
    tpu.vector_store %arg21[%c64_130, %c0_131], %110 {strides = array<i32>} : memref<72x384xbf16, #tpu.memory_space<vmem>>, vector<8x365xbf16>,
    %c0_132 = arith.constant 0 : index
    %c0_133 = arith.constant 0 : index
    %112 = vector.load %arg21[%c0_132, %c0_133] : memref<72x384xbf16, #tpu.memory_space<vmem>>, vector<72x384xbf16>
    %c0_134 = arith.constant 0 : index
    %c0_135 = arith.constant 0 : index
    %113 = vector.load %arg6[%c0_134, %c0_135] : memref<8x72xbf16, #tpu.memory_space<vmem>>, vector<8x72xbf16>
    %cst_136 = arith.constant dense<0.000000e+00> : vector<8x384xf32>
    %114 = tpu.matmul %113, %112, %cst_136 {dimension_numbers = #tpu.dot_dimension_numbers<[1], [0], [0], [1], [0, 0, 1, 1], [], []>} : vector<8x72xbf16>, vector<72x384xbf16>, vector<8x384xf32> -> vector<8x384xf32>
    %c0_137 = arith.constant 0 : index
    %c0_138 = arith.constant 0 : index
    %115 = vector.load %arg7[%c0_137, %c0_138] : memref<8x1xf32, #tpu.memory_space<vmem>>, vector<8x1xf32>
    %116 = vector.broadcast %115 : vector<8x1xf32> to vector<8x384xf32>
    %117 = arith.addf %114, %116 : vector<8x384xf32>
    %cst_139 = arith.constant 0.000000e+00 : f32
    %118 = vector.broadcast %cst_139 : f32 to vector<8x384xf32>
    %119 = arith.maximumf %117, %118 : vector<8x384xf32>
    %120 = arith.truncf %119 : vector<8x384xf32> to vector<8x384xbf16>
    %c0_140 = arith.constant 0 : index
    %c0_141 = arith.constant 0 : index
    %121 = vector.load %arg16[%c0_140, %c0_141] : memref<384x128xbf16, #tpu.memory_space<vmem>>, vector<384x128xbf16>
    %cst_142 = arith.constant dense<0.000000e+00> : vector<8x128xf32>
    %122 = tpu.matmul %120, %121, %cst_142 {dimension_numbers = #tpu.dot_dimension_numbers<[1], [0], [0], [1], [0, 0, 1, 1], [], []>} : vector<8x384xbf16>, vector<384x128xbf16>, vector<8x128xf32> -> vector<8x128xf32>
    %123 = arith.truncf %122 : vector<8x128xf32> to vector<8x128xbf16>
    %c0_143 = arith.constant 0 : index
    %c0_144 = arith.constant 0 : index
    %124 = vector.load %arg23[%c0_143, %c0_144] : memref<8x128xbf16, #tpu.memory_space<vmem>>, vector<8x128xbf16>
    tpu.vector_store %arg23[%c0_143, %c0_144], %123 {strides = array<i32>} : memref<8x128xbf16, #tpu.memory_space<vmem>>, vector<8x128xbf16>,
    %c0_145 = arith.constant 0 : index
    %c0_146 = arith.constant 0 : index
    %125 = vector.load %arg23[%c0_145, %c0_146] : memref<8x128xbf16, #tpu.memory_space<vmem>>, vector<8x117xbf16>
    %c0_147 = arith.constant 0 : index
    %c11 = arith.constant 11 : index
    %126 = vector.load %arg21[%c0_147, %c11] : memref<72x384xbf16, #tpu.memory_space<vmem>>, vector<8x117xbf16>
    tpu.vector_store %arg21[%c0_147, %c11], %125 {strides = array<i32>} : memref<72x384xbf16, #tpu.memory_space<vmem>>, vector<8x117xbf16>,
    %c0_148 = arith.constant 0 : index
    %c0_149 = arith.constant 0 : index
    %127 = vector.load %arg23[%c0_148, %c0_149] : memref<8x128xbf16, #tpu.memory_space<vmem>>, vector<8x118xbf16>
    %c8_150 = arith.constant 8 : index
    %c10_151 = arith.constant 10 : index
    %128 = vector.load %arg21[%c8_150, %c10_151] : memref<72x384xbf16, #tpu.memory_space<vmem>>, vector<8x118xbf16>
    tpu.vector_store %arg21[%c8_150, %c10_151], %127 {strides = array<i32>} : memref<72x384xbf16, #tpu.memory_space<vmem>>, vector<8x118xbf16>,
    %c0_152 = arith.constant 0 : index
    %c0_153 = arith.constant 0 : index
    %129 = vector.load %arg23[%c0_152, %c0_153] : memref<8x128xbf16, #tpu.memory_space<vmem>>, vector<8x119xbf16>
    %c16_154 = arith.constant 16 : index
    %c9 = arith.constant 9 : index
    %130 = vector.load %arg21[%c16_154, %c9] : memref<72x384xbf16, #tpu.memory_space<vmem>>, vector<8x119xbf16>
    tpu.vector_store %arg21[%c16_154, %c9], %129 {strides = array<i32>} : memref<72x384xbf16, #tpu.memory_space<vmem>>, vector<8x119xbf16>,
    %c0_155 = arith.constant 0 : index
    %c0_156 = arith.constant 0 : index
    %131 = vector.load %arg23[%c0_155, %c0_156] : memref<8x128xbf16, #tpu.memory_space<vmem>>, vector<8x127xbf16>
    %c24_157 = arith.constant 24 : index
    %c1_158 = arith.constant 1 : index
    %132 = vector.load %arg21[%c24_157, %c1_158] : memref<72x384xbf16, #tpu.memory_space<vmem>>, vector<8x127xbf16>
    tpu.vector_store %arg21[%c24_157, %c1_158], %131 {strides = array<i32>} : memref<72x384xbf16, #tpu.memory_space<vmem>>, vector<8x127xbf16>,
    %c0_159 = arith.constant 0 : index
    %c0_160 = arith.constant 0 : index
    %133 = vector.load %arg23[%c0_159, %c0_160] : memref<8x128xbf16, #tpu.memory_space<vmem>>, vector<8x128xbf16>
    %c32_161 = arith.constant 32 : index
    %c0_162 = arith.constant 0 : index
    %134 = vector.load %arg21[%c32_161, %c0_162] : memref<72x384xbf16, #tpu.memory_space<vmem>>, vector<8x128xbf16>
    tpu.vector_store %arg21[%c32_161, %c0_162], %133 {strides = array<i32>} : memref<72x384xbf16, #tpu.memory_space<vmem>>, vector<8x128xbf16>,
    %c0_163 = arith.constant 0 : index
    %c1_164 = arith.constant 1 : index
    %135 = vector.load %arg23[%c0_163, %c1_164] : memref<8x128xbf16, #tpu.memory_space<vmem>>, vector<8x127xbf16>
    %c40_165 = arith.constant 40 : index
    %c0_166 = arith.constant 0 : index
    %136 = vector.load %arg21[%c40_165, %c0_166] : memref<72x384xbf16, #tpu.memory_space<vmem>>, vector<8x127xbf16>
    tpu.vector_store %arg21[%c40_165, %c0_166], %135 {strides = array<i32>} : memref<72x384xbf16, #tpu.memory_space<vmem>>, vector<8x127xbf16>,
    %c0_167 = arith.constant 0 : index
    %c9_168 = arith.constant 9 : index
    %137 = vector.load %arg23[%c0_167, %c9_168] : memref<8x128xbf16, #tpu.memory_space<vmem>>, vector<8x119xbf16>
    %c48_169 = arith.constant 48 : index
    %c0_170 = arith.constant 0 : index
    %138 = vector.load %arg21[%c48_169, %c0_170] : memref<72x384xbf16, #tpu.memory_space<vmem>>, vector<8x119xbf16>
    tpu.vector_store %arg21[%c48_169, %c0_170], %137 {strides = array<i32>} : memref<72x384xbf16, #tpu.memory_space<vmem>>, vector<8x119xbf16>,
    %c0_171 = arith.constant 0 : index
    %c10_172 = arith.constant 10 : index
    %139 = vector.load %arg23[%c0_171, %c10_172] : memref<8x128xbf16, #tpu.memory_space<vmem>>, vector<8x118xbf16>
    %c56_173 = arith.constant 56 : index
    %c0_174 = arith.constant 0 : index
    %140 = vector.load %arg21[%c56_173, %c0_174] : memref<72x384xbf16, #tpu.memory_space<vmem>>, vector<8x118xbf16>
    tpu.vector_store %arg21[%c56_173, %c0_174], %139 {strides = array<i32>} : memref<72x384xbf16, #tpu.memory_space<vmem>>, vector<8x118xbf16>,
    %c0_175 = arith.constant 0 : index
    %c11_176 = arith.constant 11 : index
    %141 = vector.load %arg23[%c0_175, %c11_176] : memref<8x128xbf16, #tpu.memory_space<vmem>>, vector<8x117xbf16>
    %c64_177 = arith.constant 64 : index
    %c0_178 = arith.constant 0 : index
    %142 = vector.load %arg21[%c64_177, %c0_178] : memref<72x384xbf16, #tpu.memory_space<vmem>>, vector<8x117xbf16>
    tpu.vector_store %arg21[%c64_177, %c0_178], %141 {strides = array<i32>} : memref<72x384xbf16, #tpu.memory_space<vmem>>, vector<8x117xbf16>,
    %c0_179 = arith.constant 0 : index
    %c0_180 = arith.constant 0 : index
    %143 = vector.load %arg21[%c0_179, %c0_180] : memref<72x384xbf16, #tpu.memory_space<vmem>>, vector<72x128xbf16>
    %c0_181 = arith.constant 0 : index
    %c0_182 = arith.constant 0 : index
    %144 = vector.load %arg8[%c0_181, %c0_182] : memref<8x72xbf16, #tpu.memory_space<vmem>>, vector<8x72xbf16>
    %cst_183 = arith.constant dense<0.000000e+00> : vector<8x128xf32>
    %145 = tpu.matmul %144, %143, %cst_183 {dimension_numbers = #tpu.dot_dimension_numbers<[1], [0], [0], [1], [0, 0, 1, 1], [], []>} : vector<8x72xbf16>, vector<72x128xbf16>, vector<8x128xf32> -> vector<8x128xf32>
    %c0_184 = arith.constant 0 : index
    %c0_185 = arith.constant 0 : index
    %146 = vector.load %arg9[%c0_184, %c0_185] : memref<8x1xf32, #tpu.memory_space<vmem>>, vector<8x1xf32>
    %147 = vector.broadcast %146 : vector<8x1xf32> to vector<8x128xf32>
    %148 = arith.addf %145, %147 : vector<8x128xf32>
    %c0_186 = arith.constant 0 : index
    %c0_187 = arith.constant 0 : index
    %c0_188 = arith.constant 0 : index
    %149 = vector.load %arg19[%c0_186, %c0_187, %c0_188] : memref<1x8x128xf32, #tpu.memory_space<vmem>>, vector<1x8x128xf32>
    %150 = vector.shape_cast %149 : vector<1x8x128xf32> to vector<8x128xf32>
    %151 = vector.shape_cast %148 : vector<8x128xf32> to vector<1x8x128xf32>
    tpu.vector_store %arg19[%c0_186, %c0_187, %c0_188], %151 {strides = array<i32>} : memref<1x8x128xf32, #tpu.memory_space<vmem>>, vector<1x8x128xf32>,
    %cst_189 = arith.constant 0.000000e+00 : f32
    %152 = vector.broadcast %cst_189 : f32 to vector<1x128xf32>
    %153 = arith.cmpf ogt, %4, %152 : vector<1x128xf32>
    %cst_190 = arith.constant 0.000000e+00 : f32
    %154 = vector.broadcast %cst_190 : f32 to vector<8x128xf32>
    %155 = arith.maximumf %148, %154 : vector<8x128xf32>
    %cst_191 = arith.constant 0.000000e+00 : f32
    %156 = vector.shape_cast %153 : vector<1x128xi1> to vector<1x128xi1>
    %157 = vector.broadcast %156 : vector<1x128xi1> to vector<8x128xi1>
    %158 = vector.broadcast %cst_191 : f32 to vector<8x128xf32>
    %159 = arith.select %157, %155, %158 : vector<8x128xi1>, vector<8x128xf32>
    %160 = arith.truncf %159 : vector<8x128xf32> to vector<8x128xbf16>
    %c0_192 = arith.constant 0 : index
    %c0_193 = arith.constant 0 : index
    %161 = vector.load %arg23[%c0_192, %c0_193] : memref<8x128xbf16, #tpu.memory_space<vmem>>, vector<8x128xbf16>
    tpu.vector_store %arg23[%c0_192, %c0_193], %160 {strides = array<i32>} : memref<8x128xbf16, #tpu.memory_space<vmem>>, vector<8x128xbf16>,
    %c0_194 = arith.constant 0 : index
    %c0_195 = arith.constant 0 : index
    %162 = vector.load %arg23[%c0_194, %c0_195] : memref<8x128xbf16, #tpu.memory_space<vmem>>, vector<8x117xbf16>
    %c0_196 = arith.constant 0 : index
    %c11_197 = arith.constant 11 : index
    %163 = vector.load %arg21[%c0_196, %c11_197] : memref<72x384xbf16, #tpu.memory_space<vmem>>, vector<8x117xbf16>
    tpu.vector_store %arg21[%c0_196, %c11_197], %162 {strides = array<i32>} : memref<72x384xbf16, #tpu.memory_space<vmem>>, vector<8x117xbf16>,
    %c0_198 = arith.constant 0 : index
    %c0_199 = arith.constant 0 : index
    %164 = vector.load %arg23[%c0_198, %c0_199] : memref<8x128xbf16, #tpu.memory_space<vmem>>, vector<8x118xbf16>
    %c8_200 = arith.constant 8 : index
    %c10_201 = arith.constant 10 : index
    %165 = vector.load %arg21[%c8_200, %c10_201] : memref<72x384xbf16, #tpu.memory_space<vmem>>, vector<8x118xbf16>
    tpu.vector_store %arg21[%c8_200, %c10_201], %164 {strides = array<i32>} : memref<72x384xbf16, #tpu.memory_space<vmem>>, vector<8x118xbf16>,
    %c0_202 = arith.constant 0 : index
    %c0_203 = arith.constant 0 : index
    %166 = vector.load %arg23[%c0_202, %c0_203] : memref<8x128xbf16, #tpu.memory_space<vmem>>, vector<8x119xbf16>
    %c16_204 = arith.constant 16 : index
    %c9_205 = arith.constant 9 : index
    %167 = vector.load %arg21[%c16_204, %c9_205] : memref<72x384xbf16, #tpu.memory_space<vmem>>, vector<8x119xbf16>
    tpu.vector_store %arg21[%c16_204, %c9_205], %166 {strides = array<i32>} : memref<72x384xbf16, #tpu.memory_space<vmem>>, vector<8x119xbf16>,
    %c0_206 = arith.constant 0 : index
    %c0_207 = arith.constant 0 : index
    %168 = vector.load %arg23[%c0_206, %c0_207] : memref<8x128xbf16, #tpu.memory_space<vmem>>, vector<8x127xbf16>
    %c24_208 = arith.constant 24 : index
    %c1_209 = arith.constant 1 : index
    %169 = vector.load %arg21[%c24_208, %c1_209] : memref<72x384xbf16, #tpu.memory_space<vmem>>, vector<8x127xbf16>
    tpu.vector_store %arg21[%c24_208, %c1_209], %168 {strides = array<i32>} : memref<72x384xbf16, #tpu.memory_space<vmem>>, vector<8x127xbf16>,
    %c0_210 = arith.constant 0 : index
    %c0_211 = arith.constant 0 : index
    %170 = vector.load %arg23[%c0_210, %c0_211] : memref<8x128xbf16, #tpu.memory_space<vmem>>, vector<8x128xbf16>
    %c32_212 = arith.constant 32 : index
    %c0_213 = arith.constant 0 : index
    %171 = vector.load %arg21[%c32_212, %c0_213] : memref<72x384xbf16, #tpu.memory_space<vmem>>, vector<8x128xbf16>
    tpu.vector_store %arg21[%c32_212, %c0_213], %170 {strides = array<i32>} : memref<72x384xbf16, #tpu.memory_space<vmem>>, vector<8x128xbf16>,
    %c0_214 = arith.constant 0 : index
    %c1_215 = arith.constant 1 : index
    %172 = vector.load %arg23[%c0_214, %c1_215] : memref<8x128xbf16, #tpu.memory_space<vmem>>, vector<8x127xbf16>
    %c40_216 = arith.constant 40 : index
    %c0_217 = arith.constant 0 : index
    %173 = vector.load %arg21[%c40_216, %c0_217] : memref<72x384xbf16, #tpu.memory_space<vmem>>, vector<8x127xbf16>
    tpu.vector_store %arg21[%c40_216, %c0_217], %172 {strides = array<i32>} : memref<72x384xbf16, #tpu.memory_space<vmem>>, vector<8x127xbf16>,
    %c0_218 = arith.constant 0 : index
    %c9_219 = arith.constant 9 : index
    %174 = vector.load %arg23[%c0_218, %c9_219] : memref<8x128xbf16, #tpu.memory_space<vmem>>, vector<8x119xbf16>
    %c48_220 = arith.constant 48 : index
    %c0_221 = arith.constant 0 : index
    %175 = vector.load %arg21[%c48_220, %c0_221] : memref<72x384xbf16, #tpu.memory_space<vmem>>, vector<8x119xbf16>
    tpu.vector_store %arg21[%c48_220, %c0_221], %174 {strides = array<i32>} : memref<72x384xbf16, #tpu.memory_space<vmem>>, vector<8x119xbf16>,
    %c0_222 = arith.constant 0 : index
    %c10_223 = arith.constant 10 : index
    %176 = vector.load %arg23[%c0_222, %c10_223] : memref<8x128xbf16, #tpu.memory_space<vmem>>, vector<8x118xbf16>
    %c56_224 = arith.constant 56 : index
    %c0_225 = arith.constant 0 : index
    %177 = vector.load %arg21[%c56_224, %c0_225] : memref<72x384xbf16, #tpu.memory_space<vmem>>, vector<8x118xbf16>
    tpu.vector_store %arg21[%c56_224, %c0_225], %176 {strides = array<i32>} : memref<72x384xbf16, #tpu.memory_space<vmem>>, vector<8x118xbf16>,
    %c0_226 = arith.constant 0 : index
    %c11_227 = arith.constant 11 : index
    %178 = vector.load %arg23[%c0_226, %c11_227] : memref<8x128xbf16, #tpu.memory_space<vmem>>, vector<8x117xbf16>
    %c64_228 = arith.constant 64 : index
    %c0_229 = arith.constant 0 : index
    %179 = vector.load %arg21[%c64_228, %c0_229] : memref<72x384xbf16, #tpu.memory_space<vmem>>, vector<8x117xbf16>
    tpu.vector_store %arg21[%c64_228, %c0_229], %178 {strides = array<i32>} : memref<72x384xbf16, #tpu.memory_space<vmem>>, vector<8x117xbf16>,
    %c0_230 = arith.constant 0 : index
    %c0_231 = arith.constant 0 : index
    %180 = vector.load %arg21[%c0_230, %c0_231] : memref<72x384xbf16, #tpu.memory_space<vmem>>, vector<72x128xbf16>
    %c0_232 = arith.constant 0 : index
    %c0_233 = arith.constant 0 : index
    %181 = vector.load %arg10[%c0_232, %c0_233] : memref<8x72xbf16, #tpu.memory_space<vmem>>, vector<8x72xbf16>
    %cst_234 = arith.constant dense<0.000000e+00> : vector<8x128xf32>
    %182 = tpu.matmul %181, %180, %cst_234 {dimension_numbers = #tpu.dot_dimension_numbers<[1], [0], [0], [1], [0, 0, 1, 1], [], []>} : vector<8x72xbf16>, vector<72x128xbf16>, vector<8x128xf32> -> vector<8x128xf32>
    %c0_235 = arith.constant 0 : index
    %c0_236 = arith.constant 0 : index
    %183 = vector.load %arg11[%c0_235, %c0_236] : memref<8x1xf32, #tpu.memory_space<vmem>>, vector<8x1xf32>
    %184 = vector.broadcast %183 : vector<8x1xf32> to vector<8x128xf32>
    %185 = arith.addf %182, %184 : vector<8x128xf32>
    %cst_237 = arith.constant 0.000000e+00 : f32
    %186 = vector.broadcast %cst_237 : f32 to vector<8x128xf32>
    %187 = arith.maximumf %185, %186 : vector<8x128xf32>
    %188 = arith.truncf %187 : vector<8x128xf32> to vector<8x128xbf16>
    %c0_238 = arith.constant 0 : index
    %c0_239 = arith.constant 0 : index
    %189 = vector.load %arg17[%c0_238, %c0_239] : memref<128x128xbf16, #tpu.memory_space<vmem>>, vector<128x128xbf16>
    %cst_240 = arith.constant dense<0.000000e+00> : vector<8x128xf32>
    %190 = tpu.matmul %188, %189, %cst_240 {dimension_numbers = #tpu.dot_dimension_numbers<[1], [0], [0], [1], [0, 0, 1, 1], [], []>} : vector<8x128xbf16>, vector<128x128xbf16>, vector<8x128xf32> -> vector<8x128xf32>
    %191 = arith.truncf %190 : vector<8x128xf32> to vector<8x128xbf16>
    %c0_241 = arith.constant 0 : index
    %c0_242 = arith.constant 0 : index
    %192 = vector.load %arg24[%c0_241, %c0_242] : memref<8x128xbf16, #tpu.memory_space<vmem>>, vector<8x128xbf16>
    tpu.vector_store %arg24[%c0_241, %c0_242], %191 {strides = array<i32>} : memref<8x128xbf16, #tpu.memory_space<vmem>>, vector<8x128xbf16>,
    %c0_243 = arith.constant 0 : index
    %c0_244 = arith.constant 0 : index
    %193 = vector.load %arg24[%c0_243, %c0_244] : memref<8x128xbf16, #tpu.memory_space<vmem>>, vector<8x121xbf16>
    %c0_245 = arith.constant 0 : index
    %c7 = arith.constant 7 : index
    %194 = vector.load %arg21[%c0_245, %c7] : memref<72x384xbf16, #tpu.memory_space<vmem>>, vector<8x121xbf16>
    tpu.vector_store %arg21[%c0_245, %c7], %193 {strides = array<i32>} : memref<72x384xbf16, #tpu.memory_space<vmem>>, vector<8x121xbf16>,
    %c0_246 = arith.constant 0 : index
    %c0_247 = arith.constant 0 : index
    %195 = vector.load %arg24[%c0_246, %c0_247] : memref<8x128xbf16, #tpu.memory_space<vmem>>, vector<8x122xbf16>
    %c8_248 = arith.constant 8 : index
    %c6_249 = arith.constant 6 : index
    %196 = vector.load %arg21[%c8_248, %c6_249] : memref<72x384xbf16, #tpu.memory_space<vmem>>, vector<8x122xbf16>
    tpu.vector_store %arg21[%c8_248, %c6_249], %195 {strides = array<i32>} : memref<72x384xbf16, #tpu.memory_space<vmem>>, vector<8x122xbf16>,
    %c0_250 = arith.constant 0 : index
    %c0_251 = arith.constant 0 : index
    %197 = vector.load %arg24[%c0_250, %c0_251] : memref<8x128xbf16, #tpu.memory_space<vmem>>, vector<8x123xbf16>
    %c16_252 = arith.constant 16 : index
    %c5 = arith.constant 5 : index
    %198 = vector.load %arg21[%c16_252, %c5] : memref<72x384xbf16, #tpu.memory_space<vmem>>, vector<8x123xbf16>
    tpu.vector_store %arg21[%c16_252, %c5], %197 {strides = array<i32>} : memref<72x384xbf16, #tpu.memory_space<vmem>>, vector<8x123xbf16>,
    %c0_253 = arith.constant 0 : index
    %c0_254 = arith.constant 0 : index
    %199 = vector.load %arg24[%c0_253, %c0_254] : memref<8x128xbf16, #tpu.memory_space<vmem>>, vector<8x127xbf16>
    %c24_255 = arith.constant 24 : index
    %c1_256 = arith.constant 1 : index
    %200 = vector.load %arg21[%c24_255, %c1_256] : memref<72x384xbf16, #tpu.memory_space<vmem>>, vector<8x127xbf16>
    tpu.vector_store %arg21[%c24_255, %c1_256], %199 {strides = array<i32>} : memref<72x384xbf16, #tpu.memory_space<vmem>>, vector<8x127xbf16>,
    %c0_257 = arith.constant 0 : index
    %c0_258 = arith.constant 0 : index
    %201 = vector.load %arg24[%c0_257, %c0_258] : memref<8x128xbf16, #tpu.memory_space<vmem>>, vector<8x128xbf16>
    %c32_259 = arith.constant 32 : index
    %c0_260 = arith.constant 0 : index
    %202 = vector.load %arg21[%c32_259, %c0_260] : memref<72x384xbf16, #tpu.memory_space<vmem>>, vector<8x128xbf16>
    tpu.vector_store %arg21[%c32_259, %c0_260], %201 {strides = array<i32>} : memref<72x384xbf16, #tpu.memory_space<vmem>>, vector<8x128xbf16>,
    %c0_261 = arith.constant 0 : index
    %c1_262 = arith.constant 1 : index
    %203 = vector.load %arg24[%c0_261, %c1_262] : memref<8x128xbf16, #tpu.memory_space<vmem>>, vector<8x127xbf16>
    %c40_263 = arith.constant 40 : index
    %c0_264 = arith.constant 0 : index
    %204 = vector.load %arg21[%c40_263, %c0_264] : memref<72x384xbf16, #tpu.memory_space<vmem>>, vector<8x127xbf16>
    tpu.vector_store %arg21[%c40_263, %c0_264], %203 {strides = array<i32>} : memref<72x384xbf16, #tpu.memory_space<vmem>>, vector<8x127xbf16>,
    %c0_265 = arith.constant 0 : index
    %c5_266 = arith.constant 5 : index
    %205 = vector.load %arg24[%c0_265, %c5_266] : memref<8x128xbf16, #tpu.memory_space<vmem>>, vector<8x123xbf16>
    %c48_267 = arith.constant 48 : index
    %c0_268 = arith.constant 0 : index
    %206 = vector.load %arg21[%c48_267, %c0_268] : memref<72x384xbf16, #tpu.memory_space<vmem>>, vector<8x123xbf16>
    tpu.vector_store %arg21[%c48_267, %c0_268], %205 {strides = array<i32>} : memref<72x384xbf16, #tpu.memory_space<vmem>>, vector<8x123xbf16>,
    %c0_269 = arith.constant 0 : index
    %c6_270 = arith.constant 6 : index
    %207 = vector.load %arg24[%c0_269, %c6_270] : memref<8x128xbf16, #tpu.memory_space<vmem>>, vector<8x122xbf16>
    %c56_271 = arith.constant 56 : index
    %c0_272 = arith.constant 0 : index
    %208 = vector.load %arg21[%c56_271, %c0_272] : memref<72x384xbf16, #tpu.memory_space<vmem>>, vector<8x122xbf16>
    tpu.vector_store %arg21[%c56_271, %c0_272], %207 {strides = array<i32>} : memref<72x384xbf16, #tpu.memory_space<vmem>>, vector<8x122xbf16>,
    %c0_273 = arith.constant 0 : index
    %c7_274 = arith.constant 7 : index
    %209 = vector.load %arg24[%c0_273, %c7_274] : memref<8x128xbf16, #tpu.memory_space<vmem>>, vector<8x121xbf16>
    %c64_275 = arith.constant 64 : index
    %c0_276 = arith.constant 0 : index
    %210 = vector.load %arg21[%c64_275, %c0_276] : memref<72x384xbf16, #tpu.memory_space<vmem>>, vector<8x121xbf16>
    tpu.vector_store %arg21[%c64_275, %c0_276], %209 {strides = array<i32>} : memref<72x384xbf16, #tpu.memory_space<vmem>>, vector<8x121xbf16>,
    %c0_277 = arith.constant 0 : index
    %c0_278 = arith.constant 0 : index
    %211 = vector.load %arg21[%c0_277, %c0_278] : memref<72x384xbf16, #tpu.memory_space<vmem>>, vector<72x128xbf16>
    %c0_279 = arith.constant 0 : index
    %c0_280 = arith.constant 0 : index
    %212 = vector.load %arg12[%c0_279, %c0_280] : memref<8x72xbf16, #tpu.memory_space<vmem>>, vector<8x72xbf16>
    %cst_281 = arith.constant dense<0.000000e+00> : vector<8x128xf32>
    %213 = tpu.matmul %212, %211, %cst_281 {dimension_numbers = #tpu.dot_dimension_numbers<[1], [0], [0], [1], [0, 0, 1, 1], [], []>} : vector<8x72xbf16>, vector<72x128xbf16>, vector<8x128xf32> -> vector<8x128xf32>
    %c0_282 = arith.constant 0 : index
    %c0_283 = arith.constant 0 : index
    %214 = vector.load %arg13[%c0_282, %c0_283] : memref<8x1xf32, #tpu.memory_space<vmem>>, vector<8x1xf32>
    %215 = vector.broadcast %214 : vector<8x1xf32> to vector<8x128xf32>
    %216 = arith.addf %213, %215 : vector<8x128xf32>
    %c0_284 = arith.constant 0 : index
    %c0_285 = arith.constant 0 : index
    %c0_286 = arith.constant 0 : index
    %217 = vector.load %arg20[%c0_284, %c0_285, %c0_286] : memref<1x8x128xf32, #tpu.memory_space<vmem>>, vector<1x8x128xf32>
    %218 = vector.shape_cast %217 : vector<1x8x128xf32> to vector<8x128xf32>
    %219 = vector.shape_cast %216 : vector<8x128xf32> to vector<1x8x128xf32>
    tpu.vector_store %arg20[%c0_284, %c0_285, %c0_286], %219 {strides = array<i32>} : memref<1x8x128xf32, #tpu.memory_space<vmem>>, vector<1x8x128xf32>,
    return
  }
  func.func @transform_0(%arg0: i32) -> (i32, i32, i32) {
    %c0_i32 = arith.constant 0 : i32
    %c0_i32_0 = arith.constant 0 : i32
    %c0_i32_1 = arith.constant 0 : i32
    return %arg0, %c0_i32, %c0_i32_0 : i32, i32, i32
  }
  func.func @transform_1(%arg0: i32) -> (i32, i32) {
    %c0_i32 = arith.constant 0 : i32
    %c0_i32_0 = arith.constant 0 : i32
    %c0_i32_1 = arith.constant 0 : i32
    return %c0_i32, %c0_i32_0 : i32, i32
  }
  func.func @transform_2(%arg0: i32) -> (i32, i32) {
    %c0_i32 = arith.constant 0 : i32
    %c0_i32_0 = arith.constant 0 : i32
    %c0_i32_1 = arith.constant 0 : i32
    return %c0_i32, %c0_i32_0 : i32, i32
  }
  func.func @transform_3(%arg0: i32) -> (i32, i32) {
    %c0_i32 = arith.constant 0 : i32
    %c0_i32_0 = arith.constant 0 : i32
    %c0_i32_1 = arith.constant 0 : i32
    return %c0_i32, %c0_i32_0 : i32, i32
  }
  func.func @transform_4(%arg0: i32) -> (i32, i32) {
    %c0_i32 = arith.constant 0 : i32
    %c0_i32_0 = arith.constant 0 : i32
    %c0_i32_1 = arith.constant 0 : i32
    return %c0_i32, %c0_i32_0 : i32, i32
  }
  func.func @transform_5(%arg0: i32) -> (i32, i32) {
    %c0_i32 = arith.constant 0 : i32
    %c0_i32_0 = arith.constant 0 : i32
    %c0_i32_1 = arith.constant 0 : i32
    return %c0_i32, %c0_i32_0 : i32, i32
  }
  func.func @transform_6(%arg0: i32) -> (i32, i32) {
    %c0_i32 = arith.constant 0 : i32
    %c0_i32_0 = arith.constant 0 : i32
    %c0_i32_1 = arith.constant 0 : i32
    return %c0_i32, %c0_i32_0 : i32, i32
  }
  func.func @transform_7(%arg0: i32) -> (i32, i32) {
    %c0_i32 = arith.constant 0 : i32
    %c0_i32_0 = arith.constant 0 : i32
    %c0_i32_1 = arith.constant 0 : i32
    return %c0_i32, %c0_i32_0 : i32, i32
  }
  func.func @transform_8(%arg0: i32) -> (i32, i32) {
    %c0_i32 = arith.constant 0 : i32
    %c0_i32_0 = arith.constant 0 : i32
    %c0_i32_1 = arith.constant 0 : i32
    return %c0_i32, %c0_i32_0 : i32, i32
  }
  func.func @transform_9(%arg0: i32) -> (i32, i32) {
    %c0_i32 = arith.constant 0 : i32
    %c0_i32_0 = arith.constant 0 : i32
    %c0_i32_1 = arith.constant 0 : i32
    return %c0_i32, %c0_i32_0 : i32, i32
  }
  func.func @transform_10(%arg0: i32) -> (i32, i32) {
    %c0_i32 = arith.constant 0 : i32
    %c0_i32_0 = arith.constant 0 : i32
    %c0_i32_1 = arith.constant 0 : i32
    return %c0_i32, %c0_i32_0 : i32, i32
  }
  func.func @transform_11(%arg0: i32) -> (i32, i32) {
    %c0_i32 = arith.constant 0 : i32
    %c0_i32_0 = arith.constant 0 : i32
    %c0_i32_1 = arith.constant 0 : i32
    return %c0_i32, %c0_i32_0 : i32, i32
  }
  func.func @transform_12(%arg0: i32) -> (i32, i32) {
    %c0_i32 = arith.constant 0 : i32
    %c0_i32_0 = arith.constant 0 : i32
    %c0_i32_1 = arith.constant 0 : i32
    return %c0_i32, %c0_i32_0 : i32, i32
  }
  func.func @transform_13(%arg0: i32) -> (i32, i32) {
    %c0_i32 = arith.constant 0 : i32
    %c0_i32_0 = arith.constant 0 : i32
    %c0_i32_1 = arith.constant 0 : i32
    return %c0_i32, %c0_i32_0 : i32, i32
  }
  func.func @transform_14(%arg0: i32) -> (i32, i32) {
    %c0_i32 = arith.constant 0 : i32
    %c0_i32_0 = arith.constant 0 : i32
    %c0_i32_1 = arith.constant 0 : i32
    return %c0_i32, %c0_i32_0 : i32, i32
  }
  func.func @transform_15(%arg0: i32) -> (i32, i32) {
    %c0_i32 = arith.constant 0 : i32
    %c0_i32_0 = arith.constant 0 : i32
    %c0_i32_1 = arith.constant 0 : i32
    return %c0_i32, %c0_i32_0 : i32, i32
  }
  func.func @transform_16(%arg0: i32) -> (i32, i32) {
    %c0_i32 = arith.constant 0 : i32
    %c0_i32_0 = arith.constant 0 : i32
    %c0_i32_1 = arith.constant 0 : i32
    return %c0_i32, %c0_i32_0 : i32, i32
  }
  func.func @transform_17(%arg0: i32) -> (i32, i32, i32) {
    %c0_i32 = arith.constant 0 : i32
    %c0_i32_0 = arith.constant 0 : i32
    %c0_i32_1 = arith.constant 0 : i32
    return %arg0, %c0_i32, %c0_i32_0 : i32, i32, i32
  }
  func.func @transform_18(%arg0: i32) -> (i32, i32, i32) {
    %c0_i32 = arith.constant 0 : i32
    %c0_i32_0 = arith.constant 0 : i32
    %c0_i32_1 = arith.constant 0 : i32
    return %arg0, %c0_i32, %c0_i32_0 : i32, i32, i32
  }
  func.func @transform_19(%arg0: i32) -> (i32, i32, i32) {
    %c0_i32 = arith.constant 0 : i32
    %c0_i32_0 = arith.constant 0 : i32
    %c0_i32_1 = arith.constant 0 : i32
    return %arg0, %c0_i32, %c0_i32_0 : i32, i32, i32
  }
}

</mosaic_0001>

<llo_original>
// kernel: tpu_custom_call.1
$region0: #{tpu_custom_call.1}
  #allocation0 [shape = 'u32[]', space=smem, size = 0x4, offset = 0x4, fixed_abs, tag = 'smem constant byte address 0x4 - core index']
  #allocation1 [shape = 'u32[144,128]{1,0:T(1,128)}', space=vmem, size = 0x12000, scoped, tag = 'internal scratch']
  #allocation2 [shape = 'bf16[72,384]{1,0:T(8,128)(2,1)}', space=vmem, size = 0xd800, scoped, tag = 'scratch operand']
  #allocation3 [shape = 'bf16[8,384]{1,0:T(8,128)(2,1)}', space=vmem, size = 0x1800, scoped, tag = 'scratch operand']
  #allocation4 [shape = 'bf16[8,128]{1,0:T(8,128)(2,1)}', space=vmem, size = 0x800, scoped, tag = 'scratch operand']
  #allocation5 [shape = 'bf16[8,128]{1,0:T(8,128)(2,1)}', space=vmem, size = 0x800, scoped, tag = 'scratch operand']
  %s0 = inlined_call_operand.vmem [shape: f32[2,2,384], index: 0, kind: input, shape index: {}]
  %s1 = inlined_call_operand.vmem [shape: bf16[8,18], index: 1, kind: input, shape index: {}]
  %s2 = inlined_call_operand.vmem [shape: f32[8,1], index: 2, kind: input, shape index: {}]
  %s3 = inlined_call_operand.vmem [shape: bf16[8,72], index: 3, kind: input, shape index: {}]
  %s4 = inlined_call_operand.vmem [shape: f32[8,1], index: 4, kind: input, shape index: {}]
  %s5 = inlined_call_operand.vmem [shape: bf16[8,72], index: 5, kind: input, shape index: {}]
  %s6 = inlined_call_operand.vmem [shape: f32[8,1], index: 6, kind: input, shape index: {}]
  %s7 = inlined_call_operand.vmem [shape: bf16[8,72], index: 7, kind: input, shape index: {}]
  %s8 = inlined_call_operand.vmem [shape: f32[8,1], index: 8, kind: input, shape index: {}]
  %s9 = inlined_call_operand.vmem [shape: bf16[8,72], index: 9, kind: input, shape index: {}]
  %s10 = inlined_call_operand.vmem [shape: f32[8,1], index: 10, kind: input, shape index: {}]
  %s11 = inlined_call_operand.vmem [shape: bf16[8,72], index: 11, kind: input, shape index: {}]
  %s12 = inlined_call_operand.vmem [shape: f32[8,1], index: 12, kind: input, shape index: {}]
  %s13 = inlined_call_operand.vmem [shape: f32[1,384], index: 13, kind: input, shape index: {}]
  %s14 = inlined_call_operand.vmem [shape: f32[1,128], index: 14, kind: input, shape index: {}]
  %s15 = inlined_call_operand.hbm [shape: bf16[384,128], index: 15, kind: input, shape index: {}]
  %s16 = inlined_call_operand.vmem [shape: bf16[128,128], index: 16, kind: input, shape index: {}]
  %s17 = inlined_call_operand.hbm [shape: f32[2,8,384], index: 17, kind: output, shape index: {0}]
  %s18 = inlined_call_operand.hbm [shape: f32[2,8,128], index: 18, kind: output, shape index: {1}]
  %s19 = inlined_call_operand.hbm [shape: f32[2,8,128], index: 19, kind: output, shape index: {2}]
  %20 = xla_tuple %s17, %s18, %s19
  %s21 = sld [smem:[#allocation0]]
  $region121: #{tpu_custom_call.1} parent=0
    _
  %s23 = ssub.s32 1, %s21
  %s24 = scalar_select 0, %s23, %s21
  $region1: #{tpu_custom_call.1} parent=0
    #allocation6 [shape = 'u8[98304]{0}', space=vmem, size = 0x18000, scoped, tag = 'input window, operand 15, single buffered']
    #allocation7 [shape = 's32[2]{0}', space=sflag, size = 0x8, scoped, tag = 'scoped memory for tpu_custom_call.1']
    #allocation8 [shape = 's32[2]{0}', space=sflag, size = 0x8, scoped, tag = 'scoped memory for tpu_custom_call.1']
    #allocation9 [shape = 'u8[24576]{0}', space=vmem, size = 0x6000, scoped, tag = 'output window, operand 0']
    #allocation10 [shape = 'u8[8192]{0}', space=vmem, size = 0x2000, scoped, tag = 'output window, operand 1']
    #allocation11 [shape = 's32[2]{0}', space=sflag, size = 0x8, scoped, tag = 'scoped memory for tpu_custom_call.1']
    #allocation12 [shape = 'u8[8192]{0}', space=vmem, size = 0x2000, scoped, tag = 'output window, operand 2']
    %25 = vsyncpa [#allocation7], 0
    %26 = vsyncpa [#allocation8], 0
    %s27 = scalar_lea.sflag [#allocation8], 1
    %28 = vsyncpa %s27, 0
    %29 = vsyncpa [#allocation11], 0
    %s30 = scalar_lea.sflag [#allocation11], 1
    %31 = vsyncpa %s30, 0
    loop: start=0, step=1, limit=4
    $region2: #{tpu_custom_call.1} parent=1 // loop_pre_header
      _
    $region3: #{tpu_custom_call.1} parent=1 // loop_header
      %s33 = sphi 0, %s37
      %p34 = scmp.ge.s32.totalorder %s33, 4
      %s43 = sphi 0, %s45
      %s46 = sphi 0, %s43
      %s47 = sphi 0, %s46
      %s63 = sphi 0, %s47
      %s67 = sphi 0, %s67
      %s69 = sphi 0, %s67
      %s70 = sphi 0, %s69
      %s84 = sphi 0, %s70
      %s88 = sphi 0, %s88
      %s90 = sphi 0, %s88
      %s91 = sphi 0, %s90
      %s105 = sphi 0, %s91
      %s109 = sphi 0, %s109
      %s111 = sphi 0, %s109
      %s112 = sphi 0, %s111
      %s126 = sphi 0, %s112
      %s130 = sphi 0, %s130
      %s132 = sphi 0, %s130
      %s133 = sphi 0, %s132
      %s147 = sphi 0, %s133
      %s151 = sphi 0, %s151
      %s153 = sphi 0, %s151
      %s154 = sphi 0, %s153
      %s168 = sphi 0, %s154
      %s172 = sphi 0, %s172
      %s174 = sphi 0, %s172
      %s175 = sphi 0, %s174
      %s189 = sphi 0, %s175
      %s193 = sphi 0, %s193
      %s195 = sphi 0, %s193
      %s196 = sphi 0, %s195
      %s210 = sphi 0, %s196
      %s214 = sphi 0, %s214
      %s216 = sphi 0, %s214
      %s217 = sphi 0, %s216
      %s231 = sphi 0, %s217
      %s235 = sphi 0, %s235
      %s237 = sphi 0, %s235
      %s238 = sphi 0, %s237
      %s252 = sphi 0, %s238
      %s256 = sphi 0, %s256
      %s258 = sphi 0, %s256
      %s259 = sphi 0, %s258
      %s273 = sphi 0, %s259
      %s277 = sphi 0, %s277
      %s279 = sphi 0, %s277
      %s280 = sphi 0, %s279
      %s294 = sphi 0, %s280
      %s298 = sphi 0, %s298
      %s300 = sphi 0, %s298
      %s301 = sphi 0, %s300
      %s315 = sphi 0, %s301
      %s319 = sphi 0, %s319
      %s321 = sphi 0, %s319
      %s322 = sphi 0, %s321
      %s336 = sphi 0, %s322
      %s340 = sphi 0, %s340
      %s342 = sphi 0, %s340
      %s343 = sphi 0, %s342
      %s357 = sphi 0, %s343
      %s361 = sphi 0, %s361
      %s363 = sphi 0, %s361
      %s364 = sphi 0, %s363
      %s378 = sphi 0, %s364
      %s382 = sphi 0, %s382
      %s384 = sphi 0, %s382
      %s385 = sphi 0, %s384
      %s399 = sphi 0, %s385
      %s405 = sphi 0, %s407
      %s408 = sphi 0, %s405
      %s409 = sphi 0, %s408
      %s425 = sphi 0, %s409
      %s431 = sphi 0, %s433
      %s434 = sphi 0, %s431
      %s435 = sphi 0, %s434
      %s451 = sphi 0, %s435
      %s457 = sphi 0, %s459
      %s460 = sphi 0, %s457
      %s461 = sphi 0, %s460
      %s477 = sphi 0, %s461
    $region4: #{tpu_custom_call.1} parent=1 // loop_header_branch
      %36 = sbr.rel (%p34) target = $region8
    $region5: #{tpu_custom_call.1} parent=1 // loop_body
      %s38 = ssub.s32 %s33, 1
      %s39 = ssub.s32 %s33, 2
      %s40 = sadd.s32 %s33, 1
      %s41 = ssub.s32 %s33, %s40
      %p42 = scmp.eq.s32.totalorder %s41, 0
      %s44 = sadd.s32 %s43, 1
      %s45 = scalar_select %p42, %s43, %s44
      %p48 = pneg %p42
      %p49 = scmp.eq.s32.totalorder %s33, 1
      %p50 = por %p48, %p49
      %p51 = scmp.ne.s32.totalorder %s43, %s46
      %p52 = scmp.eq.s32.totalorder %s33, 0
      %p53 = por %p51, %p52
      %p54 = scmp.ne.s32.totalorder %s43, %s46
      %p55 = scmp.eq.s32.totalorder %s38, 1
      %p56 = por %p54, %p55
      %p57 = scmp.ne.s32.totalorder %s46, %s47
      %p58 = scmp.eq.s32.totalorder %s38, 0
      %p59 = por %p57, %p58
      %p60 = scmp.ne.s32.totalorder %s46, %s47
      %p61 = scmp.eq.s32.totalorder %s39, 1
      %p62 = por %p60, %p61
      %p64 = scmp.ne.s32.totalorder %s47, %s63
      %p65 = scmp.eq.s32.totalorder %s39, 0
      %p66 = por %p64, %p65
      %s68 = sadd.s32 %s67, 1
      %p71 = scmp.eq.s32.totalorder %s33, 1
      %p72 = scmp.ne.s32.totalorder %s67, %s69
      %p73 = scmp.eq.s32.totalorder %s33, 0
      %p74 = por %p72, %p73
      %p75 = scmp.ne.s32.totalorder %s67, %s69
      %p76 = scmp.eq.s32.totalorder %s38, 1
      %p77 = por %p75, %p76
      %p78 = scmp.ne.s32.totalorder %s69, %s70
      %p79 = scmp.eq.s32.totalorder %s38, 0
      %p80 = por %p78, %p79
      %p81 = scmp.ne.s32.totalorder %s69, %s70
      %p82 = scmp.eq.s32.totalorder %s39, 1
      %p83 = por %p81, %p82
      %p85 = scmp.ne.s32.totalorder %s70, %s84
      %p86 = scmp.eq.s32.totalorder %s39, 0
      %p87 = por %p85, %p86
      %s89 = sadd.s32 %s88, 1
      %p92 = scmp.eq.s32.totalorder %s33, 1
      %p93 = scmp.ne.s32.totalorder %s88, %s90
      %p94 = scmp.eq.s32.totalorder %s33, 0
      %p95 = por %p93, %p94
      %p96 = scmp.ne.s32.totalorder %s88, %s90
      %p97 = scmp.eq.s32.totalorder %s38, 1
      %p98 = por %p96, %p97
      %p99 = scmp.ne.s32.totalorder %s90, %s91
      %p100 = scmp.eq.s32.totalorder %s38, 0
      %p101 = por %p99, %p100
      %p102 = scmp.ne.s32.totalorder %s90, %s91
      %p103 = scmp.eq.s32.totalorder %s39, 1
      %p104 = por %p102, %p103
      %p106 = scmp.ne.s32.totalorder %s91, %s105
      %p107 = scmp.eq.s32.totalorder %s39, 0
      %p108 = por %p106, %p107
      %s110 = sadd.s32 %s109, 1
      %p113 = scmp.eq.s32.totalorder %s33, 1
      %p114 = scmp.ne.s32.totalorder %s109, %s111
      %p115 = scmp.eq.s32.totalorder %s33, 0
      %p116 = por %p114, %p115
      %p117 = scmp.ne.s32.totalorder %s109, %s111
      %p118 = scmp.eq.s32.totalorder %s38, 1
      %p119 = por %p117, %p118
      %p120 = scmp.ne.s32.totalorder %s111, %s112
      %p121 = scmp.eq.s32.totalorder %s38, 0
      %p122 = por %p120, %p121
      %p123 = scmp.ne.s32.totalorder %s111, %s112
      %p124 = scmp.eq.s32.totalorder %s39, 1
      %p125 = por %p123, %p124
      %p127 = scmp.ne.s32.totalorder %s112, %s126
      %p128 = scmp.eq.s32.totalorder %s39, 0
      %p129 = por %p127, %p128
      %s131 = sadd.s32 %s130, 1
      %p134 = scmp.eq.s32.totalorder %s33, 1
      %p135 = scmp.ne.s32.totalorder %s130, %s132
      %p136 = scmp.eq.s32.totalorder %s33, 0
      %p137 = por %p135, %p136
      %p138 = scmp.ne.s32.totalorder %s130, %s132
      %p139 = scmp.eq.s32.totalorder %s38, 1
      %p140 = por %p138, %p139
      %p141 = scmp.ne.s32.totalorder %s132, %s133
      %p142 = scmp.eq.s32.totalorder %s38, 0
      %p143 = por %p141, %p142
      %p144 = scmp.ne.s32.totalorder %s132, %s133
      %p145 = scmp.eq.s32.totalorder %s39, 1
      %p146 = por %p144, %p145
      %p148 = scmp.ne.s32.totalorder %s133, %s147
      %p149 = scmp.eq.s32.totalorder %s39, 0
      %p150 = por %p148, %p149
      %s152 = sadd.s32 %s151, 1
      %p155 = scmp.eq.s32.totalorder %s33, 1
      %p156 = scmp.ne.s32.totalorder %s151, %s153
      %p157 = scmp.eq.s32.totalorder %s33, 0
      %p158 = por %p156, %p157
      %p159 = scmp.ne.s32.totalorder %s151, %s153
      %p160 = scmp.eq.s32.totalorder %s38, 1
      %p161 = por %p159, %p160
      %p162 = scmp.ne.s32.totalorder %s153, %s154
      %p163 = scmp.eq.s32.totalorder %s38, 0
      %p164 = por %p162, %p163
      %p165 = scmp.ne.s32.totalorder %s153, %s154
      %p166 = scmp.eq.s32.totalorder %s39, 1
      %p167 = por %p165, %p166
      %p169 = scmp.ne.s32.totalorder %s154, %s168
      %p170 = scmp.eq.s32.totalorder %s39, 0
      %p171 = por %p169, %p170
      %s173 = sadd.s32 %s172, 1
      %p176 = scmp.eq.s32.totalorder %s33, 1
      %p177 = scmp.ne.s32.totalorder %s172, %s174
      %p178 = scmp.eq.s32.totalorder %s33, 0
      %p179 = por %p177, %p178
      %p180 = scmp.ne.s32.totalorder %s172, %s174
      %p181 = scmp.eq.s32.totalorder %s38, 1
      %p182 = por %p180, %p181
      %p183 = scmp.ne.s32.totalorder %s174, %s175
      %p184 = scmp.eq.s32.totalorder %s38, 0
      %p185 = por %p183, %p184
      %p186 = scmp.ne.s32.totalorder %s174, %s175
      %p187 = scmp.eq.s32.totalorder %s39, 1
      %p188 = por %p186, %p187
      %p190 = scmp.ne.s32.totalorder %s175, %s189
      %p191 = scmp.eq.s32.totalorder %s39, 0
      %p192 = por %p190, %p191
      %s194 = sadd.s32 %s193, 1
      %p197 = scmp.eq.s32.totalorder %s33, 1
      %p198 = scmp.ne.s32.totalorder %s193, %s195
      %p199 = scmp.eq.s32.totalorder %s33, 0
      %p200 = por %p198, %p199
      %p201 = scmp.ne.s32.totalorder %s193, %s195
      %p202 = scmp.eq.s32.totalorder %s38, 1
      %p203 = por %p201, %p202
      %p204 = scmp.ne.s32.totalorder %s195, %s196
      %p205 = scmp.eq.s32.totalorder %s38, 0
      %p206 = por %p204, %p205
      %p207 = scmp.ne.s32.totalorder %s195, %s196
      %p208 = scmp.eq.s32.totalorder %s39, 1
      %p209 = por %p207, %p208
      %p211 = scmp.ne.s32.totalorder %s196, %s210
      %p212 = scmp.eq.s32.totalorder %s39, 0
      %p213 = por %p211, %p212
      %s215 = sadd.s32 %s214, 1
      %p218 = scmp.eq.s32.totalorder %s33, 1
      %p219 = scmp.ne.s32.totalorder %s214, %s216
      %p220 = scmp.eq.s32.totalorder %s33, 0
      %p221 = por %p219, %p220
      %p222 = scmp.ne.s32.totalorder %s214, %s216
      %p223 = scmp.eq.s32.totalorder %s38, 1
      %p224 = por %p222, %p223
      %p225 = scmp.ne.s32.totalorder %s216, %s217
      %p226 = scmp.eq.s32.totalorder %s38, 0
      %p227 = por %p225, %p226
      %p228 = scmp.ne.s32.totalorder %s216, %s217
      %p229 = scmp.eq.s32.totalorder %s39, 1
      %p230 = por %p228, %p229
      %p232 = scmp.ne.s32.totalorder %s217, %s231
      %p233 = scmp.eq.s32.totalorder %s39, 0
      %p234 = por %p232, %p233
      %s236 = sadd.s32 %s235, 1
      %p239 = scmp.eq.s32.totalorder %s33, 1
      %p240 = scmp.ne.s32.totalorder %s235, %s237
      %p241 = scmp.eq.s32.totalorder %s33, 0
      %p242 = por %p240, %p241
      %p243 = scmp.ne.s32.totalorder %s235, %s237
      %p244 = scmp.eq.s32.totalorder %s38, 1
      %p245 = por %p243, %p244
      %p246 = scmp.ne.s32.totalorder %s237, %s238
      %p247 = scmp.eq.s32.totalorder %s38, 0
      %p248 = por %p246, %p247
      %p249 = scmp.ne.s32.totalorder %s237, %s238
      %p250 = scmp.eq.s32.totalorder %s39, 1
      %p251 = por %p249, %p250
      %p253 = scmp.ne.s32.totalorder %s238, %s252
      %p254 = scmp.eq.s32.totalorder %s39, 0
      %p255 = por %p253, %p254
      %s257 = sadd.s32 %s256, 1
      %p260 = scmp.eq.s32.totalorder %s33, 1
      %p261 = scmp.ne.s32.totalorder %s256, %s258
      %p262 = scmp.eq.s32.totalorder %s33, 0
      %p263 = por %p261, %p262
      %p264 = scmp.ne.s32.totalorder %s256, %s258
      %p265 = scmp.eq.s32.totalorder %s38, 1
      %p266 = por %p264, %p265
      %p267 = scmp.ne.s32.totalorder %s258, %s259
      %p268 = scmp.eq.s32.totalorder %s38, 0
      %p269 = por %p267, %p268
      %p270 = scmp.ne.s32.totalorder %s258, %s259
      %p271 = scmp.eq.s32.totalorder %s39, 1
      %p272 = por %p270, %p271
      %p274 = scmp.ne.s32.totalorder %s259, %s273
      %p275 = scmp.eq.s32.totalorder %s39, 0
      %p276 = por %p274, %p275
      %s278 = sadd.s32 %s277, 1
      %p281 = scmp.eq.s32.totalorder %s33, 1
      %p282 = scmp.ne.s32.totalorder %s277, %s279
      %p283 = scmp.eq.s32.totalorder %s33, 0
      %p284 = por %p282, %p283
      %p285 = scmp.ne.s32.totalorder %s277, %s279
      %p286 = scmp.eq.s32.totalorder %s38, 1
      %p287 = por %p285, %p286
      %p288 = scmp.ne.s32.totalorder %s279, %s280
      %p289 = scmp.eq.s32.totalorder %s38, 0
      %p290 = por %p288, %p289
      %p291 = scmp.ne.s32.totalorder %s279, %s280
      %p292 = scmp.eq.s32.totalorder %s39, 1
      %p293 = por %p291, %p292
      %p295 = scmp.ne.s32.totalorder %s280, %s294
      %p296 = scmp.eq.s32.totalorder %s39, 0
      %p297 = por %p295, %p296
      %s299 = sadd.s32 %s298, 1
      %p302 = scmp.eq.s32.totalorder %s33, 1
      %p303 = scmp.ne.s32.totalorder %s298, %s300
      %p304 = scmp.eq.s32.totalorder %s33, 0
      %p305 = por %p303, %p304
      %p306 = scmp.ne.s32.totalorder %s298, %s300
      %p307 = scmp.eq.s32.totalorder %s38, 1
      %p308 = por %p306, %p307
      %p309 = scmp.ne.s32.totalorder %s300, %s301
      %p310 = scmp.eq.s32.totalorder %s38, 0
      %p311 = por %p309, %p310
      %p312 = scmp.ne.s32.totalorder %s300, %s301
      %p313 = scmp.eq.s32.totalorder %s39, 1
      %p314 = por %p312, %p313
      %p316 = scmp.ne.s32.totalorder %s301, %s315
      %p317 = scmp.eq.s32.totalorder %s39, 0
      %p318 = por %p316, %p317
      %s320 = sadd.s32 %s319, 1
      %p323 = scmp.eq.s32.totalorder %s33, 1
      %p324 = scmp.ne.s32.totalorder %s319, %s321
      %p325 = scmp.eq.s32.totalorder %s33, 0
      %p326 = por %p324, %p325
      %p327 = scmp.ne.s32.totalorder %s319, %s321
      %p328 = scmp.eq.s32.totalorder %s38, 1
      %p329 = por %p327, %p328
      %p330 = scmp.ne.s32.totalorder %s321, %s322
      %p331 = scmp.eq.s32.totalorder %s38, 0
      %p332 = por %p330, %p331
      %p333 = scmp.ne.s32.totalorder %s321, %s322
      %p334 = scmp.eq.s32.totalorder %s39, 1
      %p335 = por %p333, %p334
      %p337 = scmp.ne.s32.totalorder %s322, %s336
      %p338 = scmp.eq.s32.totalorder %s39, 0
      %p339 = por %p337, %p338
      %s341 = sadd.s32 %s340, 1
      %p344 = scmp.eq.s32.totalorder %s33, 1
      %p345 = scmp.ne.s32.totalorder %s340, %s342
      %p346 = scmp.eq.s32.totalorder %s33, 0
      %p347 = por %p345, %p346
      %p348 = scmp.ne.s32.totalorder %s340, %s342
      %p349 = scmp.eq.s32.totalorder %s38, 1
      %p350 = por %p348, %p349
      %p351 = scmp.ne.s32.totalorder %s342, %s343
      %p352 = scmp.eq.s32.totalorder %s38, 0
      %p353 = por %p351, %p352
      %p354 = scmp.ne.s32.totalorder %s342, %s343
      %p355 = scmp.eq.s32.totalorder %s39, 1
      %p356 = por %p354, %p355
      %p358 = scmp.ne.s32.totalorder %s343, %s357
      %p359 = scmp.eq.s32.totalorder %s39, 0
      %p360 = por %p358, %p359
      %s362 = sadd.s32 %s361, 1
      %p365 = scmp.eq.s32.totalorder %s33, 1
      %p366 = scmp.ne.s32.totalorder %s361, %s363
      %p367 = scmp.eq.s32.totalorder %s33, 0
      %p368 = por %p366, %p367
      %p369 = scmp.ne.s32.totalorder %s361, %s363
      %p370 = scmp.eq.s32.totalorder %s38, 1
      %p371 = por %p369, %p370
      %p372 = scmp.ne.s32.totalorder %s363, %s364
      %p373 = scmp.eq.s32.totalorder %s38, 0
      %p374 = por %p372, %p373
      %p375 = scmp.ne.s32.totalorder %s363, %s364
      %p376 = scmp.eq.s32.totalorder %s39, 1
      %p377 = por %p375, %p376
      %p379 = scmp.ne.s32.totalorder %s364, %s378
      %p380 = scmp.eq.s32.totalorder %s39, 0
      %p381 = por %p379, %p380
      %s383 = sadd.s32 %s382, 1
      %p386 = scmp.eq.s32.totalorder %s33, 1
      %p387 = scmp.ne.s32.totalorder %s382, %s384
      %p388 = scmp.eq.s32.totalorder %s33, 0
      %p389 = por %p387, %p388
      %p390 = scmp.ne.s32.totalorder %s382, %s384
      %p391 = scmp.eq.s32.totalorder %s38, 1
      %p392 = por %p390, %p391
      %p393 = scmp.ne.s32.totalorder %s384, %s385
      %p394 = scmp.eq.s32.totalorder %s38, 0
      %p395 = por %p393, %p394
      %p396 = scmp.ne.s32.totalorder %s384, %s385
      %p397 = scmp.eq.s32.totalorder %s39, 1
      %p398 = por %p396, %p397
      %p400 = scmp.ne.s32.totalorder %s385, %s399
      %p401 = scmp.eq.s32.totalorder %s39, 0
      %p402 = por %p400, %p401
      %s403 = ssub.s32 %s33, %s40
      %p404 = scmp.eq.s32.totalorder %s403, 0
      %s406 = sadd.s32 %s405, 1
      %s407 = scalar_select %p404, %s405, %s406
      %p410 = pneg %p404
      %p411 = scmp.eq.s32.totalorder %s33, 1
      %p412 = por %p410, %p411
      %p413 = scmp.ne.s32.totalorder %s405, %s408
      %p414 = scmp.eq.s32.totalorder %s33, 0
      %p415 = por %p413, %p414
      %p416 = scmp.ne.s32.totalorder %s405, %s408
      %p417 = scmp.eq.s32.totalorder %s38, 1
      %p418 = por %p416, %p417
      %p419 = scmp.ne.s32.totalorder %s408, %s409
      %p420 = scmp.eq.s32.totalorder %s38, 0
      %p421 = por %p419, %p420
      %p422 = scmp.ne.s32.totalorder %s408, %s409
      %p423 = scmp.eq.s32.totalorder %s39, 1
      %p424 = por %p422, %p423
      %p426 = scmp.ne.s32.totalorder %s409, %s425
      %p427 = scmp.eq.s32.totalorder %s39, 0
      %p428 = por %p426, %p427
      %s429 = ssub.s32 %s33, %s40
      %p430 = scmp.eq.s32.totalorder %s429, 0
      %s432 = sadd.s32 %s431, 1
      %s433 = scalar_select %p430, %s431, %s432
      %p436 = pneg %p430
      %p437 = scmp.eq.s32.totalorder %s33, 1
      %p438 = por %p436, %p437
      %p439 = scmp.ne.s32.totalorder %s431, %s434
      %p440 = scmp.eq.s32.totalorder %s33, 0
      %p441 = por %p439, %p440
      %p442 = scmp.ne.s32.totalorder %s431, %s434
      %p443 = scmp.eq.s32.totalorder %s38, 1
      %p444 = por %p442, %p443
      %p445 = scmp.ne.s32.totalorder %s434, %s435
      %p446 = scmp.eq.s32.totalorder %s38, 0
      %p447 = por %p445, %p446
      %p448 = scmp.ne.s32.totalorder %s434, %s435
      %p449 = scmp.eq.s32.totalorder %s39, 1
      %p450 = por %p448, %p449
      %p452 = scmp.ne.s32.totalorder %s435, %s451
      %p453 = scmp.eq.s32.totalorder %s39, 0
      %p454 = por %p452, %p453
      %s455 = ssub.s32 %s33, %s40
      %p456 = scmp.eq.s32.totalorder %s455, 0
      %s458 = sadd.s32 %s457, 1
      %s459 = scalar_select %p456, %s457, %s458
      %p462 = pneg %p456
      %p463 = scmp.eq.s32.totalorder %s33, 1
      %p464 = por %p462, %p463
      %p465 = scmp.ne.s32.totalorder %s457, %s460
      %p466 = scmp.eq.s32.totalorder %s33, 0
      %p467 = por %p465, %p466
      %p468 = scmp.ne.s32.totalorder %s457, %s460
      %p469 = scmp.eq.s32.totalorder %s38, 1
      %p470 = por %p468, %p469
      %p471 = scmp.ne.s32.totalorder %s460, %s461
      %p472 = scmp.eq.s32.totalorder %s38, 0
      %p473 = por %p471, %p472
      %p474 = scmp.ne.s32.totalorder %s460, %s461
      %p475 = scmp.eq.s32.totalorder %s39, 1
      %p476 = por %p474, %p475
      %p478 = scmp.ne.s32.totalorder %s461, %s477
      %p479 = scmp.eq.s32.totalorder %s39, 0
      %p480 = por %p478, %p479
      %p481 = scmp.le.s32.totalorder 1, %s33
      %p482 = scmp.lt.s32.totalorder %s33, 3
      %p483 = pnand %p481, %p482
      %p484 = pneg %p483
      // Predicated region
      $region9: #{tpu_custom_call.1} parent=5 // pred_check
        _
      $region10: #{tpu_custom_call.1} parent=5 // pred_check_branch
        %486 = sbr.rel (%p483) target = $region12
      $region11: #{tpu_custom_call.1} parent=5 // pred_region
        %s487 = ssub.s32 %s33, 1
        // Predicated region
        $region13: #{tpu_custom_call.1} parent=11 // pred_check
          %p488 = pneg %p80
        $region14: #{tpu_custom_call.1} parent=11 // pred_check_branch
          %490 = sbr.rel (%p488) target = $region16
        $region15: #{tpu_custom_call.1} parent=11 // pred_region
          _
        $region16: #{tpu_custom_call.1} parent=11 // pred_fallthru
          _
        // Predicated region
        $region17: #{tpu_custom_call.1} parent=11 // pred_check
          %p491 = pneg %p101
        $region18: #{tpu_custom_call.1} parent=11 // pred_check_branch
          %493 = sbr.rel (%p491) target = $region20
        $region19: #{tpu_custom_call.1} parent=11 // pred_region
          _
        $region20: #{tpu_custom_call.1} parent=11 // pred_fallthru
          _
        // Predicated region
        $region21: #{tpu_custom_call.1} parent=11 // pred_check
          %p494 = pneg %p122
        $region22: #{tpu_custom_call.1} parent=11 // pred_check_branch
          %496 = sbr.rel (%p494) target = $region24
        $region23: #{tpu_custom_call.1} parent=11 // pred_region
          _
        $region24: #{tpu_custom_call.1} parent=11 // pred_fallthru
          _
        // Predicated region
        $region25: #{tpu_custom_call.1} parent=11 // pred_check
          %p497 = pneg %p143
        $region26: #{tpu_custom_call.1} parent=11 // pred_check_branch
          %499 = sbr.rel (%p497) target = $region28
        $region27: #{tpu_custom_call.1} parent=11 // pred_region
          _
        $region28: #{tpu_custom_call.1} parent=11 // pred_fallthru
          _
        // Predicated region
        $region29: #{tpu_custom_call.1} parent=11 // pred_check
          %p500 = pneg %p164
        $region30: #{tpu_custom_call.1} parent=11 // pred_check_branch
          %502 = sbr.rel (%p500) target = $region32
        $region31: #{tpu_custom_call.1} parent=11 // pred_region
          _
        $region32: #{tpu_custom_call.1} parent=11 // pred_fallthru
          _
        // Predicated region
        $region33: #{tpu_custom_call.1} parent=11 // pred_check
          %p503 = pneg %p185
        $region34: #{tpu_custom_call.1} parent=11 // pred_check_branch
          %505 = sbr.rel (%p503) target = $region36
        $region35: #{tpu_custom_call.1} parent=11 // pred_region
          _
        $region36: #{tpu_custom_call.1} parent=11 // pred_fallthru
          _
        // Predicated region
        $region37: #{tpu_custom_call.1} parent=11 // pred_check
          %p506 = pneg %p206
        $region38: #{tpu_custom_call.1} parent=11 // pred_check_branch
          %508 = sbr.rel (%p506) target = $region40
        $region39: #{tpu_custom_call.1} parent=11 // pred_region
          _
        $region40: #{tpu_custom_call.1} parent=11 // pred_fallthru
          _
        // Predicated region
        $region41: #{tpu_custom_call.1} parent=11 // pred_check
          %p509 = pneg %p227
        $region42: #{tpu_custom_call.1} parent=11 // pred_check_branch
          %511 = sbr.rel (%p509) target = $region44
        $region43: #{tpu_custom_call.1} parent=11 // pred_region
          _
        $region44: #{tpu_custom_call.1} parent=11 // pred_fallthru
          _
        // Predicated region
        $region45: #{tpu_custom_call.1} parent=11 // pred_check
          %p512 = pneg %p248
        $region46: #{tpu_custom_call.1} parent=11 // pred_check_branch
          %514 = sbr.rel (%p512) target = $region48
        $region47: #{tpu_custom_call.1} parent=11 // pred_region
          _
        $region48: #{tpu_custom_call.1} parent=11 // pred_fallthru
          _
        // Predicated region
        $region49: #{tpu_custom_call.1} parent=11 // pred_check
          %p515 = pneg %p269
        $region50: #{tpu_custom_call.1} parent=11 // pred_check_branch
          %517 = sbr.rel (%p515) target = $region52
        $region51: #{tpu_custom_call.1} parent=11 // pred_region
          _
        $region52: #{tpu_custom_call.1} parent=11 // pred_fallthru
          _
        // Predicated region
        $region53: #{tpu_custom_call.1} parent=11 // pred_check
          %p518 = pneg %p290
        $region54: #{tpu_custom_call.1} parent=11 // pred_check_branch
          %520 = sbr.rel (%p518) target = $region56
        $region55: #{tpu_custom_call.1} parent=11 // pred_region
          _
        $region56: #{tpu_custom_call.1} parent=11 // pred_fallthru
          _
        // Predicated region
        $region57: #{tpu_custom_call.1} parent=11 // pred_check
          %p521 = pneg %p311
        $region58: #{tpu_custom_call.1} parent=11 // pred_check_branch
          %523 = sbr.rel (%p521) target = $region60
        $region59: #{tpu_custom_call.1} parent=11 // pred_region
          _
        $region60: #{tpu_custom_call.1} parent=11 // pred_fallthru
          _
        // Predicated region
        $region61: #{tpu_custom_call.1} parent=11 // pred_check
          %p524 = pneg %p332
        $region62: #{tpu_custom_call.1} parent=11 // pred_check_branch
          %526 = sbr.rel (%p524) target = $region64
        $region63: #{tpu_custom_call.1} parent=11 // pred_region
          _
        $region64: #{tpu_custom_call.1} parent=11 // pred_fallthru
          _
        // Predicated region
        $region65: #{tpu_custom_call.1} parent=11 // pred_check
          %p527 = pneg %p353
        $region66: #{tpu_custom_call.1} parent=11 // pred_check_branch
          %529 = sbr.rel (%p527) target = $region68
        $region67: #{tpu_custom_call.1} parent=11 // pred_region
          _
        $region68: #{tpu_custom_call.1} parent=11 // pred_fallthru
          _
        // Predicated region
        $region69: #{tpu_custom_call.1} parent=11 // pred_check
          %p530 = pneg %p374
        $region70: #{tpu_custom_call.1} parent=11 // pred_check_branch
          %532 = sbr.rel (%p530) target = $region72
        $region71: #{tpu_custom_call.1} parent=11 // pred_region
          %s534 = ssub.s32 3072, 3072
          %535 = vsyncadd [#allocation7], %s534
          %s536 = sshll.u32 [#allocation6], 4
          %s537 = int_to_ptr.vmem [resolvable:$true] %s536
          %542 = dma.hbm_to_vmem [thread:$0]  %s15, 3072, %s537, [#allocation7], 64, 64, 4
        $region72: #{tpu_custom_call.1} parent=11 // pred_fallthru
          _
        // Predicated region
        $region73: #{tpu_custom_call.1} parent=11 // pred_check
          %p543 = pneg %p395
        $region74: #{tpu_custom_call.1} parent=11 // pred_check_branch
          %545 = sbr.rel (%p543) target = $region76
        $region75: #{tpu_custom_call.1} parent=11 // pred_region
          _
        $region76: #{tpu_custom_call.1} parent=11 // pred_fallthru
          _
      $region12: #{tpu_custom_call.1} parent=5 // pred_fallthru
        _
      %p546 = scmp.lt.s32.totalorder %s33, 2
      // Predicated region
      $region77: #{tpu_custom_call.1} parent=5 // pred_check
        %p547 = pneg %p546
      $region78: #{tpu_custom_call.1} parent=5 // pred_check_branch
        %549 = sbr.rel (%p547) target = $region80
      $region79: #{tpu_custom_call.1} parent=5 // pred_region
        // Predicated region
        $region81: #{tpu_custom_call.1} parent=79 // pred_check
          %p550 = pneg %p53
        $region82: #{tpu_custom_call.1} parent=79 // pred_check_branch
          %552 = sbr.rel (%p550) target = $region84
        $region83: #{tpu_custom_call.1} parent=79 // pred_region
          %p553 = scmp.lt.s32.totalorder %s33, 1
          %s554 = scalar_select %p553, %s33, 1
          %s555 = smul.addr %s554, 3
          %s556 = smul.addr %s555, 2
          %s557 = scalar_lea.vmem %s0, %s556
        $region84: #{tpu_custom_call.1} parent=79 // pred_fallthru
          _
      $region80: #{tpu_custom_call.1} parent=5 // pred_fallthru
        _
      %p558 = scmp.le.s32.totalorder 1, %s33
      %p559 = scmp.lt.s32.totalorder %s33, 3
      %p560 = pnand %p558, %p559
      %p561 = pneg %p560
      // Predicated region
      $region85: #{tpu_custom_call.1} parent=5 // pred_check
        _
      $region86: #{tpu_custom_call.1} parent=5 // pred_check_branch
        %563 = sbr.rel (%p560) target = $region88
      $region87: #{tpu_custom_call.1} parent=5 // pred_region
        %s564 = ssub.s32 %s33, 1
        // Predicated region
        $region89: #{tpu_custom_call.1} parent=87 // pred_check
          %p565 = pneg %p374
        $region90: #{tpu_custom_call.1} parent=87 // pred_check_branch
          %567 = sbr.rel (%p565) target = $region92
        $region91: #{tpu_custom_call.1} parent=87 // pred_region
          %568 = dma.done [#allocation7], 3072
        $region92: #{tpu_custom_call.1} parent=87 // pred_fallthru
          _
        %p569 = scmp.lt.s32.totalorder %s38, 1
        %s570 = scalar_select %p569, %s38, 1
        %s571 = smul.addr %s570, 3
        %s572 = smul.addr %s571, 2
        %s573 = scalar_lea.vmem %s0, %s572
        %p574 = pneg %p59
        %p575 = pneg %p56
        %p576 = pneg %p80
        %p577 = pneg %p77
        %p578 = pneg %p101
        %p579 = pneg %p98
        %p580 = pneg %p122
        %p581 = pneg %p119
        %p582 = pneg %p143
        %p583 = pneg %p140
        %p584 = pneg %p164
        %p585 = pneg %p161
        %p586 = pneg %p185
        %p587 = pneg %p182
        %p588 = pneg %p206
        %p589 = pneg %p203
        %p590 = pneg %p227
        %p591 = pneg %p224
        %p592 = pneg %p248
        %p593 = pneg %p245
        %p594 = pneg %p269
        %p595 = pneg %p266
        %p596 = pneg %p290
        %p597 = pneg %p287
        %p598 = pneg %p311
        %p599 = pneg %p308
        %p600 = pneg %p332
        %p601 = pneg %p329
        %p602 = pneg %p353
        %p603 = pneg %p350
        %p604 = pneg %p374
        %p605 = pneg %p371
        %p606 = pneg %p395
        %p607 = pneg %p392
        %p608 = pneg %p421
        %p609 = pneg %p418
        %s610 = sand.u32 %s408, 1
        %s611 = scalar_lea.sflag [#allocation8], %s610
        %s612 = sand.u32 %s408, 1
        %s613 = smul.addr %s612, 24
        %s614 = scalar_lea.vmem [#allocation9], %s613
        %p615 = pneg %p447
        %p616 = pneg %p444
        %s617 = sand.u32 %s38, 1
        %s618 = scalar_lea.sflag [#allocation11], %s617
        %s619 = sand.u32 %s434, 1
        %s620 = smul.addr %s619, 8
        %s621 = scalar_lea.vmem [#allocation10], %s620
        %p622 = pneg %p473
        %p623 = pneg %p470
        %s624 = sand.u32 %s38, 1
        %s625 = scalar_lea.sflag [#allocation11], %s624
        %s626 = sand.u32 %s460, 1
        %s627 = smul.addr %s626, 8
        %s628 = scalar_lea.vmem [#allocation12], %s627
        %p629 = scmp.lt.s32.totalorder %s38, 1
        %s630 = scalar_select %p629, %s38, 1
        %s631 = smul.addr %s630, 3
        %s632 = smul.addr %s631, 2
        %s633 = scalar_lea.vmem %s0, %s632
        %vm635 = vcmask 150528
        %636 = vst.msk [vmem:[#allocation2] sm:$0xf] %vm635, 0
        %637 = vst.msk [vmem:[#allocation2 + $0xc] sm:$0xf] %vm635, 0
        %638 = vst.msk [vmem:[#allocation2 + $0x18] sm:$0xf] %vm635, 0
        %639 = vst.msk [vmem:[#allocation2 + $0x24] sm:$0xf] %vm635, 0
        %640 = vst.msk [vmem:[#allocation2 + $0x30] sm:$0xf] %vm635, 0
        %641 = vst.msk [vmem:[#allocation2 + $0x3c] sm:$0xf] %vm635, 0
        %642 = vst.msk [vmem:[#allocation2 + $0x48] sm:$0xf] %vm635, 0
        %643 = vst.msk [vmem:[#allocation2 + $0x54] sm:$0xf] %vm635, 0
        %644 = vst.msk [vmem:[#allocation2 + $0x60] sm:$0xf] %vm635, 0
        %vm645 = vcmask 1044328
        %646 = vst.msk [vmem:[#allocation2 + $0x8] sm:$0xf] %vm645, 0
        %647 = vst.msk [vmem:[#allocation2 + $0x14] sm:$0xf] %vm645, 0
        %648 = vst.msk [vmem:[#allocation2 + $0x20] sm:$0xf] %vm645, 0
        %649 = vst.msk [vmem:[#allocation2 + $0x2c] sm:$0xf] %vm645, 0
        %650 = vst.msk [vmem:[#allocation2 + $0x38] sm:$0xf] %vm645, 0
        %651 = vst.msk [vmem:[#allocation2 + $0x44] sm:$0xf] %vm645, 0
        %652 = vst.msk [vmem:[#allocation2 + $0x50] sm:$0xf] %vm645, 0
        %653 = vst.msk [vmem:[#allocation2 + $0x5c] sm:$0xf] %vm645, 0
        %654 = vst.msk [vmem:[#allocation2 + $0x68] sm:$0xf] %vm645, 0
        %v655 = vld [vmem:[%s13] sm:$0x7]
        %v656 = vld [vmem:[%s14] sm:$0x1]
        %v657 = vld [vmem:[%s633] sm:$0x3f]
        %v659 = vcombine.high %v657, %v657
        %v661 = vunpack.c.l.s4 1983009808
        %v662 = vunpack.c.0.s8 %v661
        %v663 = vlaneseq
        %v664 = vshrl.u32 %v663, 7
        %v665 = vsub.s32 %v662, %v664
        %v666 = vrot.slane %v657, %v665
        %v668 = vunpack.c.l.s4 1983009808
        %v669 = vunpack.c.0.s8 %v668
        %v670 = vlaneseq
        %v671 = vshrl.u32 %v670, 7
        %v672 = vsub.s32 %v669, %v671
        %v673 = vrot.slane %v659, %v672
        %v674 = vcombine.high %v666, %v666
        %v678 = vpack.c.bf16 %v666, %v666
        %v679 = vpack.c.bf16 %v674, %v674
        %v680 = vpack.c.bf16 %v673, %v673
        %v684 = vunpack.c.l.b16 %v678
        %v685 = vunpack.c.l.b16 %v679
        %v686 = vunpack.c.l.b16 %v680
        %v687 = vpack.c.b16 %v685, %v684
        %v688 = vpack.c.b16 %v686, %v686
        %689 = vrot.lane.b32.xlu0 %v687, 19
        %v690 = vpop.permute.xlu0 %689
        %691 = vrot.lane.b32.xlu0 %v688, 19
        %v692 = vpop.permute.xlu0 %691
        %v693 = vrot.slane %v690, 4
        %vm694 = vcmask 154624
        %v695 = vsel %vm694, %v693, %v690
        %v696 = vsel %vm694, %v693, %v692
        %vm699 = vcmask 1040536
        %vm700 = vcmask 1044484
        %vm701 = vmor %vm700, %vm699
        %702 = vst.msk [vmem:[#allocation2] sm:$0x11] %vm701, %v695
        %703 = vst [vmem:[#allocation2 + $0x8] sm:$0x1] %v696
        %v704 = vld [vmem:[%s633] sm:$0x3f]
        %v706 = vcombine.high %v704, %v704
        %v708 = vunpack.c.l.s4 1983009808
        %v709 = vunpack.c.0.s8 %v708
        %v710 = vlaneseq
        %v711 = vshrl.u32 %v710, 7
        %v712 = vsub.s32 %v709, %v711
        %v713 = vrot.slane %v704, %v712
        %v715 = vunpack.c.l.s4 1983009808
        %v716 = vunpack.c.0.s8 %v715
        %v717 = vlaneseq
        %v718 = vshrl.u32 %v717, 7
        %v719 = vsub.s32 %v716, %v718
        %v720 = vrot.slane %v706, %v719
        %v721 = vcombine.high %v713, %v713
        %v725 = vpack.c.bf16 %v713, %v713
        %v726 = vpack.c.bf16 %v721, %v721
        %v727 = vpack.c.bf16 %v720, %v720
        %v731 = vunpack.c.l.b16 %v725
        %v732 = vunpack.c.l.b16 %v726
        %v733 = vunpack.c.l.b16 %v727
        %v734 = vpack.c.b16 %v732, %v731
        %v735 = vpack.c.b16 %v733, %v733
        %v736 = vrot.slane %v734, 7
        %v737 = vrot.slane %v735, 7
        %738 = vrot.lane.b32.xlu0 %v736, 18
        %v739 = vpop.permute.xlu0 %738
        %740 = vrot.lane.b32.xlu0 %v737, 18
        %v741 = vpop.permute.xlu0 %740
        %v742 = vrot.slane %v739, 4
        %vm743 = vcmask 146432
        %v744 = vsel %vm743, %v742, %v739
        %v745 = vsel %vm743, %v742, %v741
        %vm748 = vcmask 1041553
        %vm749 = vcmask 1045509
        %vm750 = vmor %vm749, %vm748
        %751 = vst.msk [vmem:[#allocation2] sm:$0x22] %vm750, %v744
        %752 = vst [vmem:[#allocation2 + $0x8] sm:$0x2] %v745
        %v753 = vld [vmem:[%s633] sm:$0x3f]
        %v755 = vcombine.high %v753, %v753
        %v757 = vunpack.c.l.s4 1983009808
        %v758 = vunpack.c.0.s8 %v757
        %v759 = vlaneseq
        %v760 = vshrl.u32 %v759, 7
        %v761 = vsub.s32 %v758, %v760
        %v762 = vrot.slane %v753, %v761
        %v764 = vunpack.c.l.s4 1983009808
        %v765 = vunpack.c.0.s8 %v764
        %v766 = vlaneseq
        %v767 = vshrl.u32 %v766, 7
        %v768 = vsub.s32 %v765, %v767
        %v769 = vrot.slane %v755, %v768
        %v770 = vcombine.high %v762, %v762
        %v774 = vpack.c.bf16 %v762, %v762
        %v775 = vpack.c.bf16 %v770, %v770
        %v776 = vpack.c.bf16 %v769, %v769
        %v780 = vunpack.c.l.b16 %v774
        %v781 = vunpack.c.l.b16 %v775
        %v782 = vunpack.c.l.b16 %v776
        %v783 = vpack.c.b16 %v781, %v780
        %v784 = vpack.c.b16 %v782, %v782
        %v785 = vrot.slane %v783, 6
        %v786 = vrot.slane %v784, 6
        %787 = vrot.lane.b32.xlu0 %v785, 17
        %v788 = vpop.permute.xlu0 %787
        %789 = vrot.lane.b32.xlu0 %v786, 17
        %v790 = vpop.permute.xlu0 %789
        %v791 = vrot.slane %v788, 4
        %vm792 = vcmask 138240
        %v793 = vsel %vm792, %v791, %v788
        %v794 = vsel %vm792, %v791, %v790
        %vm797 = vcmask 1042570
        %vm798 = vcmask 1046534
        %vm799 = vmor %vm798, %vm797
        %800 = vst.msk [vmem:[#allocation2] sm:$0x44] %vm799, %v793
        %801 = vst [vmem:[#allocation2 + $0x8] sm:$0x4] %v794
        %v802 = vld [vmem:[%s633] sm:$0x3f]
        %v804 = vcombine.high %v802, %v802
        %v806 = vunpack.c.l.s4 1983009808
        %v807 = vunpack.c.0.s8 %v806
        %v808 = vlaneseq
        %v809 = vshrl.u32 %v808, 7
        %v810 = vsub.s32 %v807, %v809
        %v811 = vrot.slane %v802, %v810
        %v813 = vunpack.c.l.s4 1983009808
        %v814 = vunpack.c.0.s8 %v813
        %v815 = vlaneseq
        %v816 = vshrl.u32 %v815, 7
        %v817 = vsub.s32 %v814, %v816
        %v818 = vrot.slane %v804, %v817
        %v819 = vcombine.high %v811, %v811
        %v823 = vpack.c.bf16 %v811, %v811
        %v824 = vpack.c.bf16 %v819, %v819
        %v825 = vpack.c.bf16 %v818, %v818
        %v829 = vunpack.c.l.b16 %v823
        %v830 = vunpack.c.l.b16 %v824
        %v831 = vunpack.c.l.b16 %v825
        %v832 = vpack.c.b16 %v830, %v829
        %v833 = vpack.c.b16 %v831, %v831
        %v834 = vrot.slane %v832, 5
        %v835 = vrot.slane %v833, 5
        %836 = vrot.lane.b32.xlu0 %v834, 1
        %v837 = vpop.permute.xlu0 %836
        %838 = vrot.lane.b32.xlu0 %v835, 1
        %v839 = vpop.permute.xlu0 %838
        %v840 = vrot.slane %v837, 4
        %vm841 = vcmask 7168
        %v842 = vsel %vm841, %v840, %v837
        %v843 = vsel %vm841, %v840, %v839
        %vm846 = vcmask 1043467
        %vm847 = vcmask 1047559
        %vm848 = vmor %vm847, %vm846
        %849 = vst.msk [vmem:[#allocation2] sm:$0x88] %vm848, %v842
        %850 = vst [vmem:[#allocation2 + $0x8] sm:$0x8] %v843
        %v851 = vld [vmem:[%s633] sm:$0x3f]
        %v853 = vcombine.high %v851, %v851
        %v855 = vunpack.c.l.s4 1983009808
        %v856 = vunpack.c.0.s8 %v855
        %v857 = vlaneseq
        %v858 = vshrl.u32 %v857, 7
        %v859 = vsub.s32 %v856, %v858
        %v860 = vrot.slane %v851, %v859
        %v862 = vunpack.c.l.s4 1983009808
        %v863 = vunpack.c.0.s8 %v862
        %v864 = vlaneseq
        %v865 = vshrl.u32 %v864, 7
        %v866 = vsub.s32 %v863, %v865
        %v867 = vrot.slane %v853, %v866
        %v868 = vcombine.high %v860, %v860
        %v872 = vpack.c.bf16 %v860, %v860
        %v873 = vpack.c.bf16 %v868, %v868
        %v874 = vpack.c.bf16 %v867, %v867
        %v878 = vunpack.c.l.b16 %v872
        %v879 = vunpack.c.l.b16 %v873
        %v880 = vunpack.c.l.b16 %v874
        %v881 = vpack.c.b16 %v879, %v878
        %v882 = vpack.c.b16 %v880, %v880
        %885 = vst [vmem:[#allocation2 + $0xc] sm:$0x11] %v881
        %886 = vst [vmem:[#allocation2 + $0x14] sm:$0x1] %v882
        %v887 = vld [vmem:[%s633] sm:$0x3f]
        %v889 = vcombine.high %v887, %v887
        %v891 = vunpack.c.l.s4 1983009808
        %v892 = vunpack.c.0.s8 %v891
        %v893 = vlaneseq
        %v894 = vshrl.u32 %v893, 7
        %v895 = vsub.s32 %v892, %v894
        %v896 = vrot.slane %v887, %v895
        %v898 = vunpack.c.l.s4 1983009808
        %v899 = vunpack.c.0.s8 %v898
        %v900 = vlaneseq
        %v901 = vshrl.u32 %v900, 7
        %v902 = vsub.s32 %v899, %v901
        %v903 = vrot.slane %v889, %v902
        %v904 = vcombine.high %v896, %v896
        %v908 = vpack.c.bf16 %v896, %v896
        %v909 = vpack.c.bf16 %v904, %v904
        %v910 = vpack.c.bf16 %v903, %v903
        %v914 = vunpack.c.l.b16 %v908
        %v915 = vunpack.c.l.b16 %v909
        %v916 = vunpack.c.l.b16 %v910
        %v917 = vpack.c.b16 %v915, %v914
        %v918 = vpack.c.b16 %v916, %v916
        %v919 = vrot.slane %v917, 7
        %v920 = vrot.slane %v918, 7
        %921 = vrot.lane.b32.xlu0 %v919, 127
        %v922 = vpop.permute.xlu0 %921
        %923 = vrot.lane.b32.xlu0 %v920, 127
        %v924 = vpop.permute.xlu0 %923
        %v925 = vrot.slane %v922, 4
        %v926 = vrot.slane %v924, 4
        %vm927 = vcmask 1043456
        %v928 = vsel %vm927, %v925, %v926
        %vm929 = vcmask 1039360
        %v930 = vsel %vm929, %v922, %v928
        %933 = vst [vmem:[#allocation2 + $0xc] sm:$0x22] %v930
        %vm934 = vcmask 1033217
        %935 = vst.msk [vmem:[#allocation2 + $0x14] sm:$0x2] %vm934, %v924
        %v936 = vld [vmem:[%s633] sm:$0x3f]
        %v938 = vcombine.high %v936, %v936
        %v940 = vunpack.c.l.s4 1983009808
        %v941 = vunpack.c.0.s8 %v940
        %v942 = vlaneseq
        %v943 = vshrl.u32 %v942, 7
        %v944 = vsub.s32 %v941, %v943
        %v945 = vrot.slane %v936, %v944
        %v947 = vunpack.c.l.s4 1983009808
        %v948 = vunpack.c.0.s8 %v947
        %v949 = vlaneseq
        %v950 = vshrl.u32 %v949, 7
        %v951 = vsub.s32 %v948, %v950
        %v952 = vrot.slane %v938, %v951
        %v953 = vcombine.high %v945, %v945
        %v957 = vpack.c.bf16 %v945, %v945
        %v958 = vpack.c.bf16 %v953, %v953
        %v959 = vpack.c.bf16 %v952, %v952
        %v963 = vunpack.c.l.b16 %v957
        %v964 = vunpack.c.l.b16 %v958
        %v965 = vunpack.c.l.b16 %v959
        %v966 = vpack.c.b16 %v964, %v963
        %v967 = vpack.c.b16 %v965, %v965
        %v968 = vrot.slane %v966, 6
        %v969 = vrot.slane %v967, 6
        %970 = vrot.lane.b32.xlu0 %v968, 111
        %v971 = vpop.permute.xlu0 %970
        %972 = vrot.lane.b32.xlu0 %v969, 111
        %v973 = vpop.permute.xlu0 %972
        %v974 = vrot.slane %v971, 4
        %v975 = vrot.slane %v973, 4
        %v976 = vsel %vm927, %v974, %v975
        %vm977 = vcmask 908288
        %v978 = vsel %vm977, %v971, %v976
        %981 = vst [vmem:[#allocation2 + $0xc] sm:$0x44] %v978
        %vm982 = vcmask 903170
        %983 = vst.msk [vmem:[#allocation2 + $0x14] sm:$0x4] %vm982, %v973
        %v984 = vld [vmem:[%s633] sm:$0x3f]
        %v986 = vcombine.high %v984, %v984
        %v988 = vunpack.c.l.s4 1983009808
        %v989 = vunpack.c.0.s8 %v988
        %v990 = vlaneseq
        %v991 = vshrl.u32 %v990, 7
        %v992 = vsub.s32 %v989, %v991
        %v993 = vrot.slane %v984, %v992
        %v995 = vunpack.c.l.s4 1983009808
        %v996 = vunpack.c.0.s8 %v995
        %v997 = vlaneseq
        %v998 = vshrl.u32 %v997, 7
        %v999 = vsub.s32 %v996, %v998
        %v1000 = vrot.slane %v986, %v999
        %v1001 = vcombine.high %v993, %v993
        %v1005 = vpack.c.bf16 %v993, %v993
        %v1006 = vpack.c.bf16 %v1001, %v1001
        %v1007 = vpack.c.bf16 %v1000, %v1000
        %v1011 = vunpack.c.l.b16 %v1005
        %v1012 = vunpack.c.l.b16 %v1006
        %v1013 = vunpack.c.l.b16 %v1007
        %v1014 = vpack.c.b16 %v1012, %v1011
        %v1015 = vpack.c.b16 %v1013, %v1013
        %v1016 = vrot.slane %v1014, 5
        %v1017 = vrot.slane %v1015, 5
        %1018 = vrot.lane.b32.xlu0 %v1016, 110
        %v1019 = vpop.permute.xlu0 %1018
        %1020 = vrot.lane.b32.xlu0 %v1017, 110
        %v1021 = vpop.permute.xlu0 %1020
        %v1022 = vrot.slane %v1019, 4
        %v1023 = vrot.slane %v1021, 4
        %v1024 = vsel %vm927, %v1022, %v1023
        %vm1025 = vcmask 900096
        %v1026 = vsel %vm1025, %v1019, %v1024
        %1029 = vst [vmem:[#allocation2 + $0xc] sm:$0x88] %v1026
        %vm1030 = vcmask 896003
        %1031 = vst.msk [vmem:[#allocation2 + $0x14] sm:$0x8] %vm1030, %v1021
        %v1032 = vld [vmem:[%s633] sm:$0x3f]
        %v1034 = vcombine.high %v1032, %v1032
        %v1036 = vunpack.c.l.s4 1983009808
        %v1037 = vunpack.c.0.s8 %v1036
        %v1038 = vlaneseq
        %v1039 = vshrl.u32 %v1038, 7
        %v1040 = vsub.s32 %v1037, %v1039
        %v1041 = vrot.slane %v1032, %v1040
        %v1043 = vunpack.c.l.s4 1983009808
        %v1044 = vunpack.c.0.s8 %v1043
        %v1045 = vlaneseq
        %v1046 = vshrl.u32 %v1045, 7
        %v1047 = vsub.s32 %v1044, %v1046
        %v1048 = vrot.slane %v1034, %v1047
        %v1049 = vcombine.high %v1041, %v1041
        %v1053 = vpack.c.bf16 %v1041, %v1041
        %v1054 = vpack.c.bf16 %v1049, %v1049
        %v1055 = vpack.c.bf16 %v1048, %v1048
        %v1059 = vunpack.c.l.b16 %v1053
        %v1060 = vunpack.c.l.b16 %v1054
        %v1061 = vunpack.c.l.b16 %v1055
        %v1062 = vpack.c.b16 %v1060, %v1059
        %v1063 = vpack.c.b16 %v1061, %v1061
        %1064 = vrot.lane.b32.xlu0 %v1062, 109
        %v1065 = vpop.permute.xlu0 %1064
        %1066 = vrot.lane.b32.xlu0 %v1063, 109
        %v1067 = vpop.permute.xlu0 %1066
        %v1068 = vrot.slane %v1065, 4
        %v1069 = vrot.slane %v1067, 4
        %v1070 = vsel %vm927, %v1068, %v1069
        %vm1071 = vcmask 891904
        %v1072 = vsel %vm1071, %v1065, %v1070
        %1075 = vst [vmem:[#allocation2 + $0x18] sm:$0x11] %v1072
        %vm1076 = vcmask 884736
        %1077 = vst.msk [vmem:[#allocation2 + $0x20] sm:$0x1] %vm1076, %v1067
        %v1078 = vld [vmem:[#allocation2] sm:$0xff]
        %v1079 = vld [vmem:[#allocation2 + $0x8] sm:$0xf]
        %v1080 = vld [vmem:[#allocation2 + $0xc] sm:$0xff]
        %v1081 = vld [vmem:[#allocation2 + $0x14] sm:$0xf]
        %v1082 = vld [vmem:[#allocation2 + $0x18] sm:$0x11]
        %v1083 = vld [vmem:[#allocation2 + $0x20] sm:$0x1]
        %v1084 = vld [vmem:[%s1] sm:$0xf]
        %v1085 = vld [vmem:[%s2] sm:$0xff]
        %1087 = vset.pattern.permute.xlu0 0
        %1088 = vperm.xlu0 %1087, %v1085
        %v1089 = vpop.permute.xlu0 %1088
        %v1097 = vunpack.c.l.b16 %v1078
        %v1098 = vunpack.c.h.b16 %v1078
        %v1099 = vunpack.c.l.b16 %v1079
        %v1100 = vunpack.c.l.b16 %v1080
        %v1101 = vunpack.c.h.b16 %v1080
        %v1102 = vunpack.c.l.b16 %v1081
        %v1103 = vunpack.c.l.b16 %v1082
        %v1104 = vunpack.c.h.b16 %v1082
        %v1105 = vunpack.c.l.b16 %v1083
        %v1106 = vpack.c.b16 %v1100, %v1097
        %v1107 = vpack.c.b16 %v1101, %v1098
        %v1108 = vpack.c.b16 %v1102, %v1099
        %v1109 = vpack.c.b16 %v1103, %v1103
        %v1110 = vpack.c.b16 %v1104, %v1104
        %v1111 = vpack.c.b16 %v1105, %v1105
        %vm1115 = vcmask 146432
        %v1117 = vsel %vm1115, %v1084, 0
        %vm1119 = vcmask 1040384
        %v1121 = vsel %vm1119, %v1109, 0
        %v1124 = vsel %vm1119, %v1110, 0
        %v1127 = vsel %vm1119, %v1111, 0
        %1129 = vmatprep.subr.bf16.mxu0 %v1107
        %1130 = vmatpush1.bf16.msra.mxu0 %v1106
        %1131 = vmatprep.subr.bf16.mxu0 %v1124
        %1132 = vmatpush1.bf16.msra.mxu0 %v1121
        %1133 = vmatprep.subr.bf16.mxu0 0
        %1134 = vmatpush1.bf16.msra.mxu0 0
        %1135 = vmatprep.subr.bf16.mxu0 0
        %1136 = vmatpush1.bf16.msra.mxu0 0
        %1137 = vmatprep.subr.bf16.mxu0 0
        %1138 = vmatpush1.bf16.msra.mxu0 0
        %1139 = vmatprep.subr.bf16.mxu0 0
        %1140 = vmatpush1.bf16.msra.mxu0 0
        %1141 = vmatprep.subr.bf16.mxu0 0
        %1142 = vmatpush1.bf16.msra.mxu0 0
        %1143 = vmatprep.subr.bf16.mxu0 0
        %1144 = vmatpush1.bf16.msra.mxu0 0
        %1145 = vmatprep.subr.bf16.mxu0 0
        %1146 = vmatpush1.bf16.msra.mxu0 0
        %1147 = vmatprep.subr.bf16.mxu0 0
        %1148 = vmatpush1.bf16.msra.mxu0 0
        %1149 = vmatprep.subr.bf16.mxu0 0
        %1150 = vmatpush1.bf16.msra.mxu0 0
        %1151 = vmatprep.subr.bf16.mxu0 0
        %1152 = vmatpush1.bf16.msra.mxu0 0
        %1153 = vmatprep.subr.bf16.mxu0 0
        %1154 = vmatpush1.bf16.msra.mxu0 0
        %1155 = vmatprep.subr.bf16.mxu0 0
        %1156 = vmatpush1.bf16.msra.mxu0 0
        %1157 = vmatprep.subr.bf16.mxu0 0
        %1158 = vmatpush1.bf16.msra.mxu0 0
        %1159 = vmatprep.subr.bf16.mxu0 0
        %1160 = vmatpush1.bf16.msra.mxu0 0
        %1161 = vmatprep.mubr.bf16.mxu0 0
        %1162 = vmatmul.mubr.bf16.gmra.mrb[0].mxu0 %v1117
        %v1163 = vpop.f32.mrb[0].mxu0
        %v1164 = vadd.f32 %v1089, %v1163
        %v1165 = vpop.f32.mrb[0].mxu0
        %v1166 = vadd.f32 %v1089, %v1165
        %v1167 = vpop.f32.mrb[0].mxu0
        %v1168 = vpop.f32.mrb[0].mxu0
        %1169 = vdwg.mxu0
        %1170 = vmatprep.subr.bf16.mxu0 0
        %1171 = vmatpush1.bf16.msra.mxu0 %v1108
        %1172 = vmatprep.subr.bf16.mxu0 0
        %1173 = vmatpush1.bf16.msra.mxu0 %v1127
        %1174 = vmatprep.subr.bf16.mxu0 0
        %1175 = vmatpush1.bf16.msra.mxu0 0
        %1176 = vmatprep.subr.bf16.mxu0 0
        %1177 = vmatpush1.bf16.msra.mxu0 0
        %1178 = vmatprep.subr.bf16.mxu0 0
        %1179 = vmatpush1.bf16.msra.mxu0 0
        %1180 = vmatprep.subr.bf16.mxu0 0
        %1181 = vmatpush1.bf16.msra.mxu0 0
        %1182 = vmatprep.subr.bf16.mxu0 0
        %1183 = vmatpush1.bf16.msra.mxu0 0
        %1184 = vmatprep.subr.bf16.mxu0 0
        %1185 = vmatpush1.bf16.msra.mxu0 0
        %1186 = vmatprep.subr.bf16.mxu0 0
        %1187 = vmatpush1.bf16.msra.mxu0 0
        %1188 = vmatprep.subr.bf16.mxu0 0
        %1189 = vmatpush1.bf16.msra.mxu0 0
        %1190 = vmatprep.subr.bf16.mxu0 0
        %1191 = vmatpush1.bf16.msra.mxu0 0
        %1192 = vmatprep.subr.bf16.mxu0 0
        %1193 = vmatpush1.bf16.msra.mxu0 0
        %1194 = vmatprep.subr.bf16.mxu0 0
        %1195 = vmatpush1.bf16.msra.mxu0 0
        %1196 = vmatprep.subr.bf16.mxu0 0
        %1197 = vmatpush1.bf16.msra.mxu0 0
        %1198 = vmatprep.subr.bf16.mxu0 0
        %1199 = vmatpush1.bf16.msra.mxu0 0
        %1200 = vmatprep.subr.bf16.mxu0 0
        %1201 = vmatpush1.bf16.msra.mxu0 0
        %1202 = vmatprep.mubr.bf16.mxu0 0
        %1203 = vmatmul.mubr.bf16.gmra.mrb[0].mxu0 %v1117
        %v1204 = vpop.f32.mrb[0].mxu0
        %v1205 = vadd.f32 %v1089, %v1204
        %v1206 = vpop.f32.mrb[0].mxu0
        %v1207 = vpop.f32.mrb[0].mxu0
        %v1208 = vpop.f32.mrb[0].mxu0
        %1209 = vdwg.mxu0
        %vm1210 = vcmp.gt.f32.partialorder %v655, 0.0
        %v1211 = vmax.f32 %v1164, 0.0
        %v1212 = vmax.f32 %v1166, 0.0
        %v1213 = vmax.f32 %v1205, 0.0
        %v1214 = vsel %vm1210, 1, 0
        %v1215 = vlaneseq
        %v1216 = vshrl.u32 %v1215, 7
        %v1217 = vsub.s32 0, %v1216
        %v1218 = vrot.slane %v1214, %v1217
        %v1219 = vlaneseq
        %v1220 = vshrl.u32 %v1219, 7
        %v1221 = vsub.s32 1, %v1220
        %v1222 = vrot.slane %v1214, %v1221
        %v1223 = vlaneseq
        %v1224 = vshrl.u32 %v1223, 7
        %v1225 = vsub.s32 2, %v1224
        %v1226 = vrot.slane %v1214, %v1225
        %vm1227 = vcmp.eq.s32.totalorder %v1218, 1
        %vm1228 = vcmp.eq.s32.totalorder %v1222, 1
        %vm1229 = vcmp.eq.s32.totalorder %v1226, 1
        %v1230 = vsel %vm1227, %v1211, 0.0
        %v1231 = vsel %vm1228, %v1212, 0.0
        %v1232 = vsel %vm1229, %v1213, 0.0
        %v1233 = vpack.c.bf16 %v1230, %v1230
        %v1234 = vpack.c.bf16 %v1231, %v1231
        %v1235 = vpack.c.bf16 %v1232, %v1232
        %v1239 = vunpack.c.l.b16 %v1233
        %v1240 = vunpack.c.l.b16 %v1234
        %v1241 = vunpack.c.l.b16 %v1235
        %v1242 = vpack.c.b16 %v1240, %v1239
        %v1243 = vpack.c.b16 %v1241, %v1241
        %1246 = vst [vmem:[#allocation3] sm:$0xff] %v1242
        %1247 = vst [vmem:[#allocation3 + $0x8] sm:$0xf] %v1243
        %v1248 = vld [vmem:[#allocation3] sm:$0xff]
        %v1249 = vld [vmem:[#allocation3 + $0x8] sm:$0xf]
        %1252 = vrot.lane.b32.xlu0 %v1248, 19
        %v1253 = vpop.permute.xlu0 %1252
        %1254 = vrot.lane.b32.xlu0 %v1249, 19
        %v1255 = vpop.permute.xlu0 %1254
        %v1256 = vrot.slane %v1253, 4
        %v1257 = vsel %vm694, %v1256, %v1253
        %v1258 = vsel %vm694, %v1256, %v1255
        %vm1261 = vcmask 1043608
        %vm1262 = vcmask 1047556
        %vm1263 = vmor %vm1262, %vm1261
        %1264 = vst.msk [vmem:[#allocation2] sm:$0xff] %vm1263, %v1257
        %1265 = vst [vmem:[#allocation2 + $0x8] sm:$0xf] %v1258
        %v1266 = vld [vmem:[#allocation3] sm:$0xff]
        %v1267 = vld [vmem:[#allocation3 + $0x8] sm:$0xf]
        %1270 = vrot.lane.b32.xlu0 %v1266, 18
        %v1271 = vpop.permute.xlu0 %1270
        %1272 = vrot.lane.b32.xlu0 %v1267, 18
        %v1273 = vpop.permute.xlu0 %1272
        %v1274 = vrot.slane %v1271, 4
        %v1275 = vsel %vm743, %v1274, %v1271
        %v1276 = vsel %vm743, %v1274, %v1273
        %vm1279 = vcmask 1043600
        %vm1280 = vmor %vm1262, %vm1279
        %1281 = vst.msk [vmem:[#allocation2 + $0xc] sm:$0xff] %vm1280, %v1275
        %1282 = vst [vmem:[#allocation2 + $0x14] sm:$0xf] %v1276
        %v1283 = vld [vmem:[#allocation3] sm:$0xff]
        %v1284 = vld [vmem:[#allocation3 + $0x8] sm:$0xf]
        %1287 = vrot.lane.b32.xlu0 %v1283, 17
        %v1288 = vpop.permute.xlu0 %1287
        %1289 = vrot.lane.b32.xlu0 %v1284, 17
        %v1290 = vpop.permute.xlu0 %1289
        %v1291 = vrot.slane %v1288, 4
        %v1292 = vsel %vm792, %v1291, %v1288
        %v1293 = vsel %vm792, %v1291, %v1290
        %vm1296 = vcmask 1043592
        %vm1297 = vmor %vm1262, %vm1296
        %1298 = vst.msk [vmem:[#allocation2 + $0x18] sm:$0xff] %vm1297, %v1292
        %1299 = vst [vmem:[#allocation2 + $0x20] sm:$0xf] %v1293
        %v1300 = vld [vmem:[#allocation3] sm:$0xff]
        %v1301 = vld [vmem:[#allocation3 + $0x8] sm:$0xf]
        %1304 = vrot.lane.b32.xlu0 %v1300, 1
        %v1305 = vpop.permute.xlu0 %1304
        %1306 = vrot.lane.b32.xlu0 %v1301, 1
        %v1307 = vpop.permute.xlu0 %1306
        %v1308 = vrot.slane %v1305, 4
        %v1309 = vsel %vm841, %v1308, %v1305
        %v1310 = vsel %vm841, %v1308, %v1307
        %vm1313 = vcmask 1043464
        %vm1314 = vmor %vm1262, %vm1313
        %1315 = vst.msk [vmem:[#allocation2 + $0x24] sm:$0xff] %vm1314, %v1309
        %1316 = vst [vmem:[#allocation2 + $0x2c] sm:$0xf] %v1310
        %v1317 = vld [vmem:[#allocation3] sm:$0xff]
        %v1318 = vld [vmem:[#allocation3 + $0x8] sm:$0xf]
        %1319 = vst [vmem:[#allocation2 + $0x30] sm:$0xff] %v1317
        %1320 = vst [vmem:[#allocation2 + $0x38] sm:$0xf] %v1318
        %v1321 = vld [vmem:[#allocation3] sm:$0xff]
        %v1322 = vld [vmem:[#allocation3 + $0x8] sm:$0xf]
        %1325 = vrot.lane.b32.xlu0 %v1321, 127
        %v1326 = vpop.permute.xlu0 %1325
        %1327 = vrot.lane.b32.xlu0 %v1322, 127
        %v1328 = vpop.permute.xlu0 %1327
        %v1329 = vrot.slane %v1326, 4
        %v1330 = vrot.slane %v1328, 4
        %v1331 = vsel %vm927, %v1329, %v1330
        %v1332 = vsel %vm929, %v1326, %v1331
        %1335 = vst [vmem:[#allocation2 + $0x3c] sm:$0xff] %v1332
        %vm1336 = vcmask 1035264
        %1337 = vst.msk [vmem:[#allocation2 + $0x44] sm:$0xf] %vm1336, %v1328
        %v1338 = vld [vmem:[#allocation3] sm:$0xff]
        %v1339 = vld [vmem:[#allocation3 + $0x8] sm:$0xf]
        %1342 = vrot.lane.b32.xlu0 %v1338, 111
        %v1343 = vpop.permute.xlu0 %1342
        %1344 = vrot.lane.b32.xlu0 %v1339, 111
        %v1345 = vpop.permute.xlu0 %1344
        %v1346 = vrot.slane %v1343, 4
        %v1347 = vrot.slane %v1345, 4
        %v1348 = vsel %vm927, %v1346, %v1347
        %v1349 = vsel %vm977, %v1343, %v1348
        %1352 = vst [vmem:[#allocation2 + $0x48] sm:$0xff] %v1349
        %vm1353 = vcmask 904192
        %1354 = vst.msk [vmem:[#allocation2 + $0x50] sm:$0xf] %vm1353, %v1345
        %v1355 = vld [vmem:[#allocation3] sm:$0xff]
        %v1356 = vld [vmem:[#allocation3 + $0x8] sm:$0xf]
        %1359 = vrot.lane.b32.xlu0 %v1355, 110
        %v1360 = vpop.permute.xlu0 %1359
        %1361 = vrot.lane.b32.xlu0 %v1356, 110
        %v1362 = vpop.permute.xlu0 %1361
        %v1363 = vrot.slane %v1360, 4
        %v1364 = vrot.slane %v1362, 4
        %v1365 = vsel %vm927, %v1363, %v1364
        %v1366 = vsel %vm1025, %v1360, %v1365
        %1369 = vst [vmem:[#allocation2 + $0x54] sm:$0xff] %v1366
        %vm1370 = vcmask 896000
        %1371 = vst.msk [vmem:[#allocation2 + $0x5c] sm:$0xf] %vm1370, %v1362
        %v1372 = vld [vmem:[#allocation3] sm:$0xff]
        %v1373 = vld [vmem:[#allocation3 + $0x8] sm:$0xf]
        %1376 = vrot.lane.b32.xlu0 %v1372, 109
        %v1377 = vpop.permute.xlu0 %1376
        %1378 = vrot.lane.b32.xlu0 %v1373, 109
        %v1379 = vpop.permute.xlu0 %1378
        %v1380 = vrot.slane %v1377, 4
        %v1381 = vrot.slane %v1379, 4
        %v1382 = vsel %vm927, %v1380, %v1381
        %v1383 = vsel %vm1071, %v1377, %v1382
        %1386 = vst [vmem:[#allocation2 + $0x60] sm:$0xff] %v1383
        %vm1387 = vcmask 887808
        %1388 = vst.msk [vmem:[#allocation2 + $0x68] sm:$0xf] %vm1387, %v1379
        %v1389 = vld [vmem:[#allocation2] sm:$0xff]
        %v1390 = vld [vmem:[#allocation2 + $0x8] sm:$0xf]
        %v1391 = vld [vmem:[#allocation2 + $0xc] sm:$0xff]
        %v1392 = vld [vmem:[#allocation2 + $0x14] sm:$0xf]
        %v1393 = vld [vmem:[#allocation2 + $0x18] sm:$0xff]
        %v1394 = vld [vmem:[#allocation2 + $0x20] sm:$0xf]
        %v1395 = vld [vmem:[#allocation2 + $0x24] sm:$0xff]
        %v1396 = vld [vmem:[#allocation2 + $0x2c] sm:$0xf]
        %v1397 = vld [vmem:[#allocation2 + $0x30] sm:$0xff]
        %v1398 = vld [vmem:[#allocation2 + $0x38] sm:$0xf]
        %v1399 = vld [vmem:[#allocation2 + $0x3c] sm:$0xff]
        %v1400 = vld [vmem:[#allocation2 + $0x44] sm:$0xf]
        %v1401 = vld [vmem:[#allocation2 + $0x48] sm:$0xff]
        %v1402 = vld [vmem:[#allocation2 + $0x50] sm:$0xf]
        %v1403 = vld [vmem:[#allocation2 + $0x54] sm:$0xff]
        %v1404 = vld [vmem:[#allocation2 + $0x5c] sm:$0xf]
        %v1405 = vld [vmem:[#allocation2 + $0x60] sm:$0xff]
        %v1406 = vld [vmem:[#allocation2 + $0x68] sm:$0xf]
        %v1407 = vld [vmem:[%s3] sm:$0xf]
        %v1408 = vld [vmem:[%s4] sm:$0xff]
        %1410 = vset.pattern.permute.xlu0 0
        %1411 = vperm.xlu0 %1410, %v1408
        %v1412 = vpop.permute.xlu0 %1411
        %v1432 = vunpack.c.l.b16 %v1389
        %v1433 = vunpack.c.h.b16 %v1389
        %v1434 = vunpack.c.l.b16 %v1390
        %v1435 = vunpack.c.l.b16 %v1391
        %v1436 = vunpack.c.h.b16 %v1391
        %v1437 = vunpack.c.l.b16 %v1392
        %v1438 = vunpack.c.l.b16 %v1393
        %v1439 = vunpack.c.h.b16 %v1393
        %v1440 = vunpack.c.l.b16 %v1394
        %v1441 = vunpack.c.l.b16 %v1395
        %v1442 = vunpack.c.h.b16 %v1395
        %v1443 = vunpack.c.l.b16 %v1396
        %v1444 = vunpack.c.l.b16 %v1397
        %v1445 = vunpack.c.h.b16 %v1397
        %v1446 = vunpack.c.l.b16 %v1398
        %v1447 = vunpack.c.l.b16 %v1399
        %v1448 = vunpack.c.h.b16 %v1399
        %v1449 = vunpack.c.l.b16 %v1400
        %v1450 = vunpack.c.l.b16 %v1401
        %v1451 = vunpack.c.h.b16 %v1401
        %v1452 = vunpack.c.l.b16 %v1402
        %v1453 = vunpack.c.l.b16 %v1403
        %v1454 = vunpack.c.h.b16 %v1403
        %v1455 = vunpack.c.l.b16 %v1404
        %v1456 = vunpack.c.l.b16 %v1405
        %v1457 = vunpack.c.h.b16 %v1405
        %v1458 = vunpack.c.l.b16 %v1406
        %v1459 = vpack.c.b16 %v1435, %v1432
        %v1460 = vpack.c.b16 %v1436, %v1433
        %v1461 = vpack.c.b16 %v1437, %v1434
        %v1462 = vpack.c.b16 %v1441, %v1438
        %v1463 = vpack.c.b16 %v1442, %v1439
        %v1464 = vpack.c.b16 %v1443, %v1440
        %v1465 = vpack.c.b16 %v1447, %v1444
        %v1466 = vpack.c.b16 %v1448, %v1445
        %v1467 = vpack.c.b16 %v1449, %v1446
        %v1468 = vpack.c.b16 %v1453, %v1450
        %v1469 = vpack.c.b16 %v1454, %v1451
        %v1470 = vpack.c.b16 %v1455, %v1452
        %v1471 = vpack.c.b16 %v1456, %v1456
        %v1472 = vpack.c.b16 %v1457, %v1457
        %v1473 = vpack.c.b16 %v1458, %v1458
        %vm1486 = vcmask 588800
        %v1488 = vsel %vm1486, %v1407, 0
        %vm1490 = vcmask 1043456
        %v1492 = vsel %vm1490, %v1471, 0
        %v1495 = vsel %vm1490, %v1472, 0
        %v1498 = vsel %vm1490, %v1473, 0
        %1500 = vmatprep.subr.bf16.mxu0 %v1460
        %1501 = vmatpush1.bf16.msra.mxu0 %v1459
        %1502 = vmatprep.subr.bf16.mxu0 %v1463
        %1503 = vmatpush1.bf16.msra.mxu0 %v1462
        %1504 = vmatprep.subr.bf16.mxu0 %v1466
        %1505 = vmatpush1.bf16.msra.mxu0 %v1465
        %1506 = vmatprep.subr.bf16.mxu0 %v1469
        %1507 = vmatpush1.bf16.msra.mxu0 %v1468
        %1508 = vmatprep.subr.bf16.mxu0 %v1495
        %1509 = vmatpush1.bf16.msra.mxu0 %v1492
        %1510 = vmatprep.subr.bf16.mxu0 0
        %1511 = vmatpush1.bf16.msra.mxu0 0
        %1512 = vmatprep.subr.bf16.mxu0 0
        %1513 = vmatpush1.bf16.msra.mxu0 0
        %1514 = vmatprep.subr.bf16.mxu0 0
        %1515 = vmatpush1.bf16.msra.mxu0 0
        %1516 = vmatprep.subr.bf16.mxu0 0
        %1517 = vmatpush1.bf16.msra.mxu0 0
        %1518 = vmatprep.subr.bf16.mxu0 0
        %1519 = vmatpush1.bf16.msra.mxu0 0
        %1520 = vmatprep.subr.bf16.mxu0 0
        %1521 = vmatpush1.bf16.msra.mxu0 0
        %1522 = vmatprep.subr.bf16.mxu0 0
        %1523 = vmatpush1.bf16.msra.mxu0 0
        %1524 = vmatprep.subr.bf16.mxu0 0
        %1525 = vmatpush1.bf16.msra.mxu0 0
        %1526 = vmatprep.subr.bf16.mxu0 0
        %1527 = vmatpush1.bf16.msra.mxu0 0
        %1528 = vmatprep.subr.bf16.mxu0 0
        %1529 = vmatpush1.bf16.msra.mxu0 0
        %1530 = vmatprep.subr.bf16.mxu0 0
        %1531 = vmatpush1.bf16.msra.mxu0 0
        %1532 = vmatprep.mubr.bf16.mxu0 0
        %1533 = vmatmul.mubr.bf16.gmra.mrb[0].mxu0 %v1488
        %v1534 = vpop.f32.mrb[0].mxu0
        %v1535 = vadd.f32 %v1412, %v1534
        %v1536 = vpop.f32.mrb[0].mxu0
        %v1537 = vadd.f32 %v1412, %v1536
        %v1538 = vpop.f32.mrb[0].mxu0
        %v1539 = vpop.f32.mrb[0].mxu0
        %1540 = vdwg.mxu0
        %1541 = vmatprep.subr.bf16.mxu0 0
        %1542 = vmatpush1.bf16.msra.mxu0 %v1461
        %1543 = vmatprep.subr.bf16.mxu0 0
        %1544 = vmatpush1.bf16.msra.mxu0 %v1464
        %1545 = vmatprep.subr.bf16.mxu0 0
        %1546 = vmatpush1.bf16.msra.mxu0 %v1467
        %1547 = vmatprep.subr.bf16.mxu0 0
        %1548 = vmatpush1.bf16.msra.mxu0 %v1470
        %1549 = vmatprep.subr.bf16.mxu0 0
        %1550 = vmatpush1.bf16.msra.mxu0 %v1498
        %1551 = vmatprep.subr.bf16.mxu0 0
        %1552 = vmatpush1.bf16.msra.mxu0 0
        %1553 = vmatprep.subr.bf16.mxu0 0
        %1554 = vmatpush1.bf16.msra.mxu0 0
        %1555 = vmatprep.subr.bf16.mxu0 0
        %1556 = vmatpush1.bf16.msra.mxu0 0
        %1557 = vmatprep.subr.bf16.mxu0 0
        %1558 = vmatpush1.bf16.msra.mxu0 0
        %1559 = vmatprep.subr.bf16.mxu0 0
        %1560 = vmatpush1.bf16.msra.mxu0 0
        %1561 = vmatprep.subr.bf16.mxu0 0
        %1562 = vmatpush1.bf16.msra.mxu0 0
        %1563 = vmatprep.subr.bf16.mxu0 0
        %1564 = vmatpush1.bf16.msra.mxu0 0
        %1565 = vmatprep.subr.bf16.mxu0 0
        %1566 = vmatpush1.bf16.msra.mxu0 0
        %1567 = vmatprep.subr.bf16.mxu0 0
        %1568 = vmatpush1.bf16.msra.mxu0 0
        %1569 = vmatprep.subr.bf16.mxu0 0
        %1570 = vmatpush1.bf16.msra.mxu0 0
        %1571 = vmatprep.subr.bf16.mxu0 0
        %1572 = vmatpush1.bf16.msra.mxu0 0
        %1573 = vmatprep.mubr.bf16.mxu0 0
        %1574 = vmatmul.mubr.bf16.gmra.mrb[0].mxu0 %v1488
        %v1575 = vpop.f32.mrb[0].mxu0
        %v1576 = vadd.f32 %v1412, %v1575
        %v1577 = vpop.f32.mrb[0].mxu0
        %v1578 = vpop.f32.mrb[0].mxu0
        %v1579 = vpop.f32.mrb[0].mxu0
        %1580 = vdwg.mxu0
        %1581 = vst [vmem:[%s614] sm:$0xff] %v1535
        %1582 = vst [vmem:[%s614 + $0x8] sm:$0xff] %v1537
        %1583 = vst [vmem:[%s614 + $0x10] sm:$0xff] %v1576
        %v1584 = vmax.f32 %v1535, 0.0
        %v1585 = vmax.f32 %v1537, 0.0
        %v1586 = vmax.f32 %v1576, 0.0
        %v1587 = vsel %vm1227, %v1584, 0.0
        %v1588 = vsel %vm1228, %v1585, 0.0
        %v1589 = vsel %vm1229, %v1586, 0.0
        %v1590 = vpack.c.bf16 %v1587, %v1587
        %v1591 = vpack.c.bf16 %v1588, %v1588
        %v1592 = vpack.c.bf16 %v1589, %v1589
        %v1596 = vunpack.c.l.b16 %v1590
        %v1597 = vunpack.c.l.b16 %v1591
        %v1598 = vunpack.c.l.b16 %v1592
        %v1599 = vpack.c.b16 %v1597, %v1596
        %v1600 = vpack.c.b16 %v1598, %v1598
        %1603 = vst [vmem:[#allocation3] sm:$0xff] %v1599
        %1604 = vst [vmem:[#allocation3 + $0x8] sm:$0xf] %v1600
        %v1605 = vld [vmem:[#allocation3] sm:$0xff]
        %v1606 = vld [vmem:[#allocation3 + $0x8] sm:$0xf]
        %1609 = vrot.lane.b32.xlu0 %v1605, 19
        %v1610 = vpop.permute.xlu0 %1609
        %1611 = vrot.lane.b32.xlu0 %v1606, 19
        %v1612 = vpop.permute.xlu0 %1611
        %v1613 = vrot.slane %v1610, 4
        %v1614 = vsel %vm694, %v1613, %v1610
        %v1615 = vsel %vm694, %v1613, %v1612
        %1618 = vst.msk [vmem:[#allocation2] sm:$0xff] %vm1263, %v1614
        %1619 = vst [vmem:[#allocation2 + $0x8] sm:$0xf] %v1615
        %v1620 = vld [vmem:[#allocation3] sm:$0xff]
        %v1621 = vld [vmem:[#allocation3 + $0x8] sm:$0xf]
        %1624 = vrot.lane.b32.xlu0 %v1620, 18
        %v1625 = vpop.permute.xlu0 %1624
        %1626 = vrot.lane.b32.xlu0 %v1621, 18
        %v1627 = vpop.permute.xlu0 %1626
        %v1628 = vrot.slane %v1625, 4
        %v1629 = vsel %vm743, %v1628, %v1625
        %v1630 = vsel %vm743, %v1628, %v1627
        %1633 = vst.msk [vmem:[#allocation2 + $0xc] sm:$0xff] %vm1280, %v1629
        %1634 = vst [vmem:[#allocation2 + $0x14] sm:$0xf] %v1630
        %v1635 = vld [vmem:[#allocation3] sm:$0xff]
        %v1636 = vld [vmem:[#allocation3 + $0x8] sm:$0xf]
        %1639 = vrot.lane.b32.xlu0 %v1635, 17
        %v1640 = vpop.permute.xlu0 %1639
        %1641 = vrot.lane.b32.xlu0 %v1636, 17
        %v1642 = vpop.permute.xlu0 %1641
        %v1643 = vrot.slane %v1640, 4
        %v1644 = vsel %vm792, %v1643, %v1640
        %v1645 = vsel %vm792, %v1643, %v1642
        %1648 = vst.msk [vmem:[#allocation2 + $0x18] sm:$0xff] %vm1297, %v1644
        %1649 = vst [vmem:[#allocation2 + $0x20] sm:$0xf] %v1645
        %v1650 = vld [vmem:[#allocation3] sm:$0xff]
        %v1651 = vld [vmem:[#allocation3 + $0x8] sm:$0xf]
        %1654 = vrot.lane.b32.xlu0 %v1650, 1
        %v1655 = vpop.permute.xlu0 %1654
        %1656 = vrot.lane.b32.xlu0 %v1651, 1
        %v1657 = vpop.permute.xlu0 %1656
        %v1658 = vrot.slane %v1655, 4
        %v1659 = vsel %vm841, %v1658, %v1655
        %v1660 = vsel %vm841, %v1658, %v1657
        %1663 = vst.msk [vmem:[#allocation2 + $0x24] sm:$0xff] %vm1314, %v1659
        %1664 = vst [vmem:[#allocation2 + $0x2c] sm:$0xf] %v1660
        %v1665 = vld [vmem:[#allocation3] sm:$0xff]
        %v1666 = vld [vmem:[#allocation3 + $0x8] sm:$0xf]
        %1667 = vst [vmem:[#allocation2 + $0x30] sm:$0xff] %v1665
        %1668 = vst [vmem:[#allocation2 + $0x38] sm:$0xf] %v1666
        %v1669 = vld [vmem:[#allocation3] sm:$0xff]
        %v1670 = vld [vmem:[#allocation3 + $0x8] sm:$0xf]
        %1673 = vrot.lane.b32.xlu0 %v1669, 127
        %v1674 = vpop.permute.xlu0 %1673
        %1675 = vrot.lane.b32.xlu0 %v1670, 127
        %v1676 = vpop.permute.xlu0 %1675
        %v1677 = vrot.slane %v1674, 4
        %v1678 = vrot.slane %v1676, 4
        %v1679 = vsel %vm927, %v1677, %v1678
        %v1680 = vsel %vm929, %v1674, %v1679
        %1683 = vst [vmem:[#allocation2 + $0x3c] sm:$0xff] %v1680
        %1684 = vst.msk [vmem:[#allocation2 + $0x44] sm:$0xf] %vm1336, %v1676
        %v1685 = vld [vmem:[#allocation3] sm:$0xff]
        %v1686 = vld [vmem:[#allocation3 + $0x8] sm:$0xf]
        %1689 = vrot.lane.b32.xlu0 %v1685, 111
        %v1690 = vpop.permute.xlu0 %1689
        %1691 = vrot.lane.b32.xlu0 %v1686, 111
        %v1692 = vpop.permute.xlu0 %1691
        %v1693 = vrot.slane %v1690, 4
        %v1694 = vrot.slane %v1692, 4
        %v1695 = vsel %vm927, %v1693, %v1694
        %v1696 = vsel %vm977, %v1690, %v1695
        %1699 = vst [vmem:[#allocation2 + $0x48] sm:$0xff] %v1696
        %1700 = vst.msk [vmem:[#allocation2 + $0x50] sm:$0xf] %vm1353, %v1692
        %v1701 = vld [vmem:[#allocation3] sm:$0xff]
        %v1702 = vld [vmem:[#allocation3 + $0x8] sm:$0xf]
        %1705 = vrot.lane.b32.xlu0 %v1701, 110
        %v1706 = vpop.permute.xlu0 %1705
        %1707 = vrot.lane.b32.xlu0 %v1702, 110
        %v1708 = vpop.permute.xlu0 %1707
        %v1709 = vrot.slane %v1706, 4
        %v1710 = vrot.slane %v1708, 4
        %v1711 = vsel %vm927, %v1709, %v1710
        %v1712 = vsel %vm1025, %v1706, %v1711
        %1715 = vst [vmem:[#allocation2 + $0x54] sm:$0xff] %v1712
        %1716 = vst.msk [vmem:[#allocation2 + $0x5c] sm:$0xf] %vm1370, %v1708
        %v1717 = vld [vmem:[#allocation3] sm:$0xff]
        %v1718 = vld [vmem:[#allocation3 + $0x8] sm:$0xf]
        %1721 = vrot.lane.b32.xlu0 %v1717, 109
        %v1722 = vpop.permute.xlu0 %1721
        %1723 = vrot.lane.b32.xlu0 %v1718, 109
        %v1724 = vpop.permute.xlu0 %1723
        %v1725 = vrot.slane %v1722, 4
        %v1726 = vrot.slane %v1724, 4
        %v1727 = vsel %vm927, %v1725, %v1726
        %v1728 = vsel %vm1071, %v1722, %v1727
        %1731 = vst [vmem:[#allocation2 + $0x60] sm:$0xff] %v1728
        %1732 = vst.msk [vmem:[#allocation2 + $0x68] sm:$0xf] %vm1387, %v1724
        %v1733 = vld [vmem:[#allocation2] sm:$0xff]
        %v1734 = vld [vmem:[#allocation2 + $0x8] sm:$0xf]
        %v1735 = vld [vmem:[#allocation2 + $0xc] sm:$0xff]
        %v1736 = vld [vmem:[#allocation2 + $0x14] sm:$0xf]
        %v1737 = vld [vmem:[#allocation2 + $0x18] sm:$0xff]
        %v1738 = vld [vmem:[#allocation2 + $0x20] sm:$0xf]
        %v1739 = vld [vmem:[#allocation2 + $0x24] sm:$0xff]
        %v1740 = vld [vmem:[#allocation2 + $0x2c] sm:$0xf]
        %v1741 = vld [vmem:[#allocation2 + $0x30] sm:$0xff]
        %v1742 = vld [vmem:[#allocation2 + $0x38] sm:$0xf]
        %v1743 = vld [vmem:[#allocation2 + $0x3c] sm:$0xff]
        %v1744 = vld [vmem:[#allocation2 + $0x44] sm:$0xf]
        %v1745 = vld [vmem:[#allocation2 + $0x48] sm:$0xff]
        %v1746 = vld [vmem:[#allocation2 + $0x50] sm:$0xf]
        %v1747 = vld [vmem:[#allocation2 + $0x54] sm:$0xff]
        %v1748 = vld [vmem:[#allocation2 + $0x5c] sm:$0xf]
        %v1749 = vld [vmem:[#allocation2 + $0x60] sm:$0xff]
        %v1750 = vld [vmem:[#allocation2 + $0x68] sm:$0xf]
        %v1751 = vld [vmem:[%s5] sm:$0xf]
        %v1752 = vld [vmem:[%s6] sm:$0xff]
        %1754 = vset.pattern.permute.xlu0 0
        %1755 = vperm.xlu0 %1754, %v1752
        %v1756 = vpop.permute.xlu0 %1755
        %v1776 = vunpack.c.l.b16 %v1733
        %v1777 = vunpack.c.h.b16 %v1733
        %v1778 = vunpack.c.l.b16 %v1734
        %v1779 = vunpack.c.l.b16 %v1735
        %v1780 = vunpack.c.h.b16 %v1735
        %v1781 = vunpack.c.l.b16 %v1736
        %v1782 = vunpack.c.l.b16 %v1737
        %v1783 = vunpack.c.h.b16 %v1737
        %v1784 = vunpack.c.l.b16 %v1738
        %v1785 = vunpack.c.l.b16 %v1739
        %v1786 = vunpack.c.h.b16 %v1739
        %v1787 = vunpack.c.l.b16 %v1740
        %v1788 = vunpack.c.l.b16 %v1741
        %v1789 = vunpack.c.h.b16 %v1741
        %v1790 = vunpack.c.l.b16 %v1742
        %v1791 = vunpack.c.l.b16 %v1743
        %v1792 = vunpack.c.h.b16 %v1743
        %v1793 = vunpack.c.l.b16 %v1744
        %v1794 = vunpack.c.l.b16 %v1745
        %v1795 = vunpack.c.h.b16 %v1745
        %v1796 = vunpack.c.l.b16 %v1746
        %v1797 = vunpack.c.l.b16 %v1747
        %v1798 = vunpack.c.h.b16 %v1747
        %v1799 = vunpack.c.l.b16 %v1748
        %v1800 = vunpack.c.l.b16 %v1749
        %v1801 = vunpack.c.h.b16 %v1749
        %v1802 = vunpack.c.l.b16 %v1750
        %v1803 = vpack.c.b16 %v1779, %v1776
        %v1804 = vpack.c.b16 %v1780, %v1777
        %v1805 = vpack.c.b16 %v1781, %v1778
        %v1806 = vpack.c.b16 %v1785, %v1782
        %v1807 = vpack.c.b16 %v1786, %v1783
        %v1808 = vpack.c.b16 %v1787, %v1784
        %v1809 = vpack.c.b16 %v1791, %v1788
        %v1810 = vpack.c.b16 %v1792, %v1789
        %v1811 = vpack.c.b16 %v1793, %v1790
        %v1812 = vpack.c.b16 %v1797, %v1794
        %v1813 = vpack.c.b16 %v1798, %v1795
        %v1814 = vpack.c.b16 %v1799, %v1796
        %v1815 = vpack.c.b16 %v1800, %v1800
        %v1816 = vpack.c.b16 %v1801, %v1801
        %v1817 = vpack.c.b16 %v1802, %v1802
        %v1831 = vsel %vm1486, %v1751, 0
        %v1834 = vsel %vm1490, %v1815, 0
        %v1837 = vsel %vm1490, %v1816, 0
        %v1840 = vsel %vm1490, %v1817, 0
        %1842 = vmatprep.subr.bf16.mxu0 %v1804
        %1843 = vmatpush1.bf16.msra.mxu0 %v1803
        %1844 = vmatprep.subr.bf16.mxu0 %v1807
        %1845 = vmatpush1.bf16.msra.mxu0 %v1806
        %1846 = vmatprep.subr.bf16.mxu0 %v1810
        %1847 = vmatpush1.bf16.msra.mxu0 %v1809
        %1848 = vmatprep.subr.bf16.mxu0 %v1813
        %1849 = vmatpush1.bf16.msra.mxu0 %v1812
        %1850 = vmatprep.subr.bf16.mxu0 %v1837
        %1851 = vmatpush1.bf16.msra.mxu0 %v1834
        %1852 = vmatprep.subr.bf16.mxu0 0
        %1853 = vmatpush1.bf16.msra.mxu0 0
        %1854 = vmatprep.subr.bf16.mxu0 0
        %1855 = vmatpush1.bf16.msra.mxu0 0
        %1856 = vmatprep.subr.bf16.mxu0 0
        %1857 = vmatpush1.bf16.msra.mxu0 0
        %1858 = vmatprep.subr.bf16.mxu0 0
        %1859 = vmatpush1.bf16.msra.mxu0 0
        %1860 = vmatprep.subr.bf16.mxu0 0
        %1861 = vmatpush1.bf16.msra.mxu0 0
        %1862 = vmatprep.subr.bf16.mxu0 0
        %1863 = vmatpush1.bf16.msra.mxu0 0
        %1864 = vmatprep.subr.bf16.mxu0 0
        %1865 = vmatpush1.bf16.msra.mxu0 0
        %1866 = vmatprep.subr.bf16.mxu0 0
        %1867 = vmatpush1.bf16.msra.mxu0 0
        %1868 = vmatprep.subr.bf16.mxu0 0
        %1869 = vmatpush1.bf16.msra.mxu0 0
        %1870 = vmatprep.subr.bf16.mxu0 0
        %1871 = vmatpush1.bf16.msra.mxu0 0
        %1872 = vmatprep.subr.bf16.mxu0 0
        %1873 = vmatpush1.bf16.msra.mxu0 0
        %1874 = vmatprep.mubr.bf16.mxu0 0
        %1875 = vmatmul.mubr.bf16.gmra.mrb[0].mxu0 %v1831
        %v1876 = vpop.f32.mrb[0].mxu0
        %v1877 = vadd.f32 %v1756, %v1876
        %v1878 = vpop.f32.mrb[0].mxu0
        %v1879 = vadd.f32 %v1756, %v1878
        %v1880 = vpop.f32.mrb[0].mxu0
        %v1881 = vpop.f32.mrb[0].mxu0
        %1882 = vdwg.mxu0
        %1883 = vmatprep.subr.bf16.mxu0 0
        %1884 = vmatpush1.bf16.msra.mxu0 %v1805
        %1885 = vmatprep.subr.bf16.mxu0 0
        %1886 = vmatpush1.bf16.msra.mxu0 %v1808
        %1887 = vmatprep.subr.bf16.mxu0 0
        %1888 = vmatpush1.bf16.msra.mxu0 %v1811
        %1889 = vmatprep.subr.bf16.mxu0 0
        %1890 = vmatpush1.bf16.msra.mxu0 %v1814
        %1891 = vmatprep.subr.bf16.mxu0 0
        %1892 = vmatpush1.bf16.msra.mxu0 %v1840
        %1893 = vmatprep.subr.bf16.mxu0 0
        %1894 = vmatpush1.bf16.msra.mxu0 0
        %1895 = vmatprep.subr.bf16.mxu0 0
        %1896 = vmatpush1.bf16.msra.mxu0 0
        %1897 = vmatprep.subr.bf16.mxu0 0
        %1898 = vmatpush1.bf16.msra.mxu0 0
        %1899 = vmatprep.subr.bf16.mxu0 0
        %1900 = vmatpush1.bf16.msra.mxu0 0
        %1901 = vmatprep.subr.bf16.mxu0 0
        %1902 = vmatpush1.bf16.msra.mxu0 0
        %1903 = vmatprep.subr.bf16.mxu0 0
        %1904 = vmatpush1.bf16.msra.mxu0 0
        %1905 = vmatprep.subr.bf16.mxu0 0
        %1906 = vmatpush1.bf16.msra.mxu0 0
        %1907 = vmatprep.subr.bf16.mxu0 0
        %1908 = vmatpush1.bf16.msra.mxu0 0
        %1909 = vmatprep.subr.bf16.mxu0 0
        %1910 = vmatpush1.bf16.msra.mxu0 0
        %1911 = vmatprep.subr.bf16.mxu0 0
        %1912 = vmatpush1.bf16.msra.mxu0 0
        %1913 = vmatprep.subr.bf16.mxu0 0
        %1914 = vmatpush1.bf16.msra.mxu0 0
        %1915 = vmatprep.mubr.bf16.mxu0 0
        %1916 = vmatmul.mubr.bf16.gmra.mrb[0].mxu0 %v1831
        %v1917 = vpop.f32.mrb[0].mxu0
        %v1918 = vadd.f32 %v1756, %v1917
        %v1919 = vpop.f32.mrb[0].mxu0
        %v1920 = vpop.f32.mrb[0].mxu0
        %v1921 = vpop.f32.mrb[0].mxu0
        %1922 = vdwg.mxu0
        %v1923 = vmax.f32 %v1877, 0.0
        %v1924 = vmax.f32 %v1879, 0.0
        %v1925 = vmax.f32 %v1918, 0.0
        %v1926 = vpack.c.bf16 %v1923, %v1923
        %v1927 = vpack.c.bf16 %v1924, %v1924
        %v1928 = vpack.c.bf16 %v1925, %v1925
        %v1929 = vld [vmem:[#allocation6] sm:$0xf]
        %v1930 = vld [vmem:[#allocation6 + $0x4] sm:$0xf]
        %v1931 = vld [vmem:[#allocation6 + $0x8] sm:$0xf]
        %v1932 = vld [vmem:[#allocation6 + $0xc] sm:$0xf]
        %v1933 = vld [vmem:[#allocation6 + $0x10] sm:$0xf]
        %v1934 = vld [vmem:[#allocation6 + $0x14] sm:$0xf]
        %v1935 = vld [vmem:[#allocation6 + $0x18] sm:$0xf]
        %v1936 = vld [vmem:[#allocation6 + $0x1c] sm:$0xf]
        %v1937 = vld [vmem:[#allocation6 + $0x20] sm:$0xf]
        %v1938 = vld [vmem:[#allocation6 + $0x24] sm:$0xf]
        %v1939 = vld [vmem:[#allocation6 + $0x28] sm:$0xf]
        %v1940 = vld [vmem:[#allocation6 + $0x2c] sm:$0xf]
        %v1941 = vld [vmem:[#allocation6 + $0x30] sm:$0xf]
        %v1942 = vld [vmem:[#allocation6 + $0x34] sm:$0xf]
        %v1943 = vld [vmem:[#allocation6 + $0x38] sm:$0xf]
        %v1944 = vld [vmem:[#allocation6 + $0x3c] sm:$0xf]
        %v1945 = vld [vmem:[#allocation6 + $0x40] sm:$0xf]
        %v1946 = vld [vmem:[#allocation6 + $0x44] sm:$0xf]
        %v1947 = vld [vmem:[#allocation6 + $0x48] sm:$0xf]
        %v1948 = vld [vmem:[#allocation6 + $0x4c] sm:$0xf]
        %v1949 = vld [vmem:[#allocation6 + $0x50] sm:$0xf]
        %v1950 = vld [vmem:[#allocation6 + $0x54] sm:$0xf]
        %v1951 = vld [vmem:[#allocation6 + $0x58] sm:$0xf]
        %v1952 = vld [vmem:[#allocation6 + $0x5c] sm:$0xf]
        %v1953 = vld [vmem:[#allocation6 + $0x60] sm:$0xf]
        %v1954 = vld [vmem:[#allocation6 + $0x64] sm:$0xf]
        %v1955 = vld [vmem:[#allocation6 + $0x68] sm:$0xf]
        %v1956 = vld [vmem:[#allocation6 + $0x6c] sm:$0xf]
        %v1957 = vld [vmem:[#allocation6 + $0x70] sm:$0xf]
        %v1958 = vld [vmem:[#allocation6 + $0x74] sm:$0xf]
        %v1959 = vld [vmem:[#allocation6 + $0x78] sm:$0xf]
        %v1960 = vld [vmem:[#allocation6 + $0x7c] sm:$0xf]
        %v1961 = vld [vmem:[#allocation6 + $0x80] sm:$0xf]
        %v1962 = vld [vmem:[#allocation6 + $0x84] sm:$0xf]
        %v1963 = vld [vmem:[#allocation6 + $0x88] sm:$0xf]
        %v1964 = vld [vmem:[#allocation6 + $0x8c] sm:$0xf]
        %v1965 = vld [vmem:[#allocation6 + $0x90] sm:$0xf]
        %v1966 = vld [vmem:[#allocation6 + $0x94] sm:$0xf]
        %v1967 = vld [vmem:[#allocation6 + $0x98] sm:$0xf]
        %v1968 = vld [vmem:[#allocation6 + $0x9c] sm:$0xf]
        %v1969 = vld [vmem:[#allocation6 + $0xa0] sm:$0xf]
        %v1970 = vld [vmem:[#allocation6 + $0xa4] sm:$0xf]
        %v1971 = vld [vmem:[#allocation6 + $0xa8] sm:$0xf]
        %v1972 = vld [vmem:[#allocation6 + $0xac] sm:$0xf]
        %v1973 = vld [vmem:[#allocation6 + $0xb0] sm:$0xf]
        %v1974 = vld [vmem:[#allocation6 + $0xb4] sm:$0xf]
        %v1975 = vld [vmem:[#allocation6 + $0xb8] sm:$0xf]
        %v1976 = vld [vmem:[#allocation6 + $0xbc] sm:$0xf]
        %v2025 = vunpack.c.l.b16 %v1929
        %v2026 = vunpack.c.l.b16 %v1930
        %v2027 = vunpack.c.l.b16 %v1931
        %v2028 = vunpack.c.l.b16 %v1932
        %v2029 = vunpack.c.l.b16 %v1933
        %v2030 = vunpack.c.l.b16 %v1934
        %v2031 = vunpack.c.l.b16 %v1935
        %v2032 = vunpack.c.l.b16 %v1936
        %v2033 = vunpack.c.l.b16 %v1937
        %v2034 = vunpack.c.l.b16 %v1938
        %v2035 = vunpack.c.l.b16 %v1939
        %v2036 = vunpack.c.l.b16 %v1940
        %v2037 = vunpack.c.l.b16 %v1941
        %v2038 = vunpack.c.l.b16 %v1942
        %v2039 = vunpack.c.l.b16 %v1943
        %v2040 = vunpack.c.l.b16 %v1944
        %v2041 = vunpack.c.l.b16 %v1945
        %v2042 = vunpack.c.l.b16 %v1946
        %v2043 = vunpack.c.l.b16 %v1947
        %v2044 = vunpack.c.l.b16 %v1948
        %v2045 = vunpack.c.l.b16 %v1949
        %v2046 = vunpack.c.l.b16 %v1950
        %v2047 = vunpack.c.l.b16 %v1951
        %v2048 = vunpack.c.l.b16 %v1952
        %v2049 = vunpack.c.l.b16 %v1953
        %v2050 = vunpack.c.l.b16 %v1954
        %v2051 = vunpack.c.l.b16 %v1955
        %v2052 = vunpack.c.l.b16 %v1956
        %v2053 = vunpack.c.l.b16 %v1957
        %v2054 = vunpack.c.l.b16 %v1958
        %v2055 = vunpack.c.l.b16 %v1959
        %v2056 = vunpack.c.l.b16 %v1960
        %v2057 = vunpack.c.l.b16 %v1961
        %v2058 = vunpack.c.l.b16 %v1962
        %v2059 = vunpack.c.l.b16 %v1963
        %v2060 = vunpack.c.l.b16 %v1964
        %v2061 = vunpack.c.l.b16 %v1965
        %v2062 = vunpack.c.l.b16 %v1966
        %v2063 = vunpack.c.l.b16 %v1967
        %v2064 = vunpack.c.l.b16 %v1968
        %v2065 = vunpack.c.l.b16 %v1969
        %v2066 = vunpack.c.l.b16 %v1970
        %v2067 = vunpack.c.l.b16 %v1971
        %v2068 = vunpack.c.l.b16 %v1972
        %v2069 = vunpack.c.l.b16 %v1973
        %v2070 = vunpack.c.l.b16 %v1974
        %v2071 = vunpack.c.l.b16 %v1975
        %v2072 = vunpack.c.l.b16 %v1976
        %v2073 = vpack.c.b16 %v2026, %v2025
        %v2074 = vpack.c.b16 %v2028, %v2027
        %v2075 = vpack.c.b16 %v2030, %v2029
        %v2076 = vpack.c.b16 %v2032, %v2031
        %v2077 = vpack.c.b16 %v2034, %v2033
        %v2078 = vpack.c.b16 %v2036, %v2035
        %v2079 = vpack.c.b16 %v2038, %v2037
        %v2080 = vpack.c.b16 %v2040, %v2039
        %v2081 = vpack.c.b16 %v2042, %v2041
        %v2082 = vpack.c.b16 %v2044, %v2043
        %v2083 = vpack.c.b16 %v2046, %v2045
        %v2084 = vpack.c.b16 %v2048, %v2047
        %v2085 = vpack.c.b16 %v2050, %v2049
        %v2086 = vpack.c.b16 %v2052, %v2051
        %v2087 = vpack.c.b16 %v2054, %v2053
        %v2088 = vpack.c.b16 %v2056, %v2055
        %v2089 = vpack.c.b16 %v2058, %v2057
        %v2090 = vpack.c.b16 %v2060, %v2059
        %v2091 = vpack.c.b16 %v2062, %v2061
        %v2092 = vpack.c.b16 %v2064, %v2063
        %v2093 = vpack.c.b16 %v2066, %v2065
        %v2094 = vpack.c.b16 %v2068, %v2067
        %v2095 = vpack.c.b16 %v2070, %v2069
        %v2096 = vpack.c.b16 %v2072, %v2071
        %2121 = vmatprep.subr.bf16.mxu0 0
        %2122 = vmatpush1.bf16.msra.mxu0 %v2073
        %2123 = vmatprep.subr.bf16.mxu0 0
        %2124 = vmatpush1.bf16.msra.mxu0 %v2074
        %2125 = vmatprep.subr.bf16.mxu0 0
        %2126 = vmatpush1.bf16.msra.mxu0 %v2075
        %2127 = vmatprep.subr.bf16.mxu0 0
        %2128 = vmatpush1.bf16.msra.mxu0 %v2076
        %2129 = vmatprep.subr.bf16.mxu0 0
        %2130 = vmatpush1.bf16.msra.mxu0 %v2077
        %2131 = vmatprep.subr.bf16.mxu0 0
        %2132 = vmatpush1.bf16.msra.mxu0 %v2078
        %2133 = vmatprep.subr.bf16.mxu0 0
        %2134 = vmatpush1.bf16.msra.mxu0 %v2079
        %2135 = vmatprep.subr.bf16.mxu0 0
        %2136 = vmatpush1.bf16.msra.mxu0 %v2080
        %2137 = vmatprep.subr.bf16.mxu0 0
        %2138 = vmatpush1.bf16.msra.mxu0 %v2081
        %2139 = vmatprep.subr.bf16.mxu0 0
        %2140 = vmatpush1.bf16.msra.mxu0 %v2082
        %2141 = vmatprep.subr.bf16.mxu0 0
        %2142 = vmatpush1.bf16.msra.mxu0 %v2083
        %2143 = vmatprep.subr.bf16.mxu0 0
        %2144 = vmatpush1.bf16.msra.mxu0 %v2084
        %2145 = vmatprep.subr.bf16.mxu0 0
        %2146 = vmatpush1.bf16.msra.mxu0 %v2085
        %2147 = vmatprep.subr.bf16.mxu0 0
        %2148 = vmatpush1.bf16.msra.mxu0 %v2086
        %2149 = vmatprep.subr.bf16.mxu0 0
        %2150 = vmatpush1.bf16.msra.mxu0 %v2087
        %2151 = vmatprep.subr.bf16.mxu0 0
        %2152 = vmatpush1.bf16.msra.mxu0 %v2088
        %2153 = vmatprep.mubr.bf16.mxu0 %v1927
        %2154 = vmatmul.mubr.bf16.gmra.mrb[0].mxu0 %v1926
        %v2155 = vpop.f32.mrb[0].mxu0
        %v2156 = vadd.f32 0.0, %v2155
        %v2157 = vpop.f32.mrb[0].mxu0
        %v2158 = vpop.f32.mrb[0].mxu0
        %v2159 = vpop.f32.mrb[0].mxu0
        %2160 = vdwg.mxu0
        %2161 = vmatprep.subr.bf16.mxu0 0
        %2162 = vmatpush1.bf16.msra.mxu0 %v2089
        %2163 = vmatprep.subr.bf16.mxu0 0
        %2164 = vmatpush1.bf16.msra.mxu0 %v2090
        %2165 = vmatprep.subr.bf16.mxu0 0
        %2166 = vmatpush1.bf16.msra.mxu0 %v2091
        %2167 = vmatprep.subr.bf16.mxu0 0
        %2168 = vmatpush1.bf16.msra.mxu0 %v2092
        %2169 = vmatprep.subr.bf16.mxu0 0
        %2170 = vmatpush1.bf16.msra.mxu0 %v2093
        %2171 = vmatprep.subr.bf16.mxu0 0
        %2172 = vmatpush1.bf16.msra.mxu0 %v2094
        %2173 = vmatprep.subr.bf16.mxu0 0
        %2174 = vmatpush1.bf16.msra.mxu0 %v2095
        %2175 = vmatprep.subr.bf16.mxu0 0
        %2176 = vmatpush1.bf16.msra.mxu0 %v2096
        %2177 = vmatprep.subr.bf16.mxu0 0
        %2178 = vmatpush1.bf16.msra.mxu0 0
        %2179 = vmatprep.subr.bf16.mxu0 0
        %2180 = vmatpush1.bf16.msra.mxu0 0
        %2181 = vmatprep.subr.bf16.mxu0 0
        %2182 = vmatpush1.bf16.msra.mxu0 0
        %2183 = vmatprep.subr.bf16.mxu0 0
        %2184 = vmatpush1.bf16.msra.mxu0 0
        %2185 = vmatprep.subr.bf16.mxu0 0
        %2186 = vmatpush1.bf16.msra.mxu0 0
        %2187 = vmatprep.subr.bf16.mxu0 0
        %2188 = vmatpush1.bf16.msra.mxu0 0
        %2189 = vmatprep.subr.bf16.mxu0 0
        %2190 = vmatpush1.bf16.msra.mxu0 0
        %2191 = vmatprep.subr.bf16.mxu0 0
        %2192 = vmatpush1.bf16.msra.mxu0 0
        %2193 = vmatprep.mubr.bf16.mxu0 0
        %2194 = vmatmul.mubr.bf16.gmra.mrb[0].mxu0 %v1928
        %v2195 = vpop.f32.mrb[0].mxu0
        %v2196 = vadd.f32 %v2156, %v2195
        %v2197 = vpop.f32.mrb[0].mxu0
        %v2198 = vpop.f32.mrb[0].mxu0
        %v2199 = vpop.f32.mrb[0].mxu0
        %2200 = vdwg.mxu0
        %v2201 = vpack.c.bf16 %v2196, %v2196
        %2202 = vst [vmem:[#allocation4] sm:$0xf] %v2201
        %v2203 = vld [vmem:[#allocation4] sm:$0xf]
        %2205 = vrot.lane.b32.xlu0 %v2203, 11
        %v2206 = vpop.permute.xlu0 %2205
        %vm2208 = vcmask 1043544
        %2209 = vst.msk [vmem:[#allocation2] sm:$0xf] %vm2208, %v2206
        %v2210 = vld [vmem:[#allocation4] sm:$0xf]
        %2212 = vrot.lane.b32.xlu0 %v2210, 10
        %v2213 = vpop.permute.xlu0 %2212
        %vm2215 = vcmask 1043536
        %2216 = vst.msk [vmem:[#allocation2 + $0xc] sm:$0xf] %vm2215, %v2213
        %v2217 = vld [vmem:[#allocation4] sm:$0xf]
        %2219 = vrot.lane.b32.xlu0 %v2217, 9
        %v2220 = vpop.permute.xlu0 %2219
        %vm2222 = vcmask 1043528
        %2223 = vst.msk [vmem:[#allocation2 + $0x18] sm:$0xf] %vm2222, %v2220
        %v2224 = vld [vmem:[#allocation4] sm:$0xf]
        %2226 = vrot.lane.b32.xlu0 %v2224, 1
        %v2227 = vpop.permute.xlu0 %2226
        %2229 = vst.msk [vmem:[#allocation2 + $0x24] sm:$0xf] %vm1313, %v2227
        %v2230 = vld [vmem:[#allocation4] sm:$0xf]
        %2231 = vst [vmem:[#allocation2 + $0x30] sm:$0xf] %v2230
        %v2232 = vld [vmem:[#allocation4] sm:$0xf]
        %2234 = vrot.lane.b32.xlu0 %v2232, 127
        %v2235 = vpop.permute.xlu0 %2234
        %2237 = vst.msk [vmem:[#allocation2 + $0x3c] sm:$0xf] %vm1336, %v2235
        %v2238 = vld [vmem:[#allocation4] sm:$0xf]
        %2240 = vrot.lane.b32.xlu0 %v2238, 119
        %v2241 = vpop.permute.xlu0 %2240
        %vm2243 = vcmask 969728
        %2244 = vst.msk [vmem:[#allocation2 + $0x48] sm:$0xf] %vm2243, %v2241
        %v2245 = vld [vmem:[#allocation4] sm:$0xf]
        %2247 = vrot.lane.b32.xlu0 %v2245, 118
        %v2248 = vpop.permute.xlu0 %2247
        %vm2250 = vcmask 961536
        %2251 = vst.msk [vmem:[#allocation2 + $0x54] sm:$0xf] %vm2250, %v2248
        %v2252 = vld [vmem:[#allocation4] sm:$0xf]
        %2254 = vrot.lane.b32.xlu0 %v2252, 117
        %v2255 = vpop.permute.xlu0 %2254
        %vm2257 = vcmask 953344
        %2258 = vst.msk [vmem:[#allocation2 + $0x60] sm:$0xf] %vm2257, %v2255
        %v2259 = vld [vmem:[#allocation2] sm:$0xf]
        %v2260 = vld [vmem:[#allocation2 + $0xc] sm:$0xf]
        %v2261 = vld [vmem:[#allocation2 + $0x18] sm:$0xf]
        %v2262 = vld [vmem:[#allocation2 + $0x24] sm:$0xf]
        %v2263 = vld [vmem:[#allocation2 + $0x30] sm:$0xf]
        %v2264 = vld [vmem:[#allocation2 + $0x3c] sm:$0xf]
        %v2265 = vld [vmem:[#allocation2 + $0x48] sm:$0xf]
        %v2266 = vld [vmem:[#allocation2 + $0x54] sm:$0xf]
        %v2267 = vld [vmem:[#allocation2 + $0x60] sm:$0xf]
        %v2268 = vld [vmem:[%s7] sm:$0xf]
        %v2269 = vld [vmem:[%s8] sm:$0xff]
        %2271 = vset.pattern.permute.xlu0 0
        %2272 = vperm.xlu0 %2271, %v2269
        %v2273 = vpop.permute.xlu0 %2272
        %v2284 = vunpack.c.l.b16 %v2259
        %v2285 = vunpack.c.l.b16 %v2260
        %v2286 = vunpack.c.l.b16 %v2261
        %v2287 = vunpack.c.l.b16 %v2262
        %v2288 = vunpack.c.l.b16 %v2263
        %v2289 = vunpack.c.l.b16 %v2264
        %v2290 = vunpack.c.l.b16 %v2265
        %v2291 = vunpack.c.l.b16 %v2266
        %v2292 = vunpack.c.l.b16 %v2267
        %v2293 = vpack.c.b16 %v2285, %v2284
        %v2294 = vpack.c.b16 %v2287, %v2286
        %v2295 = vpack.c.b16 %v2289, %v2288
        %v2296 = vpack.c.b16 %v2291, %v2290
        %v2297 = vpack.c.b16 %v2292, %v2292
        %v2303 = vsel %vm1486, %v2268, 0
        %v2306 = vsel %vm1490, %v2297, 0
        %2308 = vmatprep.subr.bf16.mxu0 0
        %2309 = vmatpush1.bf16.msra.mxu0 %v2293
        %2310 = vmatprep.subr.bf16.mxu0 0
        %2311 = vmatpush1.bf16.msra.mxu0 %v2294
        %2312 = vmatprep.subr.bf16.mxu0 0
        %2313 = vmatpush1.bf16.msra.mxu0 %v2295
        %2314 = vmatprep.subr.bf16.mxu0 0
        %2315 = vmatpush1.bf16.msra.mxu0 %v2296
        %2316 = vmatprep.subr.bf16.mxu0 0
        %2317 = vmatpush1.bf16.msra.mxu0 %v2306
        %2318 = vmatprep.subr.bf16.mxu0 0
        %2319 = vmatpush1.bf16.msra.mxu0 0
        %2320 = vmatprep.subr.bf16.mxu0 0
        %2321 = vmatpush1.bf16.msra.mxu0 0
        %2322 = vmatprep.subr.bf16.mxu0 0
        %2323 = vmatpush1.bf16.msra.mxu0 0
        %2324 = vmatprep.subr.bf16.mxu0 0
        %2325 = vmatpush1.bf16.msra.mxu0 0
        %2326 = vmatprep.subr.bf16.mxu0 0
        %2327 = vmatpush1.bf16.msra.mxu0 0
        %2328 = vmatprep.subr.bf16.mxu0 0
        %2329 = vmatpush1.bf16.msra.mxu0 0
        %2330 = vmatprep.subr.bf16.mxu0 0
        %2331 = vmatpush1.bf16.msra.mxu0 0
        %2332 = vmatprep.subr.bf16.mxu0 0
        %2333 = vmatpush1.bf16.msra.mxu0 0
        %2334 = vmatprep.subr.bf16.mxu0 0
        %2335 = vmatpush1.bf16.msra.mxu0 0
        %2336 = vmatprep.subr.bf16.mxu0 0
        %2337 = vmatpush1.bf16.msra.mxu0 0
        %2338 = vmatprep.subr.bf16.mxu0 0
        %2339 = vmatpush1.bf16.msra.mxu0 0
        %2340 = vmatprep.mubr.bf16.mxu0 0
        %2341 = vmatmul.mubr.bf16.gmra.mrb[0].mxu0 %v2303
        %v2342 = vpop.f32.mrb[0].mxu0
        %v2343 = vadd.f32 %v2273, %v2342
        %v2344 = vpop.f32.mrb[0].mxu0
        %v2345 = vpop.f32.mrb[0].mxu0
        %v2346 = vpop.f32.mrb[0].mxu0
        %2347 = vdwg.mxu0
        %2348 = vst [vmem:[%s621] sm:$0xff] %v2343
        %vm2349 = vcmp.gt.f32.partialorder %v656, 0.0
        %v2350 = vmax.f32 %v2343, 0.0
        %v2351 = vsel %vm2349, 1, 0
        %v2352 = vlaneseq
        %v2353 = vshrl.u32 %v2352, 7
        %v2354 = vsub.s32 0, %v2353
        %v2355 = vrot.slane %v2351, %v2354
        %vm2356 = vcmp.eq.s32.totalorder %v2355, 1
        %v2357 = vsel %vm2356, %v2350, 0.0
        %v2358 = vpack.c.bf16 %v2357, %v2357
        %2359 = vst [vmem:[#allocation4] sm:$0xf] %v2358
        %v2360 = vld [vmem:[#allocation4] sm:$0xf]
        %2362 = vrot.lane.b32.xlu0 %v2360, 11
        %v2363 = vpop.permute.xlu0 %2362
        %2365 = vst.msk [vmem:[#allocation2] sm:$0xf] %vm2208, %v2363
        %v2366 = vld [vmem:[#allocation4] sm:$0xf]
        %2368 = vrot.lane.b32.xlu0 %v2366, 10
        %v2369 = vpop.permute.xlu0 %2368
        %2371 = vst.msk [vmem:[#allocation2 + $0xc] sm:$0xf] %vm2215, %v2369
        %v2372 = vld [vmem:[#allocation4] sm:$0xf]
        %2374 = vrot.lane.b32.xlu0 %v2372, 9
        %v2375 = vpop.permute.xlu0 %2374
        %2377 = vst.msk [vmem:[#allocation2 + $0x18] sm:$0xf] %vm2222, %v2375
        %v2378 = vld [vmem:[#allocation4] sm:$0xf]
        %2380 = vrot.lane.b32.xlu0 %v2378, 1
        %v2381 = vpop.permute.xlu0 %2380
        %2383 = vst.msk [vmem:[#allocation2 + $0x24] sm:$0xf] %vm1313, %v2381
        %v2384 = vld [vmem:[#allocation4] sm:$0xf]
        %2385 = vst [vmem:[#allocation2 + $0x30] sm:$0xf] %v2384
        %v2386 = vld [vmem:[#allocation4] sm:$0xf]
        %2388 = vrot.lane.b32.xlu0 %v2386, 127
        %v2389 = vpop.permute.xlu0 %2388
        %2391 = vst.msk [vmem:[#allocation2 + $0x3c] sm:$0xf] %vm1336, %v2389
        %v2392 = vld [vmem:[#allocation4] sm:$0xf]
        %2394 = vrot.lane.b32.xlu0 %v2392, 119
        %v2395 = vpop.permute.xlu0 %2394
        %2397 = vst.msk [vmem:[#allocation2 + $0x48] sm:$0xf] %vm2243, %v2395
        %v2398 = vld [vmem:[#allocation4] sm:$0xf]
        %2400 = vrot.lane.b32.xlu0 %v2398, 118
        %v2401 = vpop.permute.xlu0 %2400
        %2403 = vst.msk [vmem:[#allocation2 + $0x54] sm:$0xf] %vm2250, %v2401
        %v2404 = vld [vmem:[#allocation4] sm:$0xf]
        %2406 = vrot.lane.b32.xlu0 %v2404, 117
        %v2407 = vpop.permute.xlu0 %2406
        %2409 = vst.msk [vmem:[#allocation2 + $0x60] sm:$0xf] %vm2257, %v2407
        %v2410 = vld [vmem:[#allocation2] sm:$0xf]
        %v2411 = vld [vmem:[#allocation2 + $0xc] sm:$0xf]
        %v2412 = vld [vmem:[#allocation2 + $0x18] sm:$0xf]
        %v2413 = vld [vmem:[#allocation2 + $0x24] sm:$0xf]
        %v2414 = vld [vmem:[#allocation2 + $0x30] sm:$0xf]
        %v2415 = vld [vmem:[#allocation2 + $0x3c] sm:$0xf]
        %v2416 = vld [vmem:[#allocation2 + $0x48] sm:$0xf]
        %v2417 = vld [vmem:[#allocation2 + $0x54] sm:$0xf]
        %v2418 = vld [vmem:[#allocation2 + $0x60] sm:$0xf]
        %v2419 = vld [vmem:[%s9] sm:$0xf]
        %v2420 = vld [vmem:[%s10] sm:$0xff]
        %2422 = vset.pattern.permute.xlu0 0
        %2423 = vperm.xlu0 %2422, %v2420
        %v2424 = vpop.permute.xlu0 %2423
        %v2435 = vunpack.c.l.b16 %v2410
        %v2436 = vunpack.c.l.b16 %v2411
        %v2437 = vunpack.c.l.b16 %v2412
        %v2438 = vunpack.c.l.b16 %v2413
        %v2439 = vunpack.c.l.b16 %v2414
        %v2440 = vunpack.c.l.b16 %v2415
        %v2441 = vunpack.c.l.b16 %v2416
        %v2442 = vunpack.c.l.b16 %v2417
        %v2443 = vunpack.c.l.b16 %v2418
        %v2444 = vpack.c.b16 %v2436, %v2435
        %v2445 = vpack.c.b16 %v2438, %v2437
        %v2446 = vpack.c.b16 %v2440, %v2439
        %v2447 = vpack.c.b16 %v2442, %v2441
        %v2448 = vpack.c.b16 %v2443, %v2443
        %v2454 = vsel %vm1486, %v2419, 0
        %v2457 = vsel %vm1490, %v2448, 0
        %2459 = vmatprep.subr.bf16.mxu0 0
        %2460 = vmatpush1.bf16.msra.mxu0 %v2444
        %2461 = vmatprep.subr.bf16.mxu0 0
        %2462 = vmatpush1.bf16.msra.mxu0 %v2445
        %2463 = vmatprep.subr.bf16.mxu0 0
        %2464 = vmatpush1.bf16.msra.mxu0 %v2446
        %2465 = vmatprep.subr.bf16.mxu0 0
        %2466 = vmatpush1.bf16.msra.mxu0 %v2447
        %2467 = vmatprep.subr.bf16.mxu0 0
        %2468 = vmatpush1.bf16.msra.mxu0 %v2457
        %2469 = vmatprep.subr.bf16.mxu0 0
        %2470 = vmatpush1.bf16.msra.mxu0 0
        %2471 = vmatprep.subr.bf16.mxu0 0
        %2472 = vmatpush1.bf16.msra.mxu0 0
        %2473 = vmatprep.subr.bf16.mxu0 0
        %2474 = vmatpush1.bf16.msra.mxu0 0
        %2475 = vmatprep.subr.bf16.mxu0 0
        %2476 = vmatpush1.bf16.msra.mxu0 0
        %2477 = vmatprep.subr.bf16.mxu0 0
        %2478 = vmatpush1.bf16.msra.mxu0 0
        %2479 = vmatprep.subr.bf16.mxu0 0
        %2480 = vmatpush1.bf16.msra.mxu0 0
        %2481 = vmatprep.subr.bf16.mxu0 0
        %2482 = vmatpush1.bf16.msra.mxu0 0
        %2483 = vmatprep.subr.bf16.mxu0 0
        %2484 = vmatpush1.bf16.msra.mxu0 0
        %2485 = vmatprep.subr.bf16.mxu0 0
        %2486 = vmatpush1.bf16.msra.mxu0 0
        %2487 = vmatprep.subr.bf16.mxu0 0
        %2488 = vmatpush1.bf16.msra.mxu0 0
        %2489 = vmatprep.subr.bf16.mxu0 0
        %2490 = vmatpush1.bf16.msra.mxu0 0
        %2491 = vmatprep.mubr.bf16.mxu0 0
        %2492 = vmatmul.mubr.bf16.gmra.mrb[0].mxu0 %v2454
        %v2493 = vpop.f32.mrb[0].mxu0
        %v2494 = vadd.f32 %v2424, %v2493
        %v2495 = vpop.f32.mrb[0].mxu0
        %v2496 = vpop.f32.mrb[0].mxu0
        %v2497 = vpop.f32.mrb[0].mxu0
        %2498 = vdwg.mxu0
        %v2499 = vmax.f32 %v2494, 0.0
        %v2500 = vpack.c.bf16 %v2499, %v2499
        %v2501 = vld [vmem:[%s16] sm:$0xf]
        %v2502 = vld [vmem:[%s16 + $0x4] sm:$0xf]
        %v2503 = vld [vmem:[%s16 + $0x8] sm:$0xf]
        %v2504 = vld [vmem:[%s16 + $0xc] sm:$0xf]
        %v2505 = vld [vmem:[%s16 + $0x10] sm:$0xf]
        %v2506 = vld [vmem:[%s16 + $0x14] sm:$0xf]
        %v2507 = vld [vmem:[%s16 + $0x18] sm:$0xf]
        %v2508 = vld [vmem:[%s16 + $0x1c] sm:$0xf]
        %v2509 = vld [vmem:[%s16 + $0x20] sm:$0xf]
        %v2510 = vld [vmem:[%s16 + $0x24] sm:$0xf]
        %v2511 = vld [vmem:[%s16 + $0x28] sm:$0xf]
        %v2512 = vld [vmem:[%s16 + $0x2c] sm:$0xf]
        %v2513 = vld [vmem:[%s16 + $0x30] sm:$0xf]
        %v2514 = vld [vmem:[%s16 + $0x34] sm:$0xf]
        %v2515 = vld [vmem:[%s16 + $0x38] sm:$0xf]
        %v2516 = vld [vmem:[%s16 + $0x3c] sm:$0xf]
        %v2533 = vunpack.c.l.b16 %v2501
        %v2534 = vunpack.c.l.b16 %v2502
        %v2535 = vunpack.c.l.b16 %v2503
        %v2536 = vunpack.c.l.b16 %v2504
        %v2537 = vunpack.c.l.b16 %v2505
        %v2538 = vunpack.c.l.b16 %v2506
        %v2539 = vunpack.c.l.b16 %v2507
        %v2540 = vunpack.c.l.b16 %v2508
        %v2541 = vunpack.c.l.b16 %v2509
        %v2542 = vunpack.c.l.b16 %v2510
        %v2543 = vunpack.c.l.b16 %v2511
        %v2544 = vunpack.c.l.b16 %v2512
        %v2545 = vunpack.c.l.b16 %v2513
        %v2546 = vunpack.c.l.b16 %v2514
        %v2547 = vunpack.c.l.b16 %v2515
        %v2548 = vunpack.c.l.b16 %v2516
        %v2549 = vpack.c.b16 %v2534, %v2533
        %v2550 = vpack.c.b16 %v2536, %v2535
        %v2551 = vpack.c.b16 %v2538, %v2537
        %v2552 = vpack.c.b16 %v2540, %v2539
        %v2553 = vpack.c.b16 %v2542, %v2541
        %v2554 = vpack.c.b16 %v2544, %v2543
        %v2555 = vpack.c.b16 %v2546, %v2545
        %v2556 = vpack.c.b16 %v2548, %v2547
        %2565 = vmatprep.subr.bf16.mxu0 0
        %2566 = vmatpush1.bf16.msra.mxu0 %v2549
        %2567 = vmatprep.subr.bf16.mxu0 0
        %2568 = vmatpush1.bf16.msra.mxu0 %v2550
        %2569 = vmatprep.subr.bf16.mxu0 0
        %2570 = vmatpush1.bf16.msra.mxu0 %v2551
        %2571 = vmatprep.subr.bf16.mxu0 0
        %2572 = vmatpush1.bf16.msra.mxu0 %v2552
        %2573 = vmatprep.subr.bf16.mxu0 0
        %2574 = vmatpush1.bf16.msra.mxu0 %v2553
        %2575 = vmatprep.subr.bf16.mxu0 0
        %2576 = vmatpush1.bf16.msra.mxu0 %v2554
        %2577 = vmatprep.subr.bf16.mxu0 0
        %2578 = vmatpush1.bf16.msra.mxu0 %v2555
        %2579 = vmatprep.subr.bf16.mxu0 0
        %2580 = vmatpush1.bf16.msra.mxu0 %v2556
        %2581 = vmatprep.subr.bf16.mxu0 0
        %2582 = vmatpush1.bf16.msra.mxu0 0
        %2583 = vmatprep.subr.bf16.mxu0 0
        %2584 = vmatpush1.bf16.msra.mxu0 0
        %2585 = vmatprep.subr.bf16.mxu0 0
        %2586 = vmatpush1.bf16.msra.mxu0 0
        %2587 = vmatprep.subr.bf16.mxu0 0
        %2588 = vmatpush1.bf16.msra.mxu0 0
        %2589 = vmatprep.subr.bf16.mxu0 0
        %2590 = vmatpush1.bf16.msra.mxu0 0
        %2591 = vmatprep.subr.bf16.mxu0 0
        %2592 = vmatpush1.bf16.msra.mxu0 0
        %2593 = vmatprep.subr.bf16.mxu0 0
        %2594 = vmatpush1.bf16.msra.mxu0 0
        %2595 = vmatprep.subr.bf16.mxu0 0
        %2596 = vmatpush1.bf16.msra.mxu0 0
        %2597 = vmatprep.mubr.bf16.mxu0 0
        %2598 = vmatmul.mubr.bf16.gmra.mrb[0].mxu0 %v2500
        %v2599 = vpop.f32.mrb[0].mxu0
        %v2600 = vadd.f32 0.0, %v2599
        %v2601 = vpop.f32.mrb[0].mxu0
        %v2602 = vpop.f32.mrb[0].mxu0
        %v2603 = vpop.f32.mrb[0].mxu0
        %2604 = vdwg.mxu0
        %v2605 = vpack.c.bf16 %v2600, %v2600
        %2606 = vst [vmem:[#allocation5] sm:$0xf] %v2605
        %v2607 = vld [vmem:[#allocation5] sm:$0xf]
        %2609 = vrot.lane.b32.xlu0 %v2607, 7
        %v2610 = vpop.permute.xlu0 %2609
        %vm2612 = vcmask 1043512
        %2613 = vst.msk [vmem:[#allocation2] sm:$0xf] %vm2612, %v2610
        %v2614 = vld [vmem:[#allocation5] sm:$0xf]
        %2616 = vrot.lane.b32.xlu0 %v2614, 6
        %v2617 = vpop.permute.xlu0 %2616
        %vm2619 = vcmask 1043504
        %2620 = vst.msk [vmem:[#allocation2 + $0xc] sm:$0xf] %vm2619, %v2617
        %v2621 = vld [vmem:[#allocation5] sm:$0xf]
        %2623 = vrot.lane.b32.xlu0 %v2621, 5
        %v2624 = vpop.permute.xlu0 %2623
        %vm2626 = vcmask 1043496
        %2627 = vst.msk [vmem:[#allocation2 + $0x18] sm:$0xf] %vm2626, %v2624
        %v2628 = vld [vmem:[#allocation5] sm:$0xf]
        %2630 = vrot.lane.b32.xlu0 %v2628, 1
        %v2631 = vpop.permute.xlu0 %2630
        %2633 = vst.msk [vmem:[#allocation2 + $0x24] sm:$0xf] %vm1313, %v2631
        %v2634 = vld [vmem:[#allocation5] sm:$0xf]
        %2635 = vst [vmem:[#allocation2 + $0x30] sm:$0xf] %v2634
        %v2636 = vld [vmem:[#allocation5] sm:$0xf]
        %2638 = vrot.lane.b32.xlu0 %v2636, 127
        %v2639 = vpop.permute.xlu0 %2638
        %2641 = vst.msk [vmem:[#allocation2 + $0x3c] sm:$0xf] %vm1336, %v2639
        %v2642 = vld [vmem:[#allocation5] sm:$0xf]
        %2644 = vrot.lane.b32.xlu0 %v2642, 123
        %v2645 = vpop.permute.xlu0 %2644
        %vm2647 = vcmask 1002496
        %2648 = vst.msk [vmem:[#allocation2 + $0x48] sm:$0xf] %vm2647, %v2645
        %v2649 = vld [vmem:[#allocation5] sm:$0xf]
        %2651 = vrot.lane.b32.xlu0 %v2649, 122
        %v2652 = vpop.permute.xlu0 %2651
        %vm2654 = vcmask 994304
        %2655 = vst.msk [vmem:[#allocation2 + $0x54] sm:$0xf] %vm2654, %v2652
        %v2656 = vld [vmem:[#allocation5] sm:$0xf]
        %2658 = vrot.lane.b32.xlu0 %v2656, 121
        %v2659 = vpop.permute.xlu0 %2658
        %vm2661 = vcmask 986112
        %2662 = vst.msk [vmem:[#allocation2 + $0x60] sm:$0xf] %vm2661, %v2659
        %v2663 = vld [vmem:[#allocation2] sm:$0xf]
        %v2664 = vld [vmem:[#allocation2 + $0xc] sm:$0xf]
        %v2665 = vld [vmem:[#allocation2 + $0x18] sm:$0xf]
        %v2666 = vld [vmem:[#allocation2 + $0x24] sm:$0xf]
        %v2667 = vld [vmem:[#allocation2 + $0x30] sm:$0xf]
        %v2668 = vld [vmem:[#allocation2 + $0x3c] sm:$0xf]
        %v2669 = vld [vmem:[#allocation2 + $0x48] sm:$0xf]
        %v2670 = vld [vmem:[#allocation2 + $0x54] sm:$0xf]
        %v2671 = vld [vmem:[#allocation2 + $0x60] sm:$0xf]
        %v2672 = vld [vmem:[%s11] sm:$0xf]
        %v2673 = vld [vmem:[%s12] sm:$0xff]
        %2675 = vset.pattern.permute.xlu0 0
        %2676 = vperm.xlu0 %2675, %v2673
        %v2677 = vpop.permute.xlu0 %2676
        %v2688 = vunpack.c.l.b16 %v2663
        %v2689 = vunpack.c.l.b16 %v2664
        %v2690 = vunpack.c.l.b16 %v2665
        %v2691 = vunpack.c.l.b16 %v2666
        %v2692 = vunpack.c.l.b16 %v2667
        %v2693 = vunpack.c.l.b16 %v2668
        %v2694 = vunpack.c.l.b16 %v2669
        %v2695 = vunpack.c.l.b16 %v2670
        %v2696 = vunpack.c.l.b16 %v2671
        %v2697 = vpack.c.b16 %v2689, %v2688
        %v2698 = vpack.c.b16 %v2691, %v2690
        %v2699 = vpack.c.b16 %v2693, %v2692
        %v2700 = vpack.c.b16 %v2695, %v2694
        %v2701 = vpack.c.b16 %v2696, %v2696
        %v2707 = vsel %vm1486, %v2672, 0
        %v2710 = vsel %vm1490, %v2701, 0
        %2712 = vmatprep.subr.bf16.mxu0 0
        %2713 = vmatpush1.bf16.msra.mxu0 %v2697
        %2714 = vmatprep.subr.bf16.mxu0 0
        %2715 = vmatpush1.bf16.msra.mxu0 %v2698
        %2716 = vmatprep.subr.bf16.mxu0 0
        %2717 = vmatpush1.bf16.msra.mxu0 %v2699
        %2718 = vmatprep.subr.bf16.mxu0 0
        %2719 = vmatpush1.bf16.msra.mxu0 %v2700
        %2720 = vmatprep.subr.bf16.mxu0 0
        %2721 = vmatpush1.bf16.msra.mxu0 %v2710
        %2722 = vmatprep.subr.bf16.mxu0 0
        %2723 = vmatpush1.bf16.msra.mxu0 0
        %2724 = vmatprep.subr.bf16.mxu0 0
        %2725 = vmatpush1.bf16.msra.mxu0 0
        %2726 = vmatprep.subr.bf16.mxu0 0
        %2727 = vmatpush1.bf16.msra.mxu0 0
        %2728 = vmatprep.subr.bf16.mxu0 0
        %2729 = vmatpush1.bf16.msra.mxu0 0
        %2730 = vmatprep.subr.bf16.mxu0 0
        %2731 = vmatpush1.bf16.msra.mxu0 0
        %2732 = vmatprep.subr.bf16.mxu0 0
        %2733 = vmatpush1.bf16.msra.mxu0 0
        %2734 = vmatprep.subr.bf16.mxu0 0
        %2735 = vmatpush1.bf16.msra.mxu0 0
        %2736 = vmatprep.subr.bf16.mxu0 0
        %2737 = vmatpush1.bf16.msra.mxu0 0
        %2738 = vmatprep.subr.bf16.mxu0 0
        %2739 = vmatpush1.bf16.msra.mxu0 0
        %2740 = vmatprep.subr.bf16.mxu0 0
        %2741 = vmatpush1.bf16.msra.mxu0 0
        %2742 = vmatprep.subr.bf16.mxu0 0
        %2743 = vmatpush1.bf16.msra.mxu0 0
        %2744 = vmatprep.mubr.bf16.mxu0 0
        %2745 = vmatmul.mubr.bf16.gmra.mrb[0].mxu0 %v2707
        %v2746 = vpop.f32.mrb[0].mxu0
        %v2747 = vadd.f32 %v2677, %v2746
        %v2748 = vpop.f32.mrb[0].mxu0
        %v2749 = vpop.f32.mrb[0].mxu0
        %v2750 = vpop.f32.mrb[0].mxu0
        %2751 = vdwg.mxu0
        %2752 = vst [vmem:[%s628] sm:$0xff] %v2747
        %s2753 = sand.u32 %s408, 1
        %s2754 = scalar_lea.sflag [#allocation8], %s2753
        %s2755 = sand.u32 %s408, 1
        %s2756 = smul.addr %s2755, 24
        %s2757 = scalar_lea.vmem [#allocation9], %s2756
        %s2758 = sand.u32 %s38, 1
        %s2759 = scalar_lea.sflag [#allocation11], %s2758
        %s2760 = sand.u32 %s434, 1
        %s2761 = smul.addr %s2760, 8
        %s2762 = scalar_lea.vmem [#allocation10], %s2761
        %s2763 = sand.u32 %s38, 1
        %s2764 = scalar_lea.sflag [#allocation11], %s2763
        %s2765 = sand.u32 %s460, 1
        %s2766 = smul.addr %s2765, 8
        %s2767 = scalar_lea.vmem [#allocation12], %s2766
        // Predicated region
        $region93: #{tpu_custom_call.1} parent=87 // pred_check
          %p2768 = pneg %p418
        $region94: #{tpu_custom_call.1} parent=87 // pred_check_branch
          %2770 = sbr.rel (%p2768) target = $region96
        $region95: #{tpu_custom_call.1} parent=87 // pred_region
          %s2772 = ssub.s32 384, 384
          %2773 = vsyncadd %s2754, %s2772
          %s2774 = smul.addr %s38, 3
          %s2775 = smul.addr %s2774, 128
          %s2776 = scalar_lea.hbm %s17, %s2775
          %s2778 = sshll.u32 %s2757, 4
          %s2779 = int_to_ptr.vmem [resolvable:$true] %s2778
          %2781 = dma.vmem_to_hbm [thread:$0]  %s2779, 384, %s2776, %s2754
        $region96: #{tpu_custom_call.1} parent=87 // pred_fallthru
          _
        // Predicated region
        $region97: #{tpu_custom_call.1} parent=87 // pred_check
          %p2782 = pneg %p444
        $region98: #{tpu_custom_call.1} parent=87 // pred_check_branch
          %2784 = sbr.rel (%p2782) target = $region100
        $region99: #{tpu_custom_call.1} parent=87 // pred_region
          %s2786 = ssub.s32 128, 128
          %2787 = vsyncadd %s2759, %s2786
          %s2788 = smul.addr %s38, 128
          %s2789 = scalar_lea.hbm %s18, %s2788
          %s2791 = sshll.u32 %s2762, 4
          %s2792 = int_to_ptr.vmem [resolvable:$true] %s2791
          %2794 = dma.vmem_to_hbm [thread:$0]  %s2792, 128, %s2789, %s2759
        $region100: #{tpu_custom_call.1} parent=87 // pred_fallthru
          _
        // Predicated region
        $region101: #{tpu_custom_call.1} parent=87 // pred_check
          %p2795 = pneg %p470
        $region102: #{tpu_custom_call.1} parent=87 // pred_check_branch
          %2797 = sbr.rel (%p2795) target = $region104
        $region103: #{tpu_custom_call.1} parent=87 // pred_region
          %s2799 = ssub.s32 128, 128
          %2800 = vsyncadd %s2764, %s2799
          %s2801 = smul.addr %s38, 128
          %s2802 = scalar_lea.hbm %s19, %s2801
          %s2804 = sshll.u32 %s2767, 4
          %s2805 = int_to_ptr.vmem [resolvable:$true] %s2804
          %2807 = dma.vmem_to_hbm [thread:$0]  %s2805, 128, %s2802, %s2764
        $region104: #{tpu_custom_call.1} parent=87 // pred_fallthru
          _
      $region88: #{tpu_custom_call.1} parent=5 // pred_fallthru
        _
      %p2808 = scmp.le.s32.totalorder 2, %s33
      // Predicated region
      $region105: #{tpu_custom_call.1} parent=5 // pred_check
        %p2809 = pneg %p2808
      $region106: #{tpu_custom_call.1} parent=5 // pred_check_branch
        %2811 = sbr.rel (%p2809) target = $region108
      $region107: #{tpu_custom_call.1} parent=5 // pred_region
        %s2812 = ssub.s32 %s33, 2
        // Predicated region
        $region109: #{tpu_custom_call.1} parent=107 // pred_check
          %p2813 = pneg %p424
        $region110: #{tpu_custom_call.1} parent=107 // pred_check_branch
          %2815 = sbr.rel (%p2813) target = $region112
        $region111: #{tpu_custom_call.1} parent=107 // pred_region
          %s2816 = sand.u32 %s409, 1
          %s2817 = scalar_lea.sflag [#allocation8], %s2816
          %s2818 = sand.u32 %s409, 1
          %s2819 = smul.addr %s2818, 24
          %s2820 = scalar_lea.vmem [#allocation9], %s2819
          %2821 = dma.done %s2817, 384
        $region112: #{tpu_custom_call.1} parent=107 // pred_fallthru
          _
        // Predicated region
        $region113: #{tpu_custom_call.1} parent=107 // pred_check
          %p2822 = pneg %p450
        $region114: #{tpu_custom_call.1} parent=107 // pred_check_branch
          %2824 = sbr.rel (%p2822) target = $region116
        $region115: #{tpu_custom_call.1} parent=107 // pred_region
          %s2825 = sand.u32 %s39, 1
          %s2826 = scalar_lea.sflag [#allocation11], %s2825
          %s2827 = sand.u32 %s435, 1
          %s2828 = smul.addr %s2827, 8
          %s2829 = scalar_lea.vmem [#allocation10], %s2828
          %2830 = dma.done %s2826, 128
        $region116: #{tpu_custom_call.1} parent=107 // pred_fallthru
          _
        // Predicated region
        $region117: #{tpu_custom_call.1} parent=107 // pred_check
          %p2831 = pneg %p476
        $region118: #{tpu_custom_call.1} parent=107 // pred_check_branch
          %2833 = sbr.rel (%p2831) target = $region120
        $region119: #{tpu_custom_call.1} parent=107 // pred_region
          %s2834 = sand.u32 %s39, 1
          %s2835 = scalar_lea.sflag [#allocation11], %s2834
          %s2836 = sand.u32 %s461, 1
          %s2837 = smul.addr %s2836, 8
          %s2838 = scalar_lea.vmem [#allocation12], %s2837
          %2839 = dma.done %s2835, 128
        $region120: #{tpu_custom_call.1} parent=107 // pred_fallthru
          _
      $region108: #{tpu_custom_call.1} parent=5 // pred_fallthru
        _
    $region6: #{tpu_custom_call.1} parent=1 // loop_footer
      %s37 = sadd.s32 1, %s33
    $region7: #{tpu_custom_call.1} parent=1 // loop_footer_branch
      %32 = sbr.rel target = $region3
    $region8: #{tpu_custom_call.1} parent=1 // loop_exit
      _
    %2840 = vsyncpa [#allocation7], 1
    %s2841 = scalar_lea.sflag [#allocation7], 1
    %2842 = vsyncpa %s2841, 1
    %2843 = vsyncpa [#allocation8], 1
    %s2844 = scalar_lea.sflag [#allocation8], 1
    %2845 = vsyncpa %s2844, 1
    %2846 = vsyncpa [#allocation11], 1
    %s2847 = scalar_lea.sflag [#allocation11], 1
    %2848 = vsyncpa %s2847, 1

</llo_original>
